<compile_context>
chip_gen: v6e
topology: v6e:2x2x1
jax: 0.10.0
libtpu: 0.0.40
codegen_flags: <defaults>
</compile_context>

<pallas_src>
import functools

import jax
import jax.numpy as jnp
from jax.experimental import pallas as pl
from jax.experimental.pallas import tpu as pltpu


def _fused_model_kernel(x_ref, wt_ref, bt_ref, wc_ref, bc_ref, o_ref, *,
                        N, Cin, Cmid, Cout, KH, KW, OH, OW, Hh, W):
    # x_ref : (N, Cin, H, W)       VMEM, natural NCHW (no host-side preprocessing)
    # wt_ref: (Cin*Cmid,)          SMEM  ConvTranspose2d 1x1 weight, [ci*Cmid + cm]
    # bt_ref: (Cmid,)              SMEM
    # wc_ref: (Cout*Cmid*KH*KW,)   SMEM  Conv2d weight, row-major [co, cm, kh, kw]
    # bc_ref: (Cout,)              SMEM
    # o_ref : (N, Cout, OH, OW)    VMEM  NCHW output, written with a single store

    # Accumulator lane width: output column ow lives at lane 2*ow, so lanes 0..2*(OW-1).
    WACC = 2 * OW - 1

    # In-kernel row-parity split (sublane-strided ref loads; replaces the old XLA
    # transpose).  xp[p][n, ci, i, w] == x[n, ci, 2*i + p, w]
    xp = [x_ref[:, :, pl.ds(p, Hh, stride=2), :] for p in (0, 1)]   # each (N, Cin, Hh, W)

    accs = [None] * Cout                                            # each (N, OH, WACC) f32

    for cm in range(Cmid):
        # ---- stage 1 (per cm): 1x1 transposed-conv channel mix + tanh (VPU + EUP) ----
        v2 = []
        for p in (0, 1):
            s = xp[p][:, 0] * wt_ref[0 * Cmid + cm]
            for ci in range(1, Cin):
                s = s + xp[p][:, ci] * wt_ref[ci * Cmid + cm]
            v2.append(jnp.tanh(s + bt_ref[cm]))                     # (N, Hh, W)

        # ---- stage 2 (per cm): tap-decomposed stride-2 conv, kw-outer / co-inner ----
        # Hoisted lane shift: slab lane j <- v2 column (j + kw).  Output col ow therefore
        # sits at slab lane 2*ow for every tap, so all taps accumulate aligned.
        for kw in range(KW):
            slabs = [v2[p][:, :, kw:kw + WACC] for p in (0, 1)]     # (N, Hh, WACC)
            for kh in range(KH):
                p, dh = kh % 2, kh // 2
                win = slabs[p][:, dh:dh + OH, :]                    # cheap sublane window
                for co in range(Cout):
                    w = wc_ref[((co * Cmid + cm) * KH + kh) * KW + kw]
                    contrib = win * w
                    accs[co] = contrib if accs[co] is None else accs[co] + contrib
        # v2[cm] / slabs die here -> low vreg pressure across the cm loop.

    # ---- finalize: bias + tanh, stack over Cout (leading dim, relayout-free), ----
    # ---- one even-lane compaction (the w-stride-2), and ONE whole-output store. ----
    y = jnp.stack([jnp.tanh(accs[co] + bc_ref[co]) for co in range(Cout)], axis=1)
    # y: (N, Cout, OH, WACC); output column ow is at lane 2*ow.
    out = jnp.concatenate([y[..., 2 * ow:2 * ow + 1] for ow in range(OW)], axis=-1)
    o_ref[...] = out                                                # single store statement


def prepare_params(wt, bt, wc, bc):
    """One-time (outside jit) weight reordering into flat SMEM-friendly arrays."""
    wt_flat = jnp.asarray(wt[:, :, 0, 0], jnp.float32).reshape(-1)   # (Cin*Cmid,)
    wc_flat = jnp.asarray(wc, jnp.float32).reshape(-1)               # (Cout*Cmid*KH*KW,)
    return wt_flat, jnp.asarray(bt, jnp.float32), wc_flat, jnp.asarray(bc, jnp.float32)


def model_forward(x, wt_flat, bt, wc_flat, bc):
    """x: (N, 4, H, W) f32 NCHW (H, W even).  Returns (N, 5, OH, OW) f32 NCHW."""
    N, Cin, H, W = x.shape
    Cmid = bt.shape[0]
    Cout = bc.shape[0]
    KH, KW = 3, 5                      # fixed by the module: Conv2d(4, 5, (3, 5), stride=2)
    SH, SW = 2, 2                      # stride hard-coded; layout below assumes it
    assert H % 2 == 0 and W % 2 == 0, "kernel layout assumes even spatial dims"
    assert H >= KH and W >= KW
    OH = (H - KH) // SH + 1
    OW = (W - KW) // SW + 1
    Hh = H // 2
    # Windowing bounds used inside the kernel.
    assert (KH - 1) // 2 + OH <= Hh
    assert (KW - 1) + (2 * OW - 1) <= W

    kernel = functools.partial(_fused_model_kernel, N=N, Cin=Cin, Cmid=Cmid, Cout=Cout,
                               KH=KH, KW=KW, OH=OH, OW=OW, Hh=Hh, W=W)

    # Grid-less: single TC, whole problem (8 KiB) resident in VMEM.
    # TODO(synk): for v7x / large shapes, add grid=(N,) with
    # dimension_semantics=("parallel",) and block spatial dims via real BlockSpecs.
    return pl.pallas_call(
        kernel,
        out_shape=jax.ShapeDtypeStruct((N, Cout, OH, OW), jnp.float32),
        in_specs=[
            pl.BlockSpec(memory_space=pltpu.MemorySpace.VMEM),   # x (natural NCHW)
            pl.BlockSpec(memory_space=pltpu.MemorySpace.SMEM),   # wt_flat
            pl.BlockSpec(memory_space=pltpu.MemorySpace.SMEM),   # bt
            pl.BlockSpec(memory_space=pltpu.MemorySpace.SMEM),   # wc_flat
            pl.BlockSpec(memory_space=pltpu.MemorySpace.SMEM),   # bc
        ],
        out_specs=pl.BlockSpec(memory_space=pltpu.MemorySpace.VMEM),
    )(x, wt_flat, bt, wc_flat, bc)


def _reference_forward(x, wt, bt, wc, bc):
    """Pure-JAX reference (matches the PyTorch module)."""
    v1 = jnp.einsum('nchw,cd->ndhw', x, wt[:, :, 0, 0],
                    precision=jax.lax.Precision.HIGHEST) + bt[None, :, None, None]
    v2 = jnp.tanh(v1)
    v3 = jax.lax.conv_general_dilated(
        v2, wc, window_strides=(2, 2), padding='VALID',
        dimension_numbers=('NCHW', 'OIHW', 'NCHW'),
        precision=jax.lax.Precision.HIGHEST) + bc[None, :, None, None]
    return jnp.tanh(v3)


if __name__ == "__main__":
    key = jax.random.PRNGKey(0)
    kx, k1, k2, k3, k4 = jax.random.split(key, 5)

    # Small shapes consistent with the module (channels fixed by the layers).
    N, Cin, H, W = 2, 4, 16, 16
    x = jax.random.normal(kx, (N, Cin, H, W), jnp.float32)

    # PyTorch weight layouts:
    wt = jax.random.normal(k1, (4, 4, 1, 1), jnp.float32) * 0.5   # ConvTranspose2d: (Cin, Cout, 1, 1)
    bt = jax.random.normal(k2, (4,), jnp.float32) * 0.1
    wc = jax.random.normal(k3, (5, 4, 3, 5), jnp.float32) * 0.2   # Conv2d: (Cout, Cin, KH, KW)
    bc = jax.random.normal(k4, (5,), jnp.float32) * 0.1

    # Weight preprocessing hoisted out of the jitted forward (done once, eagerly).
    wt_flat, bt_p, wc_flat, bc_p = prepare_params(wt, bt, wc, bc)

    fwd = jax.jit(model_forward)
    out = fwd(x, wt_flat, bt_p, wc_flat, bc_p)
    jax.block_until_ready(out)

    OH = (H - 3) // 2 + 1
    OW = (W - 5) // 2 + 1
    assert out.shape == (N, 5, OH, OW), out.shape
    assert out.dtype == jnp.float32

    ref = _reference_forward(x, wt, bt, wc, bc)
    max_err = float(jnp.max(jnp.abs(out - ref)))
    assert max_err < 2e-4, f"max abs error vs reference: {max_err}"

    print("KERNEL_OK")
</pallas_src>

<mosaic_0001>
module attributes {stable_mosaic.version = 11 : i64} {
  func.func @_fused_model_kernel(%arg0: memref<2x4x16x16xf32, #tpu.memory_space<vmem>>, %arg1: memref<16xf32, #tpu.memory_space<smem>>, %arg2: memref<4xf32, #tpu.memory_space<smem>>, %arg3: memref<300xf32, #tpu.memory_space<smem>>, %arg4: memref<5xf32, #tpu.memory_space<smem>>, %arg5: memref<2x5x7x6xf32, #tpu.memory_space<vmem>>) attributes {dimension_semantics = [], scalar_prefetch = 0 : i64, scratch_operands = 0 : i64, tpu.core_type = #tpu.core_type<tc>} {
    %c0 = arith.constant 0 : index
    %c0_0 = arith.constant 0 : index
    %c0_1 = arith.constant 0 : index
    %c0_2 = arith.constant 0 : index
    %0 = tpu.strided_load %arg0[%c0, %c0_0, %c0_1, %c0_2] {strides = array<i32: 1, 1, 2, 1>} : memref<2x4x16x16xf32, #tpu.memory_space<vmem>>, vector<2x4x8x16xf32>
    %c0_3 = arith.constant 0 : index
    %c0_4 = arith.constant 0 : index
    %c1 = arith.constant 1 : index
    %c0_5 = arith.constant 0 : index
    %1 = tpu.strided_load %arg0[%c0_3, %c0_4, %c1, %c0_5] {strides = array<i32: 1, 1, 2, 1>} : memref<2x4x16x16xf32, #tpu.memory_space<vmem>>, vector<2x4x8x16xf32>
    %2 = vector.extract_strided_slice %0 {offsets = [0, 0, 0, 0], sizes = [2, 1, 8, 16], strides = [1, 1, 1, 1]} : vector<2x4x8x16xf32> to vector<2x1x8x16xf32>
    %3 = vector.shape_cast %2 : vector<2x1x8x16xf32> to vector<2x8x16xf32>
    %c0_6 = arith.constant 0 : index
    %4 = memref.load %arg1[%c0_6] : memref<16xf32, #tpu.memory_space<smem>>
    %5 = vector.broadcast %4 : f32 to vector<2x8x16xf32>
    %6 = arith.mulf %3, %5 : vector<2x8x16xf32>
    %7 = vector.extract_strided_slice %0 {offsets = [0, 1, 0, 0], sizes = [2, 1, 8, 16], strides = [1, 1, 1, 1]} : vector<2x4x8x16xf32> to vector<2x1x8x16xf32>
    %8 = vector.shape_cast %7 : vector<2x1x8x16xf32> to vector<2x8x16xf32>
    %c4 = arith.constant 4 : index
    %9 = memref.load %arg1[%c4] : memref<16xf32, #tpu.memory_space<smem>>
    %10 = vector.broadcast %9 : f32 to vector<2x8x16xf32>
    %11 = arith.mulf %8, %10 : vector<2x8x16xf32>
    %12 = arith.addf %6, %11 : vector<2x8x16xf32>
    %13 = vector.extract_strided_slice %0 {offsets = [0, 2, 0, 0], sizes = [2, 1, 8, 16], strides = [1, 1, 1, 1]} : vector<2x4x8x16xf32> to vector<2x1x8x16xf32>
    %14 = vector.shape_cast %13 : vector<2x1x8x16xf32> to vector<2x8x16xf32>
    %c8 = arith.constant 8 : index
    %15 = memref.load %arg1[%c8] : memref<16xf32, #tpu.memory_space<smem>>
    %16 = vector.broadcast %15 : f32 to vector<2x8x16xf32>
    %17 = arith.mulf %14, %16 : vector<2x8x16xf32>
    %18 = arith.addf %12, %17 : vector<2x8x16xf32>
    %19 = vector.extract_strided_slice %0 {offsets = [0, 3, 0, 0], sizes = [2, 1, 8, 16], strides = [1, 1, 1, 1]} : vector<2x4x8x16xf32> to vector<2x1x8x16xf32>
    %20 = vector.shape_cast %19 : vector<2x1x8x16xf32> to vector<2x8x16xf32>
    %c12 = arith.constant 12 : index
    %21 = memref.load %arg1[%c12] : memref<16xf32, #tpu.memory_space<smem>>
    %22 = vector.broadcast %21 : f32 to vector<2x8x16xf32>
    %23 = arith.mulf %20, %22 : vector<2x8x16xf32>
    %24 = arith.addf %18, %23 : vector<2x8x16xf32>
    %c0_7 = arith.constant 0 : index
    %25 = memref.load %arg2[%c0_7] : memref<4xf32, #tpu.memory_space<smem>>
    %26 = vector.broadcast %25 : f32 to vector<2x8x16xf32>
    %27 = arith.addf %24, %26 : vector<2x8x16xf32>
    %28 = math.tanh %27 : vector<2x8x16xf32>
    %29 = vector.extract_strided_slice %1 {offsets = [0, 0, 0, 0], sizes = [2, 1, 8, 16], strides = [1, 1, 1, 1]} : vector<2x4x8x16xf32> to vector<2x1x8x16xf32>
    %30 = vector.shape_cast %29 : vector<2x1x8x16xf32> to vector<2x8x16xf32>
    %c0_8 = arith.constant 0 : index
    %31 = memref.load %arg1[%c0_8] : memref<16xf32, #tpu.memory_space<smem>>
    %32 = vector.broadcast %31 : f32 to vector<2x8x16xf32>
    %33 = arith.mulf %30, %32 : vector<2x8x16xf32>
    %34 = vector.extract_strided_slice %1 {offsets = [0, 1, 0, 0], sizes = [2, 1, 8, 16], strides = [1, 1, 1, 1]} : vector<2x4x8x16xf32> to vector<2x1x8x16xf32>
    %35 = vector.shape_cast %34 : vector<2x1x8x16xf32> to vector<2x8x16xf32>
    %c4_9 = arith.constant 4 : index
    %36 = memref.load %arg1[%c4_9] : memref<16xf32, #tpu.memory_space<smem>>
    %37 = vector.broadcast %36 : f32 to vector<2x8x16xf32>
    %38 = arith.mulf %35, %37 : vector<2x8x16xf32>
    %39 = arith.addf %33, %38 : vector<2x8x16xf32>
    %40 = vector.extract_strided_slice %1 {offsets = [0, 2, 0, 0], sizes = [2, 1, 8, 16], strides = [1, 1, 1, 1]} : vector<2x4x8x16xf32> to vector<2x1x8x16xf32>
    %41 = vector.shape_cast %40 : vector<2x1x8x16xf32> to vector<2x8x16xf32>
    %c8_10 = arith.constant 8 : index
    %42 = memref.load %arg1[%c8_10] : memref<16xf32, #tpu.memory_space<smem>>
    %43 = vector.broadcast %42 : f32 to vector<2x8x16xf32>
    %44 = arith.mulf %41, %43 : vector<2x8x16xf32>
    %45 = arith.addf %39, %44 : vector<2x8x16xf32>
    %46 = vector.extract_strided_slice %1 {offsets = [0, 3, 0, 0], sizes = [2, 1, 8, 16], strides = [1, 1, 1, 1]} : vector<2x4x8x16xf32> to vector<2x1x8x16xf32>
    %47 = vector.shape_cast %46 : vector<2x1x8x16xf32> to vector<2x8x16xf32>
    %c12_11 = arith.constant 12 : index
    %48 = memref.load %arg1[%c12_11] : memref<16xf32, #tpu.memory_space<smem>>
    %49 = vector.broadcast %48 : f32 to vector<2x8x16xf32>
    %50 = arith.mulf %47, %49 : vector<2x8x16xf32>
    %51 = arith.addf %45, %50 : vector<2x8x16xf32>
    %c0_12 = arith.constant 0 : index
    %52 = memref.load %arg2[%c0_12] : memref<4xf32, #tpu.memory_space<smem>>
    %53 = vector.broadcast %52 : f32 to vector<2x8x16xf32>
    %54 = arith.addf %51, %53 : vector<2x8x16xf32>
    %55 = math.tanh %54 : vector<2x8x16xf32>
    %56 = vector.extract_strided_slice %28 {offsets = [0, 0, 0], sizes = [2, 8, 11], strides = [1, 1, 1]} : vector<2x8x16xf32> to vector<2x8x11xf32>
    %57 = vector.extract_strided_slice %55 {offsets = [0, 0, 0], sizes = [2, 8, 11], strides = [1, 1, 1]} : vector<2x8x16xf32> to vector<2x8x11xf32>
    %58 = vector.extract_strided_slice %56 {offsets = [0, 0, 0], sizes = [2, 7, 11], strides = [1, 1, 1]} : vector<2x8x11xf32> to vector<2x7x11xf32>
    %c0_13 = arith.constant 0 : index
    %59 = memref.load %arg3[%c0_13] : memref<300xf32, #tpu.memory_space<smem>>
    %60 = vector.broadcast %59 : f32 to vector<2x7x11xf32>
    %61 = arith.mulf %58, %60 : vector<2x7x11xf32>
    %c60 = arith.constant 60 : index
    %62 = memref.load %arg3[%c60] : memref<300xf32, #tpu.memory_space<smem>>
    %63 = vector.broadcast %62 : f32 to vector<2x7x11xf32>
    %64 = arith.mulf %58, %63 : vector<2x7x11xf32>
    %c120 = arith.constant 120 : index
    %65 = memref.load %arg3[%c120] : memref<300xf32, #tpu.memory_space<smem>>
    %66 = vector.broadcast %65 : f32 to vector<2x7x11xf32>
    %67 = arith.mulf %58, %66 : vector<2x7x11xf32>
    %c180 = arith.constant 180 : index
    %68 = memref.load %arg3[%c180] : memref<300xf32, #tpu.memory_space<smem>>
    %69 = vector.broadcast %68 : f32 to vector<2x7x11xf32>
    %70 = arith.mulf %58, %69 : vector<2x7x11xf32>
    %c240 = arith.constant 240 : index
    %71 = memref.load %arg3[%c240] : memref<300xf32, #tpu.memory_space<smem>>
    %72 = vector.broadcast %71 : f32 to vector<2x7x11xf32>
    %73 = arith.mulf %58, %72 : vector<2x7x11xf32>
    %74 = vector.extract_strided_slice %57 {offsets = [0, 0, 0], sizes = [2, 7, 11], strides = [1, 1, 1]} : vector<2x8x11xf32> to vector<2x7x11xf32>
    %c5 = arith.constant 5 : index
    %75 = memref.load %arg3[%c5] : memref<300xf32, #tpu.memory_space<smem>>
    %76 = vector.broadcast %75 : f32 to vector<2x7x11xf32>
    %77 = arith.mulf %74, %76 : vector<2x7x11xf32>
    %78 = arith.addf %61, %77 : vector<2x7x11xf32>
    %c65 = arith.constant 65 : index
    %79 = memref.load %arg3[%c65] : memref<300xf32, #tpu.memory_space<smem>>
    %80 = vector.broadcast %79 : f32 to vector<2x7x11xf32>
    %81 = arith.mulf %74, %80 : vector<2x7x11xf32>
    %82 = arith.addf %64, %81 : vector<2x7x11xf32>
    %c125 = arith.constant 125 : index
    %83 = memref.load %arg3[%c125] : memref<300xf32, #tpu.memory_space<smem>>
    %84 = vector.broadcast %83 : f32 to vector<2x7x11xf32>
    %85 = arith.mulf %74, %84 : vector<2x7x11xf32>
    %86 = arith.addf %67, %85 : vector<2x7x11xf32>
    %c185 = arith.constant 185 : index
    %87 = memref.load %arg3[%c185] : memref<300xf32, #tpu.memory_space<smem>>
    %88 = vector.broadcast %87 : f32 to vector<2x7x11xf32>
    %89 = arith.mulf %74, %88 : vector<2x7x11xf32>
    %90 = arith.addf %70, %89 : vector<2x7x11xf32>
    %c245 = arith.constant 245 : index
    %91 = memref.load %arg3[%c245] : memref<300xf32, #tpu.memory_space<smem>>
    %92 = vector.broadcast %91 : f32 to vector<2x7x11xf32>
    %93 = arith.mulf %74, %92 : vector<2x7x11xf32>
    %94 = arith.addf %73, %93 : vector<2x7x11xf32>
    %95 = vector.extract_strided_slice %56 {offsets = [0, 1, 0], sizes = [2, 7, 11], strides = [1, 1, 1]} : vector<2x8x11xf32> to vector<2x7x11xf32>
    %c10 = arith.constant 10 : index
    %96 = memref.load %arg3[%c10] : memref<300xf32, #tpu.memory_space<smem>>
    %97 = vector.broadcast %96 : f32 to vector<2x7x11xf32>
    %98 = arith.mulf %95, %97 : vector<2x7x11xf32>
    %99 = arith.addf %78, %98 : vector<2x7x11xf32>
    %c70 = arith.constant 70 : index
    %100 = memref.load %arg3[%c70] : memref<300xf32, #tpu.memory_space<smem>>
    %101 = vector.broadcast %100 : f32 to vector<2x7x11xf32>
    %102 = arith.mulf %95, %101 : vector<2x7x11xf32>
    %103 = arith.addf %82, %102 : vector<2x7x11xf32>
    %c130 = arith.constant 130 : index
    %104 = memref.load %arg3[%c130] : memref<300xf32, #tpu.memory_space<smem>>
    %105 = vector.broadcast %104 : f32 to vector<2x7x11xf32>
    %106 = arith.mulf %95, %105 : vector<2x7x11xf32>
    %107 = arith.addf %86, %106 : vector<2x7x11xf32>
    %c190 = arith.constant 190 : index
    %108 = memref.load %arg3[%c190] : memref<300xf32, #tpu.memory_space<smem>>
    %109 = vector.broadcast %108 : f32 to vector<2x7x11xf32>
    %110 = arith.mulf %95, %109 : vector<2x7x11xf32>
    %111 = arith.addf %90, %110 : vector<2x7x11xf32>
    %c250 = arith.constant 250 : index
    %112 = memref.load %arg3[%c250] : memref<300xf32, #tpu.memory_space<smem>>
    %113 = vector.broadcast %112 : f32 to vector<2x7x11xf32>
    %114 = arith.mulf %95, %113 : vector<2x7x11xf32>
    %115 = arith.addf %94, %114 : vector<2x7x11xf32>
    %116 = vector.extract_strided_slice %28 {offsets = [0, 0, 1], sizes = [2, 8, 11], strides = [1, 1, 1]} : vector<2x8x16xf32> to vector<2x8x11xf32>
    %117 = vector.extract_strided_slice %55 {offsets = [0, 0, 1], sizes = [2, 8, 11], strides = [1, 1, 1]} : vector<2x8x16xf32> to vector<2x8x11xf32>
    %118 = vector.extract_strided_slice %116 {offsets = [0, 0, 0], sizes = [2, 7, 11], strides = [1, 1, 1]} : vector<2x8x11xf32> to vector<2x7x11xf32>
    %c1_14 = arith.constant 1 : index
    %119 = memref.load %arg3[%c1_14] : memref<300xf32, #tpu.memory_space<smem>>
    %120 = vector.broadcast %119 : f32 to vector<2x7x11xf32>
    %121 = arith.mulf %118, %120 : vector<2x7x11xf32>
    %122 = arith.addf %99, %121 : vector<2x7x11xf32>
    %c61 = arith.constant 61 : index
    %123 = memref.load %arg3[%c61] : memref<300xf32, #tpu.memory_space<smem>>
    %124 = vector.broadcast %123 : f32 to vector<2x7x11xf32>
    %125 = arith.mulf %118, %124 : vector<2x7x11xf32>
    %126 = arith.addf %103, %125 : vector<2x7x11xf32>
    %c121 = arith.constant 121 : index
    %127 = memref.load %arg3[%c121] : memref<300xf32, #tpu.memory_space<smem>>
    %128 = vector.broadcast %127 : f32 to vector<2x7x11xf32>
    %129 = arith.mulf %118, %128 : vector<2x7x11xf32>
    %130 = arith.addf %107, %129 : vector<2x7x11xf32>
    %c181 = arith.constant 181 : index
    %131 = memref.load %arg3[%c181] : memref<300xf32, #tpu.memory_space<smem>>
    %132 = vector.broadcast %131 : f32 to vector<2x7x11xf32>
    %133 = arith.mulf %118, %132 : vector<2x7x11xf32>
    %134 = arith.addf %111, %133 : vector<2x7x11xf32>
    %c241 = arith.constant 241 : index
    %135 = memref.load %arg3[%c241] : memref<300xf32, #tpu.memory_space<smem>>
    %136 = vector.broadcast %135 : f32 to vector<2x7x11xf32>
    %137 = arith.mulf %118, %136 : vector<2x7x11xf32>
    %138 = arith.addf %115, %137 : vector<2x7x11xf32>
    %139 = vector.extract_strided_slice %117 {offsets = [0, 0, 0], sizes = [2, 7, 11], strides = [1, 1, 1]} : vector<2x8x11xf32> to vector<2x7x11xf32>
    %c6 = arith.constant 6 : index
    %140 = memref.load %arg3[%c6] : memref<300xf32, #tpu.memory_space<smem>>
    %141 = vector.broadcast %140 : f32 to vector<2x7x11xf32>
    %142 = arith.mulf %139, %141 : vector<2x7x11xf32>
    %143 = arith.addf %122, %142 : vector<2x7x11xf32>
    %c66 = arith.constant 66 : index
    %144 = memref.load %arg3[%c66] : memref<300xf32, #tpu.memory_space<smem>>
    %145 = vector.broadcast %144 : f32 to vector<2x7x11xf32>
    %146 = arith.mulf %139, %145 : vector<2x7x11xf32>
    %147 = arith.addf %126, %146 : vector<2x7x11xf32>
    %c126 = arith.constant 126 : index
    %148 = memref.load %arg3[%c126] : memref<300xf32, #tpu.memory_space<smem>>
    %149 = vector.broadcast %148 : f32 to vector<2x7x11xf32>
    %150 = arith.mulf %139, %149 : vector<2x7x11xf32>
    %151 = arith.addf %130, %150 : vector<2x7x11xf32>
    %c186 = arith.constant 186 : index
    %152 = memref.load %arg3[%c186] : memref<300xf32, #tpu.memory_space<smem>>
    %153 = vector.broadcast %152 : f32 to vector<2x7x11xf32>
    %154 = arith.mulf %139, %153 : vector<2x7x11xf32>
    %155 = arith.addf %134, %154 : vector<2x7x11xf32>
    %c246 = arith.constant 246 : index
    %156 = memref.load %arg3[%c246] : memref<300xf32, #tpu.memory_space<smem>>
    %157 = vector.broadcast %156 : f32 to vector<2x7x11xf32>
    %158 = arith.mulf %139, %157 : vector<2x7x11xf32>
    %159 = arith.addf %138, %158 : vector<2x7x11xf32>
    %160 = vector.extract_strided_slice %116 {offsets = [0, 1, 0], sizes = [2, 7, 11], strides = [1, 1, 1]} : vector<2x8x11xf32> to vector<2x7x11xf32>
    %c11 = arith.constant 11 : index
    %161 = memref.load %arg3[%c11] : memref<300xf32, #tpu.memory_space<smem>>
    %162 = vector.broadcast %161 : f32 to vector<2x7x11xf32>
    %163 = arith.mulf %160, %162 : vector<2x7x11xf32>
    %164 = arith.addf %143, %163 : vector<2x7x11xf32>
    %c71 = arith.constant 71 : index
    %165 = memref.load %arg3[%c71] : memref<300xf32, #tpu.memory_space<smem>>
    %166 = vector.broadcast %165 : f32 to vector<2x7x11xf32>
    %167 = arith.mulf %160, %166 : vector<2x7x11xf32>
    %168 = arith.addf %147, %167 : vector<2x7x11xf32>
    %c131 = arith.constant 131 : index
    %169 = memref.load %arg3[%c131] : memref<300xf32, #tpu.memory_space<smem>>
    %170 = vector.broadcast %169 : f32 to vector<2x7x11xf32>
    %171 = arith.mulf %160, %170 : vector<2x7x11xf32>
    %172 = arith.addf %151, %171 : vector<2x7x11xf32>
    %c191 = arith.constant 191 : index
    %173 = memref.load %arg3[%c191] : memref<300xf32, #tpu.memory_space<smem>>
    %174 = vector.broadcast %173 : f32 to vector<2x7x11xf32>
    %175 = arith.mulf %160, %174 : vector<2x7x11xf32>
    %176 = arith.addf %155, %175 : vector<2x7x11xf32>
    %c251 = arith.constant 251 : index
    %177 = memref.load %arg3[%c251] : memref<300xf32, #tpu.memory_space<smem>>
    %178 = vector.broadcast %177 : f32 to vector<2x7x11xf32>
    %179 = arith.mulf %160, %178 : vector<2x7x11xf32>
    %180 = arith.addf %159, %179 : vector<2x7x11xf32>
    %181 = vector.extract_strided_slice %28 {offsets = [0, 0, 2], sizes = [2, 8, 11], strides = [1, 1, 1]} : vector<2x8x16xf32> to vector<2x8x11xf32>
    %182 = vector.extract_strided_slice %55 {offsets = [0, 0, 2], sizes = [2, 8, 11], strides = [1, 1, 1]} : vector<2x8x16xf32> to vector<2x8x11xf32>
    %183 = vector.extract_strided_slice %181 {offsets = [0, 0, 0], sizes = [2, 7, 11], strides = [1, 1, 1]} : vector<2x8x11xf32> to vector<2x7x11xf32>
    %c2 = arith.constant 2 : index
    %184 = memref.load %arg3[%c2] : memref<300xf32, #tpu.memory_space<smem>>
    %185 = vector.broadcast %184 : f32 to vector<2x7x11xf32>
    %186 = arith.mulf %183, %185 : vector<2x7x11xf32>
    %187 = arith.addf %164, %186 : vector<2x7x11xf32>
    %c62 = arith.constant 62 : index
    %188 = memref.load %arg3[%c62] : memref<300xf32, #tpu.memory_space<smem>>
    %189 = vector.broadcast %188 : f32 to vector<2x7x11xf32>
    %190 = arith.mulf %183, %189 : vector<2x7x11xf32>
    %191 = arith.addf %168, %190 : vector<2x7x11xf32>
    %c122 = arith.constant 122 : index
    %192 = memref.load %arg3[%c122] : memref<300xf32, #tpu.memory_space<smem>>
    %193 = vector.broadcast %192 : f32 to vector<2x7x11xf32>
    %194 = arith.mulf %183, %193 : vector<2x7x11xf32>
    %195 = arith.addf %172, %194 : vector<2x7x11xf32>
    %c182 = arith.constant 182 : index
    %196 = memref.load %arg3[%c182] : memref<300xf32, #tpu.memory_space<smem>>
    %197 = vector.broadcast %196 : f32 to vector<2x7x11xf32>
    %198 = arith.mulf %183, %197 : vector<2x7x11xf32>
    %199 = arith.addf %176, %198 : vector<2x7x11xf32>
    %c242 = arith.constant 242 : index
    %200 = memref.load %arg3[%c242] : memref<300xf32, #tpu.memory_space<smem>>
    %201 = vector.broadcast %200 : f32 to vector<2x7x11xf32>
    %202 = arith.mulf %183, %201 : vector<2x7x11xf32>
    %203 = arith.addf %180, %202 : vector<2x7x11xf32>
    %204 = vector.extract_strided_slice %182 {offsets = [0, 0, 0], sizes = [2, 7, 11], strides = [1, 1, 1]} : vector<2x8x11xf32> to vector<2x7x11xf32>
    %c7 = arith.constant 7 : index
    %205 = memref.load %arg3[%c7] : memref<300xf32, #tpu.memory_space<smem>>
    %206 = vector.broadcast %205 : f32 to vector<2x7x11xf32>
    %207 = arith.mulf %204, %206 : vector<2x7x11xf32>
    %208 = arith.addf %187, %207 : vector<2x7x11xf32>
    %c67 = arith.constant 67 : index
    %209 = memref.load %arg3[%c67] : memref<300xf32, #tpu.memory_space<smem>>
    %210 = vector.broadcast %209 : f32 to vector<2x7x11xf32>
    %211 = arith.mulf %204, %210 : vector<2x7x11xf32>
    %212 = arith.addf %191, %211 : vector<2x7x11xf32>
    %c127 = arith.constant 127 : index
    %213 = memref.load %arg3[%c127] : memref<300xf32, #tpu.memory_space<smem>>
    %214 = vector.broadcast %213 : f32 to vector<2x7x11xf32>
    %215 = arith.mulf %204, %214 : vector<2x7x11xf32>
    %216 = arith.addf %195, %215 : vector<2x7x11xf32>
    %c187 = arith.constant 187 : index
    %217 = memref.load %arg3[%c187] : memref<300xf32, #tpu.memory_space<smem>>
    %218 = vector.broadcast %217 : f32 to vector<2x7x11xf32>
    %219 = arith.mulf %204, %218 : vector<2x7x11xf32>
    %220 = arith.addf %199, %219 : vector<2x7x11xf32>
    %c247 = arith.constant 247 : index
    %221 = memref.load %arg3[%c247] : memref<300xf32, #tpu.memory_space<smem>>
    %222 = vector.broadcast %221 : f32 to vector<2x7x11xf32>
    %223 = arith.mulf %204, %222 : vector<2x7x11xf32>
    %224 = arith.addf %203, %223 : vector<2x7x11xf32>
    %225 = vector.extract_strided_slice %181 {offsets = [0, 1, 0], sizes = [2, 7, 11], strides = [1, 1, 1]} : vector<2x8x11xf32> to vector<2x7x11xf32>
    %c12_15 = arith.constant 12 : index
    %226 = memref.load %arg3[%c12_15] : memref<300xf32, #tpu.memory_space<smem>>
    %227 = vector.broadcast %226 : f32 to vector<2x7x11xf32>
    %228 = arith.mulf %225, %227 : vector<2x7x11xf32>
    %229 = arith.addf %208, %228 : vector<2x7x11xf32>
    %c72 = arith.constant 72 : index
    %230 = memref.load %arg3[%c72] : memref<300xf32, #tpu.memory_space<smem>>
    %231 = vector.broadcast %230 : f32 to vector<2x7x11xf32>
    %232 = arith.mulf %225, %231 : vector<2x7x11xf32>
    %233 = arith.addf %212, %232 : vector<2x7x11xf32>
    %c132 = arith.constant 132 : index
    %234 = memref.load %arg3[%c132] : memref<300xf32, #tpu.memory_space<smem>>
    %235 = vector.broadcast %234 : f32 to vector<2x7x11xf32>
    %236 = arith.mulf %225, %235 : vector<2x7x11xf32>
    %237 = arith.addf %216, %236 : vector<2x7x11xf32>
    %c192 = arith.constant 192 : index
    %238 = memref.load %arg3[%c192] : memref<300xf32, #tpu.memory_space<smem>>
    %239 = vector.broadcast %238 : f32 to vector<2x7x11xf32>
    %240 = arith.mulf %225, %239 : vector<2x7x11xf32>
    %241 = arith.addf %220, %240 : vector<2x7x11xf32>
    %c252 = arith.constant 252 : index
    %242 = memref.load %arg3[%c252] : memref<300xf32, #tpu.memory_space<smem>>
    %243 = vector.broadcast %242 : f32 to vector<2x7x11xf32>
    %244 = arith.mulf %225, %243 : vector<2x7x11xf32>
    %245 = arith.addf %224, %244 : vector<2x7x11xf32>
    %246 = vector.extract_strided_slice %28 {offsets = [0, 0, 3], sizes = [2, 8, 11], strides = [1, 1, 1]} : vector<2x8x16xf32> to vector<2x8x11xf32>
    %247 = vector.extract_strided_slice %55 {offsets = [0, 0, 3], sizes = [2, 8, 11], strides = [1, 1, 1]} : vector<2x8x16xf32> to vector<2x8x11xf32>
    %248 = vector.extract_strided_slice %246 {offsets = [0, 0, 0], sizes = [2, 7, 11], strides = [1, 1, 1]} : vector<2x8x11xf32> to vector<2x7x11xf32>
    %c3 = arith.constant 3 : index
    %249 = memref.load %arg3[%c3] : memref<300xf32, #tpu.memory_space<smem>>
    %250 = vector.broadcast %249 : f32 to vector<2x7x11xf32>
    %251 = arith.mulf %248, %250 : vector<2x7x11xf32>
    %252 = arith.addf %229, %251 : vector<2x7x11xf32>
    %c63 = arith.constant 63 : index
    %253 = memref.load %arg3[%c63] : memref<300xf32, #tpu.memory_space<smem>>
    %254 = vector.broadcast %253 : f32 to vector<2x7x11xf32>
    %255 = arith.mulf %248, %254 : vector<2x7x11xf32>
    %256 = arith.addf %233, %255 : vector<2x7x11xf32>
    %c123 = arith.constant 123 : index
    %257 = memref.load %arg3[%c123] : memref<300xf32, #tpu.memory_space<smem>>
    %258 = vector.broadcast %257 : f32 to vector<2x7x11xf32>
    %259 = arith.mulf %248, %258 : vector<2x7x11xf32>
    %260 = arith.addf %237, %259 : vector<2x7x11xf32>
    %c183 = arith.constant 183 : index
    %261 = memref.load %arg3[%c183] : memref<300xf32, #tpu.memory_space<smem>>
    %262 = vector.broadcast %261 : f32 to vector<2x7x11xf32>
    %263 = arith.mulf %248, %262 : vector<2x7x11xf32>
    %264 = arith.addf %241, %263 : vector<2x7x11xf32>
    %c243 = arith.constant 243 : index
    %265 = memref.load %arg3[%c243] : memref<300xf32, #tpu.memory_space<smem>>
    %266 = vector.broadcast %265 : f32 to vector<2x7x11xf32>
    %267 = arith.mulf %248, %266 : vector<2x7x11xf32>
    %268 = arith.addf %245, %267 : vector<2x7x11xf32>
    %269 = vector.extract_strided_slice %247 {offsets = [0, 0, 0], sizes = [2, 7, 11], strides = [1, 1, 1]} : vector<2x8x11xf32> to vector<2x7x11xf32>
    %c8_16 = arith.constant 8 : index
    %270 = memref.load %arg3[%c8_16] : memref<300xf32, #tpu.memory_space<smem>>
    %271 = vector.broadcast %270 : f32 to vector<2x7x11xf32>
    %272 = arith.mulf %269, %271 : vector<2x7x11xf32>
    %273 = arith.addf %252, %272 : vector<2x7x11xf32>
    %c68 = arith.constant 68 : index
    %274 = memref.load %arg3[%c68] : memref<300xf32, #tpu.memory_space<smem>>
    %275 = vector.broadcast %274 : f32 to vector<2x7x11xf32>
    %276 = arith.mulf %269, %275 : vector<2x7x11xf32>
    %277 = arith.addf %256, %276 : vector<2x7x11xf32>
    %c128 = arith.constant 128 : index
    %278 = memref.load %arg3[%c128] : memref<300xf32, #tpu.memory_space<smem>>
    %279 = vector.broadcast %278 : f32 to vector<2x7x11xf32>
    %280 = arith.mulf %269, %279 : vector<2x7x11xf32>
    %281 = arith.addf %260, %280 : vector<2x7x11xf32>
    %c188 = arith.constant 188 : index
    %282 = memref.load %arg3[%c188] : memref<300xf32, #tpu.memory_space<smem>>
    %283 = vector.broadcast %282 : f32 to vector<2x7x11xf32>
    %284 = arith.mulf %269, %283 : vector<2x7x11xf32>
    %285 = arith.addf %264, %284 : vector<2x7x11xf32>
    %c248 = arith.constant 248 : index
    %286 = memref.load %arg3[%c248] : memref<300xf32, #tpu.memory_space<smem>>
    %287 = vector.broadcast %286 : f32 to vector<2x7x11xf32>
    %288 = arith.mulf %269, %287 : vector<2x7x11xf32>
    %289 = arith.addf %268, %288 : vector<2x7x11xf32>
    %290 = vector.extract_strided_slice %246 {offsets = [0, 1, 0], sizes = [2, 7, 11], strides = [1, 1, 1]} : vector<2x8x11xf32> to vector<2x7x11xf32>
    %c13 = arith.constant 13 : index
    %291 = memref.load %arg3[%c13] : memref<300xf32, #tpu.memory_space<smem>>
    %292 = vector.broadcast %291 : f32 to vector<2x7x11xf32>
    %293 = arith.mulf %290, %292 : vector<2x7x11xf32>
    %294 = arith.addf %273, %293 : vector<2x7x11xf32>
    %c73 = arith.constant 73 : index
    %295 = memref.load %arg3[%c73] : memref<300xf32, #tpu.memory_space<smem>>
    %296 = vector.broadcast %295 : f32 to vector<2x7x11xf32>
    %297 = arith.mulf %290, %296 : vector<2x7x11xf32>
    %298 = arith.addf %277, %297 : vector<2x7x11xf32>
    %c133 = arith.constant 133 : index
    %299 = memref.load %arg3[%c133] : memref<300xf32, #tpu.memory_space<smem>>
    %300 = vector.broadcast %299 : f32 to vector<2x7x11xf32>
    %301 = arith.mulf %290, %300 : vector<2x7x11xf32>
    %302 = arith.addf %281, %301 : vector<2x7x11xf32>
    %c193 = arith.constant 193 : index
    %303 = memref.load %arg3[%c193] : memref<300xf32, #tpu.memory_space<smem>>
    %304 = vector.broadcast %303 : f32 to vector<2x7x11xf32>
    %305 = arith.mulf %290, %304 : vector<2x7x11xf32>
    %306 = arith.addf %285, %305 : vector<2x7x11xf32>
    %c253 = arith.constant 253 : index
    %307 = memref.load %arg3[%c253] : memref<300xf32, #tpu.memory_space<smem>>
    %308 = vector.broadcast %307 : f32 to vector<2x7x11xf32>
    %309 = arith.mulf %290, %308 : vector<2x7x11xf32>
    %310 = arith.addf %289, %309 : vector<2x7x11xf32>
    %311 = vector.extract_strided_slice %28 {offsets = [0, 0, 4], sizes = [2, 8, 11], strides = [1, 1, 1]} : vector<2x8x16xf32> to vector<2x8x11xf32>
    %312 = vector.extract_strided_slice %55 {offsets = [0, 0, 4], sizes = [2, 8, 11], strides = [1, 1, 1]} : vector<2x8x16xf32> to vector<2x8x11xf32>
    %313 = vector.extract_strided_slice %311 {offsets = [0, 0, 0], sizes = [2, 7, 11], strides = [1, 1, 1]} : vector<2x8x11xf32> to vector<2x7x11xf32>
    %c4_17 = arith.constant 4 : index
    %314 = memref.load %arg3[%c4_17] : memref<300xf32, #tpu.memory_space<smem>>
    %315 = vector.broadcast %314 : f32 to vector<2x7x11xf32>
    %316 = arith.mulf %313, %315 : vector<2x7x11xf32>
    %317 = arith.addf %294, %316 : vector<2x7x11xf32>
    %c64 = arith.constant 64 : index
    %318 = memref.load %arg3[%c64] : memref<300xf32, #tpu.memory_space<smem>>
    %319 = vector.broadcast %318 : f32 to vector<2x7x11xf32>
    %320 = arith.mulf %313, %319 : vector<2x7x11xf32>
    %321 = arith.addf %298, %320 : vector<2x7x11xf32>
    %c124 = arith.constant 124 : index
    %322 = memref.load %arg3[%c124] : memref<300xf32, #tpu.memory_space<smem>>
    %323 = vector.broadcast %322 : f32 to vector<2x7x11xf32>
    %324 = arith.mulf %313, %323 : vector<2x7x11xf32>
    %325 = arith.addf %302, %324 : vector<2x7x11xf32>
    %c184 = arith.constant 184 : index
    %326 = memref.load %arg3[%c184] : memref<300xf32, #tpu.memory_space<smem>>
    %327 = vector.broadcast %326 : f32 to vector<2x7x11xf32>
    %328 = arith.mulf %313, %327 : vector<2x7x11xf32>
    %329 = arith.addf %306, %328 : vector<2x7x11xf32>
    %c244 = arith.constant 244 : index
    %330 = memref.load %arg3[%c244] : memref<300xf32, #tpu.memory_space<smem>>
    %331 = vector.broadcast %330 : f32 to vector<2x7x11xf32>
    %332 = arith.mulf %313, %331 : vector<2x7x11xf32>
    %333 = arith.addf %310, %332 : vector<2x7x11xf32>
    %334 = vector.extract_strided_slice %312 {offsets = [0, 0, 0], sizes = [2, 7, 11], strides = [1, 1, 1]} : vector<2x8x11xf32> to vector<2x7x11xf32>
    %c9 = arith.constant 9 : index
    %335 = memref.load %arg3[%c9] : memref<300xf32, #tpu.memory_space<smem>>
    %336 = vector.broadcast %335 : f32 to vector<2x7x11xf32>
    %337 = arith.mulf %334, %336 : vector<2x7x11xf32>
    %338 = arith.addf %317, %337 : vector<2x7x11xf32>
    %c69 = arith.constant 69 : index
    %339 = memref.load %arg3[%c69] : memref<300xf32, #tpu.memory_space<smem>>
    %340 = vector.broadcast %339 : f32 to vector<2x7x11xf32>
    %341 = arith.mulf %334, %340 : vector<2x7x11xf32>
    %342 = arith.addf %321, %341 : vector<2x7x11xf32>
    %c129 = arith.constant 129 : index
    %343 = memref.load %arg3[%c129] : memref<300xf32, #tpu.memory_space<smem>>
    %344 = vector.broadcast %343 : f32 to vector<2x7x11xf32>
    %345 = arith.mulf %334, %344 : vector<2x7x11xf32>
    %346 = arith.addf %325, %345 : vector<2x7x11xf32>
    %c189 = arith.constant 189 : index
    %347 = memref.load %arg3[%c189] : memref<300xf32, #tpu.memory_space<smem>>
    %348 = vector.broadcast %347 : f32 to vector<2x7x11xf32>
    %349 = arith.mulf %334, %348 : vector<2x7x11xf32>
    %350 = arith.addf %329, %349 : vector<2x7x11xf32>
    %c249 = arith.constant 249 : index
    %351 = memref.load %arg3[%c249] : memref<300xf32, #tpu.memory_space<smem>>
    %352 = vector.broadcast %351 : f32 to vector<2x7x11xf32>
    %353 = arith.mulf %334, %352 : vector<2x7x11xf32>
    %354 = arith.addf %333, %353 : vector<2x7x11xf32>
    %355 = vector.extract_strided_slice %311 {offsets = [0, 1, 0], sizes = [2, 7, 11], strides = [1, 1, 1]} : vector<2x8x11xf32> to vector<2x7x11xf32>
    %c14 = arith.constant 14 : index
    %356 = memref.load %arg3[%c14] : memref<300xf32, #tpu.memory_space<smem>>
    %357 = vector.broadcast %356 : f32 to vector<2x7x11xf32>
    %358 = arith.mulf %355, %357 : vector<2x7x11xf32>
    %359 = arith.addf %338, %358 : vector<2x7x11xf32>
    %c74 = arith.constant 74 : index
    %360 = memref.load %arg3[%c74] : memref<300xf32, #tpu.memory_space<smem>>
    %361 = vector.broadcast %360 : f32 to vector<2x7x11xf32>
    %362 = arith.mulf %355, %361 : vector<2x7x11xf32>
    %363 = arith.addf %342, %362 : vector<2x7x11xf32>
    %c134 = arith.constant 134 : index
    %364 = memref.load %arg3[%c134] : memref<300xf32, #tpu.memory_space<smem>>
    %365 = vector.broadcast %364 : f32 to vector<2x7x11xf32>
    %366 = arith.mulf %355, %365 : vector<2x7x11xf32>
    %367 = arith.addf %346, %366 : vector<2x7x11xf32>
    %c194 = arith.constant 194 : index
    %368 = memref.load %arg3[%c194] : memref<300xf32, #tpu.memory_space<smem>>
    %369 = vector.broadcast %368 : f32 to vector<2x7x11xf32>
    %370 = arith.mulf %355, %369 : vector<2x7x11xf32>
    %371 = arith.addf %350, %370 : vector<2x7x11xf32>
    %c254 = arith.constant 254 : index
    %372 = memref.load %arg3[%c254] : memref<300xf32, #tpu.memory_space<smem>>
    %373 = vector.broadcast %372 : f32 to vector<2x7x11xf32>
    %374 = arith.mulf %355, %373 : vector<2x7x11xf32>
    %375 = arith.addf %354, %374 : vector<2x7x11xf32>
    %376 = vector.extract_strided_slice %0 {offsets = [0, 0, 0, 0], sizes = [2, 1, 8, 16], strides = [1, 1, 1, 1]} : vector<2x4x8x16xf32> to vector<2x1x8x16xf32>
    %377 = vector.shape_cast %376 : vector<2x1x8x16xf32> to vector<2x8x16xf32>
    %c1_18 = arith.constant 1 : index
    %378 = memref.load %arg1[%c1_18] : memref<16xf32, #tpu.memory_space<smem>>
    %379 = vector.broadcast %378 : f32 to vector<2x8x16xf32>
    %380 = arith.mulf %377, %379 : vector<2x8x16xf32>
    %381 = vector.extract_strided_slice %0 {offsets = [0, 1, 0, 0], sizes = [2, 1, 8, 16], strides = [1, 1, 1, 1]} : vector<2x4x8x16xf32> to vector<2x1x8x16xf32>
    %382 = vector.shape_cast %381 : vector<2x1x8x16xf32> to vector<2x8x16xf32>
    %c5_19 = arith.constant 5 : index
    %383 = memref.load %arg1[%c5_19] : memref<16xf32, #tpu.memory_space<smem>>
    %384 = vector.broadcast %383 : f32 to vector<2x8x16xf32>
    %385 = arith.mulf %382, %384 : vector<2x8x16xf32>
    %386 = arith.addf %380, %385 : vector<2x8x16xf32>
    %387 = vector.extract_strided_slice %0 {offsets = [0, 2, 0, 0], sizes = [2, 1, 8, 16], strides = [1, 1, 1, 1]} : vector<2x4x8x16xf32> to vector<2x1x8x16xf32>
    %388 = vector.shape_cast %387 : vector<2x1x8x16xf32> to vector<2x8x16xf32>
    %c9_20 = arith.constant 9 : index
    %389 = memref.load %arg1[%c9_20] : memref<16xf32, #tpu.memory_space<smem>>
    %390 = vector.broadcast %389 : f32 to vector<2x8x16xf32>
    %391 = arith.mulf %388, %390 : vector<2x8x16xf32>
    %392 = arith.addf %386, %391 : vector<2x8x16xf32>
    %393 = vector.extract_strided_slice %0 {offsets = [0, 3, 0, 0], sizes = [2, 1, 8, 16], strides = [1, 1, 1, 1]} : vector<2x4x8x16xf32> to vector<2x1x8x16xf32>
    %394 = vector.shape_cast %393 : vector<2x1x8x16xf32> to vector<2x8x16xf32>
    %c13_21 = arith.constant 13 : index
    %395 = memref.load %arg1[%c13_21] : memref<16xf32, #tpu.memory_space<smem>>
    %396 = vector.broadcast %395 : f32 to vector<2x8x16xf32>
    %397 = arith.mulf %394, %396 : vector<2x8x16xf32>
    %398 = arith.addf %392, %397 : vector<2x8x16xf32>
    %c1_22 = arith.constant 1 : index
    %399 = memref.load %arg2[%c1_22] : memref<4xf32, #tpu.memory_space<smem>>
    %400 = vector.broadcast %399 : f32 to vector<2x8x16xf32>
    %401 = arith.addf %398, %400 : vector<2x8x16xf32>
    %402 = math.tanh %401 : vector<2x8x16xf32>
    %403 = vector.extract_strided_slice %1 {offsets = [0, 0, 0, 0], sizes = [2, 1, 8, 16], strides = [1, 1, 1, 1]} : vector<2x4x8x16xf32> to vector<2x1x8x16xf32>
    %404 = vector.shape_cast %403 : vector<2x1x8x16xf32> to vector<2x8x16xf32>
    %c1_23 = arith.constant 1 : index
    %405 = memref.load %arg1[%c1_23] : memref<16xf32, #tpu.memory_space<smem>>
    %406 = vector.broadcast %405 : f32 to vector<2x8x16xf32>
    %407 = arith.mulf %404, %406 : vector<2x8x16xf32>
    %408 = vector.extract_strided_slice %1 {offsets = [0, 1, 0, 0], sizes = [2, 1, 8, 16], strides = [1, 1, 1, 1]} : vector<2x4x8x16xf32> to vector<2x1x8x16xf32>
    %409 = vector.shape_cast %408 : vector<2x1x8x16xf32> to vector<2x8x16xf32>
    %c5_24 = arith.constant 5 : index
    %410 = memref.load %arg1[%c5_24] : memref<16xf32, #tpu.memory_space<smem>>
    %411 = vector.broadcast %410 : f32 to vector<2x8x16xf32>
    %412 = arith.mulf %409, %411 : vector<2x8x16xf32>
    %413 = arith.addf %407, %412 : vector<2x8x16xf32>
    %414 = vector.extract_strided_slice %1 {offsets = [0, 2, 0, 0], sizes = [2, 1, 8, 16], strides = [1, 1, 1, 1]} : vector<2x4x8x16xf32> to vector<2x1x8x16xf32>
    %415 = vector.shape_cast %414 : vector<2x1x8x16xf32> to vector<2x8x16xf32>
    %c9_25 = arith.constant 9 : index
    %416 = memref.load %arg1[%c9_25] : memref<16xf32, #tpu.memory_space<smem>>
    %417 = vector.broadcast %416 : f32 to vector<2x8x16xf32>
    %418 = arith.mulf %415, %417 : vector<2x8x16xf32>
    %419 = arith.addf %413, %418 : vector<2x8x16xf32>
    %420 = vector.extract_strided_slice %1 {offsets = [0, 3, 0, 0], sizes = [2, 1, 8, 16], strides = [1, 1, 1, 1]} : vector<2x4x8x16xf32> to vector<2x1x8x16xf32>
    %421 = vector.shape_cast %420 : vector<2x1x8x16xf32> to vector<2x8x16xf32>
    %c13_26 = arith.constant 13 : index
    %422 = memref.load %arg1[%c13_26] : memref<16xf32, #tpu.memory_space<smem>>
    %423 = vector.broadcast %422 : f32 to vector<2x8x16xf32>
    %424 = arith.mulf %421, %423 : vector<2x8x16xf32>
    %425 = arith.addf %419, %424 : vector<2x8x16xf32>
    %c1_27 = arith.constant 1 : index
    %426 = memref.load %arg2[%c1_27] : memref<4xf32, #tpu.memory_space<smem>>
    %427 = vector.broadcast %426 : f32 to vector<2x8x16xf32>
    %428 = arith.addf %425, %427 : vector<2x8x16xf32>
    %429 = math.tanh %428 : vector<2x8x16xf32>
    %430 = vector.extract_strided_slice %402 {offsets = [0, 0, 0], sizes = [2, 8, 11], strides = [1, 1, 1]} : vector<2x8x16xf32> to vector<2x8x11xf32>
    %431 = vector.extract_strided_slice %429 {offsets = [0, 0, 0], sizes = [2, 8, 11], strides = [1, 1, 1]} : vector<2x8x16xf32> to vector<2x8x11xf32>
    %432 = vector.extract_strided_slice %430 {offsets = [0, 0, 0], sizes = [2, 7, 11], strides = [1, 1, 1]} : vector<2x8x11xf32> to vector<2x7x11xf32>
    %c15 = arith.constant 15 : index
    %433 = memref.load %arg3[%c15] : memref<300xf32, #tpu.memory_space<smem>>
    %434 = vector.broadcast %433 : f32 to vector<2x7x11xf32>
    %435 = arith.mulf %432, %434 : vector<2x7x11xf32>
    %436 = arith.addf %359, %435 : vector<2x7x11xf32>
    %c75 = arith.constant 75 : index
    %437 = memref.load %arg3[%c75] : memref<300xf32, #tpu.memory_space<smem>>
    %438 = vector.broadcast %437 : f32 to vector<2x7x11xf32>
    %439 = arith.mulf %432, %438 : vector<2x7x11xf32>
    %440 = arith.addf %363, %439 : vector<2x7x11xf32>
    %c135 = arith.constant 135 : index
    %441 = memref.load %arg3[%c135] : memref<300xf32, #tpu.memory_space<smem>>
    %442 = vector.broadcast %441 : f32 to vector<2x7x11xf32>
    %443 = arith.mulf %432, %442 : vector<2x7x11xf32>
    %444 = arith.addf %367, %443 : vector<2x7x11xf32>
    %c195 = arith.constant 195 : index
    %445 = memref.load %arg3[%c195] : memref<300xf32, #tpu.memory_space<smem>>
    %446 = vector.broadcast %445 : f32 to vector<2x7x11xf32>
    %447 = arith.mulf %432, %446 : vector<2x7x11xf32>
    %448 = arith.addf %371, %447 : vector<2x7x11xf32>
    %c255 = arith.constant 255 : index
    %449 = memref.load %arg3[%c255] : memref<300xf32, #tpu.memory_space<smem>>
    %450 = vector.broadcast %449 : f32 to vector<2x7x11xf32>
    %451 = arith.mulf %432, %450 : vector<2x7x11xf32>
    %452 = arith.addf %375, %451 : vector<2x7x11xf32>
    %453 = vector.extract_strided_slice %431 {offsets = [0, 0, 0], sizes = [2, 7, 11], strides = [1, 1, 1]} : vector<2x8x11xf32> to vector<2x7x11xf32>
    %c20 = arith.constant 20 : index
    %454 = memref.load %arg3[%c20] : memref<300xf32, #tpu.memory_space<smem>>
    %455 = vector.broadcast %454 : f32 to vector<2x7x11xf32>
    %456 = arith.mulf %453, %455 : vector<2x7x11xf32>
    %457 = arith.addf %436, %456 : vector<2x7x11xf32>
    %c80 = arith.constant 80 : index
    %458 = memref.load %arg3[%c80] : memref<300xf32, #tpu.memory_space<smem>>
    %459 = vector.broadcast %458 : f32 to vector<2x7x11xf32>
    %460 = arith.mulf %453, %459 : vector<2x7x11xf32>
    %461 = arith.addf %440, %460 : vector<2x7x11xf32>
    %c140 = arith.constant 140 : index
    %462 = memref.load %arg3[%c140] : memref<300xf32, #tpu.memory_space<smem>>
    %463 = vector.broadcast %462 : f32 to vector<2x7x11xf32>
    %464 = arith.mulf %453, %463 : vector<2x7x11xf32>
    %465 = arith.addf %444, %464 : vector<2x7x11xf32>
    %c200 = arith.constant 200 : index
    %466 = memref.load %arg3[%c200] : memref<300xf32, #tpu.memory_space<smem>>
    %467 = vector.broadcast %466 : f32 to vector<2x7x11xf32>
    %468 = arith.mulf %453, %467 : vector<2x7x11xf32>
    %469 = arith.addf %448, %468 : vector<2x7x11xf32>
    %c260 = arith.constant 260 : index
    %470 = memref.load %arg3[%c260] : memref<300xf32, #tpu.memory_space<smem>>
    %471 = vector.broadcast %470 : f32 to vector<2x7x11xf32>
    %472 = arith.mulf %453, %471 : vector<2x7x11xf32>
    %473 = arith.addf %452, %472 : vector<2x7x11xf32>
    %474 = vector.extract_strided_slice %430 {offsets = [0, 1, 0], sizes = [2, 7, 11], strides = [1, 1, 1]} : vector<2x8x11xf32> to vector<2x7x11xf32>
    %c25 = arith.constant 25 : index
    %475 = memref.load %arg3[%c25] : memref<300xf32, #tpu.memory_space<smem>>
    %476 = vector.broadcast %475 : f32 to vector<2x7x11xf32>
    %477 = arith.mulf %474, %476 : vector<2x7x11xf32>
    %478 = arith.addf %457, %477 : vector<2x7x11xf32>
    %c85 = arith.constant 85 : index
    %479 = memref.load %arg3[%c85] : memref<300xf32, #tpu.memory_space<smem>>
    %480 = vector.broadcast %479 : f32 to vector<2x7x11xf32>
    %481 = arith.mulf %474, %480 : vector<2x7x11xf32>
    %482 = arith.addf %461, %481 : vector<2x7x11xf32>
    %c145 = arith.constant 145 : index
    %483 = memref.load %arg3[%c145] : memref<300xf32, #tpu.memory_space<smem>>
    %484 = vector.broadcast %483 : f32 to vector<2x7x11xf32>
    %485 = arith.mulf %474, %484 : vector<2x7x11xf32>
    %486 = arith.addf %465, %485 : vector<2x7x11xf32>
    %c205 = arith.constant 205 : index
    %487 = memref.load %arg3[%c205] : memref<300xf32, #tpu.memory_space<smem>>
    %488 = vector.broadcast %487 : f32 to vector<2x7x11xf32>
    %489 = arith.mulf %474, %488 : vector<2x7x11xf32>
    %490 = arith.addf %469, %489 : vector<2x7x11xf32>
    %c265 = arith.constant 265 : index
    %491 = memref.load %arg3[%c265] : memref<300xf32, #tpu.memory_space<smem>>
    %492 = vector.broadcast %491 : f32 to vector<2x7x11xf32>
    %493 = arith.mulf %474, %492 : vector<2x7x11xf32>
    %494 = arith.addf %473, %493 : vector<2x7x11xf32>
    %495 = vector.extract_strided_slice %402 {offsets = [0, 0, 1], sizes = [2, 8, 11], strides = [1, 1, 1]} : vector<2x8x16xf32> to vector<2x8x11xf32>
    %496 = vector.extract_strided_slice %429 {offsets = [0, 0, 1], sizes = [2, 8, 11], strides = [1, 1, 1]} : vector<2x8x16xf32> to vector<2x8x11xf32>
    %497 = vector.extract_strided_slice %495 {offsets = [0, 0, 0], sizes = [2, 7, 11], strides = [1, 1, 1]} : vector<2x8x11xf32> to vector<2x7x11xf32>
    %c16 = arith.constant 16 : index
    %498 = memref.load %arg3[%c16] : memref<300xf32, #tpu.memory_space<smem>>
    %499 = vector.broadcast %498 : f32 to vector<2x7x11xf32>
    %500 = arith.mulf %497, %499 : vector<2x7x11xf32>
    %501 = arith.addf %478, %500 : vector<2x7x11xf32>
    %c76 = arith.constant 76 : index
    %502 = memref.load %arg3[%c76] : memref<300xf32, #tpu.memory_space<smem>>
    %503 = vector.broadcast %502 : f32 to vector<2x7x11xf32>
    %504 = arith.mulf %497, %503 : vector<2x7x11xf32>
    %505 = arith.addf %482, %504 : vector<2x7x11xf32>
    %c136 = arith.constant 136 : index
    %506 = memref.load %arg3[%c136] : memref<300xf32, #tpu.memory_space<smem>>
    %507 = vector.broadcast %506 : f32 to vector<2x7x11xf32>
    %508 = arith.mulf %497, %507 : vector<2x7x11xf32>
    %509 = arith.addf %486, %508 : vector<2x7x11xf32>
    %c196 = arith.constant 196 : index
    %510 = memref.load %arg3[%c196] : memref<300xf32, #tpu.memory_space<smem>>
    %511 = vector.broadcast %510 : f32 to vector<2x7x11xf32>
    %512 = arith.mulf %497, %511 : vector<2x7x11xf32>
    %513 = arith.addf %490, %512 : vector<2x7x11xf32>
    %c256 = arith.constant 256 : index
    %514 = memref.load %arg3[%c256] : memref<300xf32, #tpu.memory_space<smem>>
    %515 = vector.broadcast %514 : f32 to vector<2x7x11xf32>
    %516 = arith.mulf %497, %515 : vector<2x7x11xf32>
    %517 = arith.addf %494, %516 : vector<2x7x11xf32>
    %518 = vector.extract_strided_slice %496 {offsets = [0, 0, 0], sizes = [2, 7, 11], strides = [1, 1, 1]} : vector<2x8x11xf32> to vector<2x7x11xf32>
    %c21 = arith.constant 21 : index
    %519 = memref.load %arg3[%c21] : memref<300xf32, #tpu.memory_space<smem>>
    %520 = vector.broadcast %519 : f32 to vector<2x7x11xf32>
    %521 = arith.mulf %518, %520 : vector<2x7x11xf32>
    %522 = arith.addf %501, %521 : vector<2x7x11xf32>
    %c81 = arith.constant 81 : index
    %523 = memref.load %arg3[%c81] : memref<300xf32, #tpu.memory_space<smem>>
    %524 = vector.broadcast %523 : f32 to vector<2x7x11xf32>
    %525 = arith.mulf %518, %524 : vector<2x7x11xf32>
    %526 = arith.addf %505, %525 : vector<2x7x11xf32>
    %c141 = arith.constant 141 : index
    %527 = memref.load %arg3[%c141] : memref<300xf32, #tpu.memory_space<smem>>
    %528 = vector.broadcast %527 : f32 to vector<2x7x11xf32>
    %529 = arith.mulf %518, %528 : vector<2x7x11xf32>
    %530 = arith.addf %509, %529 : vector<2x7x11xf32>
    %c201 = arith.constant 201 : index
    %531 = memref.load %arg3[%c201] : memref<300xf32, #tpu.memory_space<smem>>
    %532 = vector.broadcast %531 : f32 to vector<2x7x11xf32>
    %533 = arith.mulf %518, %532 : vector<2x7x11xf32>
    %534 = arith.addf %513, %533 : vector<2x7x11xf32>
    %c261 = arith.constant 261 : index
    %535 = memref.load %arg3[%c261] : memref<300xf32, #tpu.memory_space<smem>>
    %536 = vector.broadcast %535 : f32 to vector<2x7x11xf32>
    %537 = arith.mulf %518, %536 : vector<2x7x11xf32>
    %538 = arith.addf %517, %537 : vector<2x7x11xf32>
    %539 = vector.extract_strided_slice %495 {offsets = [0, 1, 0], sizes = [2, 7, 11], strides = [1, 1, 1]} : vector<2x8x11xf32> to vector<2x7x11xf32>
    %c26 = arith.constant 26 : index
    %540 = memref.load %arg3[%c26] : memref<300xf32, #tpu.memory_space<smem>>
    %541 = vector.broadcast %540 : f32 to vector<2x7x11xf32>
    %542 = arith.mulf %539, %541 : vector<2x7x11xf32>
    %543 = arith.addf %522, %542 : vector<2x7x11xf32>
    %c86 = arith.constant 86 : index
    %544 = memref.load %arg3[%c86] : memref<300xf32, #tpu.memory_space<smem>>
    %545 = vector.broadcast %544 : f32 to vector<2x7x11xf32>
    %546 = arith.mulf %539, %545 : vector<2x7x11xf32>
    %547 = arith.addf %526, %546 : vector<2x7x11xf32>
    %c146 = arith.constant 146 : index
    %548 = memref.load %arg3[%c146] : memref<300xf32, #tpu.memory_space<smem>>
    %549 = vector.broadcast %548 : f32 to vector<2x7x11xf32>
    %550 = arith.mulf %539, %549 : vector<2x7x11xf32>
    %551 = arith.addf %530, %550 : vector<2x7x11xf32>
    %c206 = arith.constant 206 : index
    %552 = memref.load %arg3[%c206] : memref<300xf32, #tpu.memory_space<smem>>
    %553 = vector.broadcast %552 : f32 to vector<2x7x11xf32>
    %554 = arith.mulf %539, %553 : vector<2x7x11xf32>
    %555 = arith.addf %534, %554 : vector<2x7x11xf32>
    %c266 = arith.constant 266 : index
    %556 = memref.load %arg3[%c266] : memref<300xf32, #tpu.memory_space<smem>>
    %557 = vector.broadcast %556 : f32 to vector<2x7x11xf32>
    %558 = arith.mulf %539, %557 : vector<2x7x11xf32>
    %559 = arith.addf %538, %558 : vector<2x7x11xf32>
    %560 = vector.extract_strided_slice %402 {offsets = [0, 0, 2], sizes = [2, 8, 11], strides = [1, 1, 1]} : vector<2x8x16xf32> to vector<2x8x11xf32>
    %561 = vector.extract_strided_slice %429 {offsets = [0, 0, 2], sizes = [2, 8, 11], strides = [1, 1, 1]} : vector<2x8x16xf32> to vector<2x8x11xf32>
    %562 = vector.extract_strided_slice %560 {offsets = [0, 0, 0], sizes = [2, 7, 11], strides = [1, 1, 1]} : vector<2x8x11xf32> to vector<2x7x11xf32>
    %c17 = arith.constant 17 : index
    %563 = memref.load %arg3[%c17] : memref<300xf32, #tpu.memory_space<smem>>
    %564 = vector.broadcast %563 : f32 to vector<2x7x11xf32>
    %565 = arith.mulf %562, %564 : vector<2x7x11xf32>
    %566 = arith.addf %543, %565 : vector<2x7x11xf32>
    %c77 = arith.constant 77 : index
    %567 = memref.load %arg3[%c77] : memref<300xf32, #tpu.memory_space<smem>>
    %568 = vector.broadcast %567 : f32 to vector<2x7x11xf32>
    %569 = arith.mulf %562, %568 : vector<2x7x11xf32>
    %570 = arith.addf %547, %569 : vector<2x7x11xf32>
    %c137 = arith.constant 137 : index
    %571 = memref.load %arg3[%c137] : memref<300xf32, #tpu.memory_space<smem>>
    %572 = vector.broadcast %571 : f32 to vector<2x7x11xf32>
    %573 = arith.mulf %562, %572 : vector<2x7x11xf32>
    %574 = arith.addf %551, %573 : vector<2x7x11xf32>
    %c197 = arith.constant 197 : index
    %575 = memref.load %arg3[%c197] : memref<300xf32, #tpu.memory_space<smem>>
    %576 = vector.broadcast %575 : f32 to vector<2x7x11xf32>
    %577 = arith.mulf %562, %576 : vector<2x7x11xf32>
    %578 = arith.addf %555, %577 : vector<2x7x11xf32>
    %c257 = arith.constant 257 : index
    %579 = memref.load %arg3[%c257] : memref<300xf32, #tpu.memory_space<smem>>
    %580 = vector.broadcast %579 : f32 to vector<2x7x11xf32>
    %581 = arith.mulf %562, %580 : vector<2x7x11xf32>
    %582 = arith.addf %559, %581 : vector<2x7x11xf32>
    %583 = vector.extract_strided_slice %561 {offsets = [0, 0, 0], sizes = [2, 7, 11], strides = [1, 1, 1]} : vector<2x8x11xf32> to vector<2x7x11xf32>
    %c22 = arith.constant 22 : index
    %584 = memref.load %arg3[%c22] : memref<300xf32, #tpu.memory_space<smem>>
    %585 = vector.broadcast %584 : f32 to vector<2x7x11xf32>
    %586 = arith.mulf %583, %585 : vector<2x7x11xf32>
    %587 = arith.addf %566, %586 : vector<2x7x11xf32>
    %c82 = arith.constant 82 : index
    %588 = memref.load %arg3[%c82] : memref<300xf32, #tpu.memory_space<smem>>
    %589 = vector.broadcast %588 : f32 to vector<2x7x11xf32>
    %590 = arith.mulf %583, %589 : vector<2x7x11xf32>
    %591 = arith.addf %570, %590 : vector<2x7x11xf32>
    %c142 = arith.constant 142 : index
    %592 = memref.load %arg3[%c142] : memref<300xf32, #tpu.memory_space<smem>>
    %593 = vector.broadcast %592 : f32 to vector<2x7x11xf32>
    %594 = arith.mulf %583, %593 : vector<2x7x11xf32>
    %595 = arith.addf %574, %594 : vector<2x7x11xf32>
    %c202 = arith.constant 202 : index
    %596 = memref.load %arg3[%c202] : memref<300xf32, #tpu.memory_space<smem>>
    %597 = vector.broadcast %596 : f32 to vector<2x7x11xf32>
    %598 = arith.mulf %583, %597 : vector<2x7x11xf32>
    %599 = arith.addf %578, %598 : vector<2x7x11xf32>
    %c262 = arith.constant 262 : index
    %600 = memref.load %arg3[%c262] : memref<300xf32, #tpu.memory_space<smem>>
    %601 = vector.broadcast %600 : f32 to vector<2x7x11xf32>
    %602 = arith.mulf %583, %601 : vector<2x7x11xf32>
    %603 = arith.addf %582, %602 : vector<2x7x11xf32>
    %604 = vector.extract_strided_slice %560 {offsets = [0, 1, 0], sizes = [2, 7, 11], strides = [1, 1, 1]} : vector<2x8x11xf32> to vector<2x7x11xf32>
    %c27 = arith.constant 27 : index
    %605 = memref.load %arg3[%c27] : memref<300xf32, #tpu.memory_space<smem>>
    %606 = vector.broadcast %605 : f32 to vector<2x7x11xf32>
    %607 = arith.mulf %604, %606 : vector<2x7x11xf32>
    %608 = arith.addf %587, %607 : vector<2x7x11xf32>
    %c87 = arith.constant 87 : index
    %609 = memref.load %arg3[%c87] : memref<300xf32, #tpu.memory_space<smem>>
    %610 = vector.broadcast %609 : f32 to vector<2x7x11xf32>
    %611 = arith.mulf %604, %610 : vector<2x7x11xf32>
    %612 = arith.addf %591, %611 : vector<2x7x11xf32>
    %c147 = arith.constant 147 : index
    %613 = memref.load %arg3[%c147] : memref<300xf32, #tpu.memory_space<smem>>
    %614 = vector.broadcast %613 : f32 to vector<2x7x11xf32>
    %615 = arith.mulf %604, %614 : vector<2x7x11xf32>
    %616 = arith.addf %595, %615 : vector<2x7x11xf32>
    %c207 = arith.constant 207 : index
    %617 = memref.load %arg3[%c207] : memref<300xf32, #tpu.memory_space<smem>>
    %618 = vector.broadcast %617 : f32 to vector<2x7x11xf32>
    %619 = arith.mulf %604, %618 : vector<2x7x11xf32>
    %620 = arith.addf %599, %619 : vector<2x7x11xf32>
    %c267 = arith.constant 267 : index
    %621 = memref.load %arg3[%c267] : memref<300xf32, #tpu.memory_space<smem>>
    %622 = vector.broadcast %621 : f32 to vector<2x7x11xf32>
    %623 = arith.mulf %604, %622 : vector<2x7x11xf32>
    %624 = arith.addf %603, %623 : vector<2x7x11xf32>
    %625 = vector.extract_strided_slice %402 {offsets = [0, 0, 3], sizes = [2, 8, 11], strides = [1, 1, 1]} : vector<2x8x16xf32> to vector<2x8x11xf32>
    %626 = vector.extract_strided_slice %429 {offsets = [0, 0, 3], sizes = [2, 8, 11], strides = [1, 1, 1]} : vector<2x8x16xf32> to vector<2x8x11xf32>
    %627 = vector.extract_strided_slice %625 {offsets = [0, 0, 0], sizes = [2, 7, 11], strides = [1, 1, 1]} : vector<2x8x11xf32> to vector<2x7x11xf32>
    %c18 = arith.constant 18 : index
    %628 = memref.load %arg3[%c18] : memref<300xf32, #tpu.memory_space<smem>>
    %629 = vector.broadcast %628 : f32 to vector<2x7x11xf32>
    %630 = arith.mulf %627, %629 : vector<2x7x11xf32>
    %631 = arith.addf %608, %630 : vector<2x7x11xf32>
    %c78 = arith.constant 78 : index
    %632 = memref.load %arg3[%c78] : memref<300xf32, #tpu.memory_space<smem>>
    %633 = vector.broadcast %632 : f32 to vector<2x7x11xf32>
    %634 = arith.mulf %627, %633 : vector<2x7x11xf32>
    %635 = arith.addf %612, %634 : vector<2x7x11xf32>
    %c138 = arith.constant 138 : index
    %636 = memref.load %arg3[%c138] : memref<300xf32, #tpu.memory_space<smem>>
    %637 = vector.broadcast %636 : f32 to vector<2x7x11xf32>
    %638 = arith.mulf %627, %637 : vector<2x7x11xf32>
    %639 = arith.addf %616, %638 : vector<2x7x11xf32>
    %c198 = arith.constant 198 : index
    %640 = memref.load %arg3[%c198] : memref<300xf32, #tpu.memory_space<smem>>
    %641 = vector.broadcast %640 : f32 to vector<2x7x11xf32>
    %642 = arith.mulf %627, %641 : vector<2x7x11xf32>
    %643 = arith.addf %620, %642 : vector<2x7x11xf32>
    %c258 = arith.constant 258 : index
    %644 = memref.load %arg3[%c258] : memref<300xf32, #tpu.memory_space<smem>>
    %645 = vector.broadcast %644 : f32 to vector<2x7x11xf32>
    %646 = arith.mulf %627, %645 : vector<2x7x11xf32>
    %647 = arith.addf %624, %646 : vector<2x7x11xf32>
    %648 = vector.extract_strided_slice %626 {offsets = [0, 0, 0], sizes = [2, 7, 11], strides = [1, 1, 1]} : vector<2x8x11xf32> to vector<2x7x11xf32>
    %c23 = arith.constant 23 : index
    %649 = memref.load %arg3[%c23] : memref<300xf32, #tpu.memory_space<smem>>
    %650 = vector.broadcast %649 : f32 to vector<2x7x11xf32>
    %651 = arith.mulf %648, %650 : vector<2x7x11xf32>
    %652 = arith.addf %631, %651 : vector<2x7x11xf32>
    %c83 = arith.constant 83 : index
    %653 = memref.load %arg3[%c83] : memref<300xf32, #tpu.memory_space<smem>>
    %654 = vector.broadcast %653 : f32 to vector<2x7x11xf32>
    %655 = arith.mulf %648, %654 : vector<2x7x11xf32>
    %656 = arith.addf %635, %655 : vector<2x7x11xf32>
    %c143 = arith.constant 143 : index
    %657 = memref.load %arg3[%c143] : memref<300xf32, #tpu.memory_space<smem>>
    %658 = vector.broadcast %657 : f32 to vector<2x7x11xf32>
    %659 = arith.mulf %648, %658 : vector<2x7x11xf32>
    %660 = arith.addf %639, %659 : vector<2x7x11xf32>
    %c203 = arith.constant 203 : index
    %661 = memref.load %arg3[%c203] : memref<300xf32, #tpu.memory_space<smem>>
    %662 = vector.broadcast %661 : f32 to vector<2x7x11xf32>
    %663 = arith.mulf %648, %662 : vector<2x7x11xf32>
    %664 = arith.addf %643, %663 : vector<2x7x11xf32>
    %c263 = arith.constant 263 : index
    %665 = memref.load %arg3[%c263] : memref<300xf32, #tpu.memory_space<smem>>
    %666 = vector.broadcast %665 : f32 to vector<2x7x11xf32>
    %667 = arith.mulf %648, %666 : vector<2x7x11xf32>
    %668 = arith.addf %647, %667 : vector<2x7x11xf32>
    %669 = vector.extract_strided_slice %625 {offsets = [0, 1, 0], sizes = [2, 7, 11], strides = [1, 1, 1]} : vector<2x8x11xf32> to vector<2x7x11xf32>
    %c28 = arith.constant 28 : index
    %670 = memref.load %arg3[%c28] : memref<300xf32, #tpu.memory_space<smem>>
    %671 = vector.broadcast %670 : f32 to vector<2x7x11xf32>
    %672 = arith.mulf %669, %671 : vector<2x7x11xf32>
    %673 = arith.addf %652, %672 : vector<2x7x11xf32>
    %c88 = arith.constant 88 : index
    %674 = memref.load %arg3[%c88] : memref<300xf32, #tpu.memory_space<smem>>
    %675 = vector.broadcast %674 : f32 to vector<2x7x11xf32>
    %676 = arith.mulf %669, %675 : vector<2x7x11xf32>
    %677 = arith.addf %656, %676 : vector<2x7x11xf32>
    %c148 = arith.constant 148 : index
    %678 = memref.load %arg3[%c148] : memref<300xf32, #tpu.memory_space<smem>>
    %679 = vector.broadcast %678 : f32 to vector<2x7x11xf32>
    %680 = arith.mulf %669, %679 : vector<2x7x11xf32>
    %681 = arith.addf %660, %680 : vector<2x7x11xf32>
    %c208 = arith.constant 208 : index
    %682 = memref.load %arg3[%c208] : memref<300xf32, #tpu.memory_space<smem>>
    %683 = vector.broadcast %682 : f32 to vector<2x7x11xf32>
    %684 = arith.mulf %669, %683 : vector<2x7x11xf32>
    %685 = arith.addf %664, %684 : vector<2x7x11xf32>
    %c268 = arith.constant 268 : index
    %686 = memref.load %arg3[%c268] : memref<300xf32, #tpu.memory_space<smem>>
    %687 = vector.broadcast %686 : f32 to vector<2x7x11xf32>
    %688 = arith.mulf %669, %687 : vector<2x7x11xf32>
    %689 = arith.addf %668, %688 : vector<2x7x11xf32>
    %690 = vector.extract_strided_slice %402 {offsets = [0, 0, 4], sizes = [2, 8, 11], strides = [1, 1, 1]} : vector<2x8x16xf32> to vector<2x8x11xf32>
    %691 = vector.extract_strided_slice %429 {offsets = [0, 0, 4], sizes = [2, 8, 11], strides = [1, 1, 1]} : vector<2x8x16xf32> to vector<2x8x11xf32>
    %692 = vector.extract_strided_slice %690 {offsets = [0, 0, 0], sizes = [2, 7, 11], strides = [1, 1, 1]} : vector<2x8x11xf32> to vector<2x7x11xf32>
    %c19 = arith.constant 19 : index
    %693 = memref.load %arg3[%c19] : memref<300xf32, #tpu.memory_space<smem>>
    %694 = vector.broadcast %693 : f32 to vector<2x7x11xf32>
    %695 = arith.mulf %692, %694 : vector<2x7x11xf32>
    %696 = arith.addf %673, %695 : vector<2x7x11xf32>
    %c79 = arith.constant 79 : index
    %697 = memref.load %arg3[%c79] : memref<300xf32, #tpu.memory_space<smem>>
    %698 = vector.broadcast %697 : f32 to vector<2x7x11xf32>
    %699 = arith.mulf %692, %698 : vector<2x7x11xf32>
    %700 = arith.addf %677, %699 : vector<2x7x11xf32>
    %c139 = arith.constant 139 : index
    %701 = memref.load %arg3[%c139] : memref<300xf32, #tpu.memory_space<smem>>
    %702 = vector.broadcast %701 : f32 to vector<2x7x11xf32>
    %703 = arith.mulf %692, %702 : vector<2x7x11xf32>
    %704 = arith.addf %681, %703 : vector<2x7x11xf32>
    %c199 = arith.constant 199 : index
    %705 = memref.load %arg3[%c199] : memref<300xf32, #tpu.memory_space<smem>>
    %706 = vector.broadcast %705 : f32 to vector<2x7x11xf32>
    %707 = arith.mulf %692, %706 : vector<2x7x11xf32>
    %708 = arith.addf %685, %707 : vector<2x7x11xf32>
    %c259 = arith.constant 259 : index
    %709 = memref.load %arg3[%c259] : memref<300xf32, #tpu.memory_space<smem>>
    %710 = vector.broadcast %709 : f32 to vector<2x7x11xf32>
    %711 = arith.mulf %692, %710 : vector<2x7x11xf32>
    %712 = arith.addf %689, %711 : vector<2x7x11xf32>
    %713 = vector.extract_strided_slice %691 {offsets = [0, 0, 0], sizes = [2, 7, 11], strides = [1, 1, 1]} : vector<2x8x11xf32> to vector<2x7x11xf32>
    %c24 = arith.constant 24 : index
    %714 = memref.load %arg3[%c24] : memref<300xf32, #tpu.memory_space<smem>>
    %715 = vector.broadcast %714 : f32 to vector<2x7x11xf32>
    %716 = arith.mulf %713, %715 : vector<2x7x11xf32>
    %717 = arith.addf %696, %716 : vector<2x7x11xf32>
    %c84 = arith.constant 84 : index
    %718 = memref.load %arg3[%c84] : memref<300xf32, #tpu.memory_space<smem>>
    %719 = vector.broadcast %718 : f32 to vector<2x7x11xf32>
    %720 = arith.mulf %713, %719 : vector<2x7x11xf32>
    %721 = arith.addf %700, %720 : vector<2x7x11xf32>
    %c144 = arith.constant 144 : index
    %722 = memref.load %arg3[%c144] : memref<300xf32, #tpu.memory_space<smem>>
    %723 = vector.broadcast %722 : f32 to vector<2x7x11xf32>
    %724 = arith.mulf %713, %723 : vector<2x7x11xf32>
    %725 = arith.addf %704, %724 : vector<2x7x11xf32>
    %c204 = arith.constant 204 : index
    %726 = memref.load %arg3[%c204] : memref<300xf32, #tpu.memory_space<smem>>
    %727 = vector.broadcast %726 : f32 to vector<2x7x11xf32>
    %728 = arith.mulf %713, %727 : vector<2x7x11xf32>
    %729 = arith.addf %708, %728 : vector<2x7x11xf32>
    %c264 = arith.constant 264 : index
    %730 = memref.load %arg3[%c264] : memref<300xf32, #tpu.memory_space<smem>>
    %731 = vector.broadcast %730 : f32 to vector<2x7x11xf32>
    %732 = arith.mulf %713, %731 : vector<2x7x11xf32>
    %733 = arith.addf %712, %732 : vector<2x7x11xf32>
    %734 = vector.extract_strided_slice %690 {offsets = [0, 1, 0], sizes = [2, 7, 11], strides = [1, 1, 1]} : vector<2x8x11xf32> to vector<2x7x11xf32>
    %c29 = arith.constant 29 : index
    %735 = memref.load %arg3[%c29] : memref<300xf32, #tpu.memory_space<smem>>
    %736 = vector.broadcast %735 : f32 to vector<2x7x11xf32>
    %737 = arith.mulf %734, %736 : vector<2x7x11xf32>
    %738 = arith.addf %717, %737 : vector<2x7x11xf32>
    %c89 = arith.constant 89 : index
    %739 = memref.load %arg3[%c89] : memref<300xf32, #tpu.memory_space<smem>>
    %740 = vector.broadcast %739 : f32 to vector<2x7x11xf32>
    %741 = arith.mulf %734, %740 : vector<2x7x11xf32>
    %742 = arith.addf %721, %741 : vector<2x7x11xf32>
    %c149 = arith.constant 149 : index
    %743 = memref.load %arg3[%c149] : memref<300xf32, #tpu.memory_space<smem>>
    %744 = vector.broadcast %743 : f32 to vector<2x7x11xf32>
    %745 = arith.mulf %734, %744 : vector<2x7x11xf32>
    %746 = arith.addf %725, %745 : vector<2x7x11xf32>
    %c209 = arith.constant 209 : index
    %747 = memref.load %arg3[%c209] : memref<300xf32, #tpu.memory_space<smem>>
    %748 = vector.broadcast %747 : f32 to vector<2x7x11xf32>
    %749 = arith.mulf %734, %748 : vector<2x7x11xf32>
    %750 = arith.addf %729, %749 : vector<2x7x11xf32>
    %c269 = arith.constant 269 : index
    %751 = memref.load %arg3[%c269] : memref<300xf32, #tpu.memory_space<smem>>
    %752 = vector.broadcast %751 : f32 to vector<2x7x11xf32>
    %753 = arith.mulf %734, %752 : vector<2x7x11xf32>
    %754 = arith.addf %733, %753 : vector<2x7x11xf32>
    %755 = vector.extract_strided_slice %0 {offsets = [0, 0, 0, 0], sizes = [2, 1, 8, 16], strides = [1, 1, 1, 1]} : vector<2x4x8x16xf32> to vector<2x1x8x16xf32>
    %756 = vector.shape_cast %755 : vector<2x1x8x16xf32> to vector<2x8x16xf32>
    %c2_28 = arith.constant 2 : index
    %757 = memref.load %arg1[%c2_28] : memref<16xf32, #tpu.memory_space<smem>>
    %758 = vector.broadcast %757 : f32 to vector<2x8x16xf32>
    %759 = arith.mulf %756, %758 : vector<2x8x16xf32>
    %760 = vector.extract_strided_slice %0 {offsets = [0, 1, 0, 0], sizes = [2, 1, 8, 16], strides = [1, 1, 1, 1]} : vector<2x4x8x16xf32> to vector<2x1x8x16xf32>
    %761 = vector.shape_cast %760 : vector<2x1x8x16xf32> to vector<2x8x16xf32>
    %c6_29 = arith.constant 6 : index
    %762 = memref.load %arg1[%c6_29] : memref<16xf32, #tpu.memory_space<smem>>
    %763 = vector.broadcast %762 : f32 to vector<2x8x16xf32>
    %764 = arith.mulf %761, %763 : vector<2x8x16xf32>
    %765 = arith.addf %759, %764 : vector<2x8x16xf32>
    %766 = vector.extract_strided_slice %0 {offsets = [0, 2, 0, 0], sizes = [2, 1, 8, 16], strides = [1, 1, 1, 1]} : vector<2x4x8x16xf32> to vector<2x1x8x16xf32>
    %767 = vector.shape_cast %766 : vector<2x1x8x16xf32> to vector<2x8x16xf32>
    %c10_30 = arith.constant 10 : index
    %768 = memref.load %arg1[%c10_30] : memref<16xf32, #tpu.memory_space<smem>>
    %769 = vector.broadcast %768 : f32 to vector<2x8x16xf32>
    %770 = arith.mulf %767, %769 : vector<2x8x16xf32>
    %771 = arith.addf %765, %770 : vector<2x8x16xf32>
    %772 = vector.extract_strided_slice %0 {offsets = [0, 3, 0, 0], sizes = [2, 1, 8, 16], strides = [1, 1, 1, 1]} : vector<2x4x8x16xf32> to vector<2x1x8x16xf32>
    %773 = vector.shape_cast %772 : vector<2x1x8x16xf32> to vector<2x8x16xf32>
    %c14_31 = arith.constant 14 : index
    %774 = memref.load %arg1[%c14_31] : memref<16xf32, #tpu.memory_space<smem>>
    %775 = vector.broadcast %774 : f32 to vector<2x8x16xf32>
    %776 = arith.mulf %773, %775 : vector<2x8x16xf32>
    %777 = arith.addf %771, %776 : vector<2x8x16xf32>
    %c2_32 = arith.constant 2 : index
    %778 = memref.load %arg2[%c2_32] : memref<4xf32, #tpu.memory_space<smem>>
    %779 = vector.broadcast %778 : f32 to vector<2x8x16xf32>
    %780 = arith.addf %777, %779 : vector<2x8x16xf32>
    %781 = math.tanh %780 : vector<2x8x16xf32>
    %782 = vector.extract_strided_slice %1 {offsets = [0, 0, 0, 0], sizes = [2, 1, 8, 16], strides = [1, 1, 1, 1]} : vector<2x4x8x16xf32> to vector<2x1x8x16xf32>
    %783 = vector.shape_cast %782 : vector<2x1x8x16xf32> to vector<2x8x16xf32>
    %c2_33 = arith.constant 2 : index
    %784 = memref.load %arg1[%c2_33] : memref<16xf32, #tpu.memory_space<smem>>
    %785 = vector.broadcast %784 : f32 to vector<2x8x16xf32>
    %786 = arith.mulf %783, %785 : vector<2x8x16xf32>
    %787 = vector.extract_strided_slice %1 {offsets = [0, 1, 0, 0], sizes = [2, 1, 8, 16], strides = [1, 1, 1, 1]} : vector<2x4x8x16xf32> to vector<2x1x8x16xf32>
    %788 = vector.shape_cast %787 : vector<2x1x8x16xf32> to vector<2x8x16xf32>
    %c6_34 = arith.constant 6 : index
    %789 = memref.load %arg1[%c6_34] : memref<16xf32, #tpu.memory_space<smem>>
    %790 = vector.broadcast %789 : f32 to vector<2x8x16xf32>
    %791 = arith.mulf %788, %790 : vector<2x8x16xf32>
    %792 = arith.addf %786, %791 : vector<2x8x16xf32>
    %793 = vector.extract_strided_slice %1 {offsets = [0, 2, 0, 0], sizes = [2, 1, 8, 16], strides = [1, 1, 1, 1]} : vector<2x4x8x16xf32> to vector<2x1x8x16xf32>
    %794 = vector.shape_cast %793 : vector<2x1x8x16xf32> to vector<2x8x16xf32>
    %c10_35 = arith.constant 10 : index
    %795 = memref.load %arg1[%c10_35] : memref<16xf32, #tpu.memory_space<smem>>
    %796 = vector.broadcast %795 : f32 to vector<2x8x16xf32>
    %797 = arith.mulf %794, %796 : vector<2x8x16xf32>
    %798 = arith.addf %792, %797 : vector<2x8x16xf32>
    %799 = vector.extract_strided_slice %1 {offsets = [0, 3, 0, 0], sizes = [2, 1, 8, 16], strides = [1, 1, 1, 1]} : vector<2x4x8x16xf32> to vector<2x1x8x16xf32>
    %800 = vector.shape_cast %799 : vector<2x1x8x16xf32> to vector<2x8x16xf32>
    %c14_36 = arith.constant 14 : index
    %801 = memref.load %arg1[%c14_36] : memref<16xf32, #tpu.memory_space<smem>>
    %802 = vector.broadcast %801 : f32 to vector<2x8x16xf32>
    %803 = arith.mulf %800, %802 : vector<2x8x16xf32>
    %804 = arith.addf %798, %803 : vector<2x8x16xf32>
    %c2_37 = arith.constant 2 : index
    %805 = memref.load %arg2[%c2_37] : memref<4xf32, #tpu.memory_space<smem>>
    %806 = vector.broadcast %805 : f32 to vector<2x8x16xf32>
    %807 = arith.addf %804, %806 : vector<2x8x16xf32>
    %808 = math.tanh %807 : vector<2x8x16xf32>
    %809 = vector.extract_strided_slice %781 {offsets = [0, 0, 0], sizes = [2, 8, 11], strides = [1, 1, 1]} : vector<2x8x16xf32> to vector<2x8x11xf32>
    %810 = vector.extract_strided_slice %808 {offsets = [0, 0, 0], sizes = [2, 8, 11], strides = [1, 1, 1]} : vector<2x8x16xf32> to vector<2x8x11xf32>
    %811 = vector.extract_strided_slice %809 {offsets = [0, 0, 0], sizes = [2, 7, 11], strides = [1, 1, 1]} : vector<2x8x11xf32> to vector<2x7x11xf32>
    %c30 = arith.constant 30 : index
    %812 = memref.load %arg3[%c30] : memref<300xf32, #tpu.memory_space<smem>>
    %813 = vector.broadcast %812 : f32 to vector<2x7x11xf32>
    %814 = arith.mulf %811, %813 : vector<2x7x11xf32>
    %815 = arith.addf %738, %814 : vector<2x7x11xf32>
    %c90 = arith.constant 90 : index
    %816 = memref.load %arg3[%c90] : memref<300xf32, #tpu.memory_space<smem>>
    %817 = vector.broadcast %816 : f32 to vector<2x7x11xf32>
    %818 = arith.mulf %811, %817 : vector<2x7x11xf32>
    %819 = arith.addf %742, %818 : vector<2x7x11xf32>
    %c150 = arith.constant 150 : index
    %820 = memref.load %arg3[%c150] : memref<300xf32, #tpu.memory_space<smem>>
    %821 = vector.broadcast %820 : f32 to vector<2x7x11xf32>
    %822 = arith.mulf %811, %821 : vector<2x7x11xf32>
    %823 = arith.addf %746, %822 : vector<2x7x11xf32>
    %c210 = arith.constant 210 : index
    %824 = memref.load %arg3[%c210] : memref<300xf32, #tpu.memory_space<smem>>
    %825 = vector.broadcast %824 : f32 to vector<2x7x11xf32>
    %826 = arith.mulf %811, %825 : vector<2x7x11xf32>
    %827 = arith.addf %750, %826 : vector<2x7x11xf32>
    %c270 = arith.constant 270 : index
    %828 = memref.load %arg3[%c270] : memref<300xf32, #tpu.memory_space<smem>>
    %829 = vector.broadcast %828 : f32 to vector<2x7x11xf32>
    %830 = arith.mulf %811, %829 : vector<2x7x11xf32>
    %831 = arith.addf %754, %830 : vector<2x7x11xf32>
    %832 = vector.extract_strided_slice %810 {offsets = [0, 0, 0], sizes = [2, 7, 11], strides = [1, 1, 1]} : vector<2x8x11xf32> to vector<2x7x11xf32>
    %c35 = arith.constant 35 : index
    %833 = memref.load %arg3[%c35] : memref<300xf32, #tpu.memory_space<smem>>
    %834 = vector.broadcast %833 : f32 to vector<2x7x11xf32>
    %835 = arith.mulf %832, %834 : vector<2x7x11xf32>
    %836 = arith.addf %815, %835 : vector<2x7x11xf32>
    %c95 = arith.constant 95 : index
    %837 = memref.load %arg3[%c95] : memref<300xf32, #tpu.memory_space<smem>>
    %838 = vector.broadcast %837 : f32 to vector<2x7x11xf32>
    %839 = arith.mulf %832, %838 : vector<2x7x11xf32>
    %840 = arith.addf %819, %839 : vector<2x7x11xf32>
    %c155 = arith.constant 155 : index
    %841 = memref.load %arg3[%c155] : memref<300xf32, #tpu.memory_space<smem>>
    %842 = vector.broadcast %841 : f32 to vector<2x7x11xf32>
    %843 = arith.mulf %832, %842 : vector<2x7x11xf32>
    %844 = arith.addf %823, %843 : vector<2x7x11xf32>
    %c215 = arith.constant 215 : index
    %845 = memref.load %arg3[%c215] : memref<300xf32, #tpu.memory_space<smem>>
    %846 = vector.broadcast %845 : f32 to vector<2x7x11xf32>
    %847 = arith.mulf %832, %846 : vector<2x7x11xf32>
    %848 = arith.addf %827, %847 : vector<2x7x11xf32>
    %c275 = arith.constant 275 : index
    %849 = memref.load %arg3[%c275] : memref<300xf32, #tpu.memory_space<smem>>
    %850 = vector.broadcast %849 : f32 to vector<2x7x11xf32>
    %851 = arith.mulf %832, %850 : vector<2x7x11xf32>
    %852 = arith.addf %831, %851 : vector<2x7x11xf32>
    %853 = vector.extract_strided_slice %809 {offsets = [0, 1, 0], sizes = [2, 7, 11], strides = [1, 1, 1]} : vector<2x8x11xf32> to vector<2x7x11xf32>
    %c40 = arith.constant 40 : index
    %854 = memref.load %arg3[%c40] : memref<300xf32, #tpu.memory_space<smem>>
    %855 = vector.broadcast %854 : f32 to vector<2x7x11xf32>
    %856 = arith.mulf %853, %855 : vector<2x7x11xf32>
    %857 = arith.addf %836, %856 : vector<2x7x11xf32>
    %c100 = arith.constant 100 : index
    %858 = memref.load %arg3[%c100] : memref<300xf32, #tpu.memory_space<smem>>
    %859 = vector.broadcast %858 : f32 to vector<2x7x11xf32>
    %860 = arith.mulf %853, %859 : vector<2x7x11xf32>
    %861 = arith.addf %840, %860 : vector<2x7x11xf32>
    %c160 = arith.constant 160 : index
    %862 = memref.load %arg3[%c160] : memref<300xf32, #tpu.memory_space<smem>>
    %863 = vector.broadcast %862 : f32 to vector<2x7x11xf32>
    %864 = arith.mulf %853, %863 : vector<2x7x11xf32>
    %865 = arith.addf %844, %864 : vector<2x7x11xf32>
    %c220 = arith.constant 220 : index
    %866 = memref.load %arg3[%c220] : memref<300xf32, #tpu.memory_space<smem>>
    %867 = vector.broadcast %866 : f32 to vector<2x7x11xf32>
    %868 = arith.mulf %853, %867 : vector<2x7x11xf32>
    %869 = arith.addf %848, %868 : vector<2x7x11xf32>
    %c280 = arith.constant 280 : index
    %870 = memref.load %arg3[%c280] : memref<300xf32, #tpu.memory_space<smem>>
    %871 = vector.broadcast %870 : f32 to vector<2x7x11xf32>
    %872 = arith.mulf %853, %871 : vector<2x7x11xf32>
    %873 = arith.addf %852, %872 : vector<2x7x11xf32>
    %874 = vector.extract_strided_slice %781 {offsets = [0, 0, 1], sizes = [2, 8, 11], strides = [1, 1, 1]} : vector<2x8x16xf32> to vector<2x8x11xf32>
    %875 = vector.extract_strided_slice %808 {offsets = [0, 0, 1], sizes = [2, 8, 11], strides = [1, 1, 1]} : vector<2x8x16xf32> to vector<2x8x11xf32>
    %876 = vector.extract_strided_slice %874 {offsets = [0, 0, 0], sizes = [2, 7, 11], strides = [1, 1, 1]} : vector<2x8x11xf32> to vector<2x7x11xf32>
    %c31 = arith.constant 31 : index
    %877 = memref.load %arg3[%c31] : memref<300xf32, #tpu.memory_space<smem>>
    %878 = vector.broadcast %877 : f32 to vector<2x7x11xf32>
    %879 = arith.mulf %876, %878 : vector<2x7x11xf32>
    %880 = arith.addf %857, %879 : vector<2x7x11xf32>
    %c91 = arith.constant 91 : index
    %881 = memref.load %arg3[%c91] : memref<300xf32, #tpu.memory_space<smem>>
    %882 = vector.broadcast %881 : f32 to vector<2x7x11xf32>
    %883 = arith.mulf %876, %882 : vector<2x7x11xf32>
    %884 = arith.addf %861, %883 : vector<2x7x11xf32>
    %c151 = arith.constant 151 : index
    %885 = memref.load %arg3[%c151] : memref<300xf32, #tpu.memory_space<smem>>
    %886 = vector.broadcast %885 : f32 to vector<2x7x11xf32>
    %887 = arith.mulf %876, %886 : vector<2x7x11xf32>
    %888 = arith.addf %865, %887 : vector<2x7x11xf32>
    %c211 = arith.constant 211 : index
    %889 = memref.load %arg3[%c211] : memref<300xf32, #tpu.memory_space<smem>>
    %890 = vector.broadcast %889 : f32 to vector<2x7x11xf32>
    %891 = arith.mulf %876, %890 : vector<2x7x11xf32>
    %892 = arith.addf %869, %891 : vector<2x7x11xf32>
    %c271 = arith.constant 271 : index
    %893 = memref.load %arg3[%c271] : memref<300xf32, #tpu.memory_space<smem>>
    %894 = vector.broadcast %893 : f32 to vector<2x7x11xf32>
    %895 = arith.mulf %876, %894 : vector<2x7x11xf32>
    %896 = arith.addf %873, %895 : vector<2x7x11xf32>
    %897 = vector.extract_strided_slice %875 {offsets = [0, 0, 0], sizes = [2, 7, 11], strides = [1, 1, 1]} : vector<2x8x11xf32> to vector<2x7x11xf32>
    %c36 = arith.constant 36 : index
    %898 = memref.load %arg3[%c36] : memref<300xf32, #tpu.memory_space<smem>>
    %899 = vector.broadcast %898 : f32 to vector<2x7x11xf32>
    %900 = arith.mulf %897, %899 : vector<2x7x11xf32>
    %901 = arith.addf %880, %900 : vector<2x7x11xf32>
    %c96 = arith.constant 96 : index
    %902 = memref.load %arg3[%c96] : memref<300xf32, #tpu.memory_space<smem>>
    %903 = vector.broadcast %902 : f32 to vector<2x7x11xf32>
    %904 = arith.mulf %897, %903 : vector<2x7x11xf32>
    %905 = arith.addf %884, %904 : vector<2x7x11xf32>
    %c156 = arith.constant 156 : index
    %906 = memref.load %arg3[%c156] : memref<300xf32, #tpu.memory_space<smem>>
    %907 = vector.broadcast %906 : f32 to vector<2x7x11xf32>
    %908 = arith.mulf %897, %907 : vector<2x7x11xf32>
    %909 = arith.addf %888, %908 : vector<2x7x11xf32>
    %c216 = arith.constant 216 : index
    %910 = memref.load %arg3[%c216] : memref<300xf32, #tpu.memory_space<smem>>
    %911 = vector.broadcast %910 : f32 to vector<2x7x11xf32>
    %912 = arith.mulf %897, %911 : vector<2x7x11xf32>
    %913 = arith.addf %892, %912 : vector<2x7x11xf32>
    %c276 = arith.constant 276 : index
    %914 = memref.load %arg3[%c276] : memref<300xf32, #tpu.memory_space<smem>>
    %915 = vector.broadcast %914 : f32 to vector<2x7x11xf32>
    %916 = arith.mulf %897, %915 : vector<2x7x11xf32>
    %917 = arith.addf %896, %916 : vector<2x7x11xf32>
    %918 = vector.extract_strided_slice %874 {offsets = [0, 1, 0], sizes = [2, 7, 11], strides = [1, 1, 1]} : vector<2x8x11xf32> to vector<2x7x11xf32>
    %c41 = arith.constant 41 : index
    %919 = memref.load %arg3[%c41] : memref<300xf32, #tpu.memory_space<smem>>
    %920 = vector.broadcast %919 : f32 to vector<2x7x11xf32>
    %921 = arith.mulf %918, %920 : vector<2x7x11xf32>
    %922 = arith.addf %901, %921 : vector<2x7x11xf32>
    %c101 = arith.constant 101 : index
    %923 = memref.load %arg3[%c101] : memref<300xf32, #tpu.memory_space<smem>>
    %924 = vector.broadcast %923 : f32 to vector<2x7x11xf32>
    %925 = arith.mulf %918, %924 : vector<2x7x11xf32>
    %926 = arith.addf %905, %925 : vector<2x7x11xf32>
    %c161 = arith.constant 161 : index
    %927 = memref.load %arg3[%c161] : memref<300xf32, #tpu.memory_space<smem>>
    %928 = vector.broadcast %927 : f32 to vector<2x7x11xf32>
    %929 = arith.mulf %918, %928 : vector<2x7x11xf32>
    %930 = arith.addf %909, %929 : vector<2x7x11xf32>
    %c221 = arith.constant 221 : index
    %931 = memref.load %arg3[%c221] : memref<300xf32, #tpu.memory_space<smem>>
    %932 = vector.broadcast %931 : f32 to vector<2x7x11xf32>
    %933 = arith.mulf %918, %932 : vector<2x7x11xf32>
    %934 = arith.addf %913, %933 : vector<2x7x11xf32>
    %c281 = arith.constant 281 : index
    %935 = memref.load %arg3[%c281] : memref<300xf32, #tpu.memory_space<smem>>
    %936 = vector.broadcast %935 : f32 to vector<2x7x11xf32>
    %937 = arith.mulf %918, %936 : vector<2x7x11xf32>
    %938 = arith.addf %917, %937 : vector<2x7x11xf32>
    %939 = vector.extract_strided_slice %781 {offsets = [0, 0, 2], sizes = [2, 8, 11], strides = [1, 1, 1]} : vector<2x8x16xf32> to vector<2x8x11xf32>
    %940 = vector.extract_strided_slice %808 {offsets = [0, 0, 2], sizes = [2, 8, 11], strides = [1, 1, 1]} : vector<2x8x16xf32> to vector<2x8x11xf32>
    %941 = vector.extract_strided_slice %939 {offsets = [0, 0, 0], sizes = [2, 7, 11], strides = [1, 1, 1]} : vector<2x8x11xf32> to vector<2x7x11xf32>
    %c32 = arith.constant 32 : index
    %942 = memref.load %arg3[%c32] : memref<300xf32, #tpu.memory_space<smem>>
    %943 = vector.broadcast %942 : f32 to vector<2x7x11xf32>
    %944 = arith.mulf %941, %943 : vector<2x7x11xf32>
    %945 = arith.addf %922, %944 : vector<2x7x11xf32>
    %c92 = arith.constant 92 : index
    %946 = memref.load %arg3[%c92] : memref<300xf32, #tpu.memory_space<smem>>
    %947 = vector.broadcast %946 : f32 to vector<2x7x11xf32>
    %948 = arith.mulf %941, %947 : vector<2x7x11xf32>
    %949 = arith.addf %926, %948 : vector<2x7x11xf32>
    %c152 = arith.constant 152 : index
    %950 = memref.load %arg3[%c152] : memref<300xf32, #tpu.memory_space<smem>>
    %951 = vector.broadcast %950 : f32 to vector<2x7x11xf32>
    %952 = arith.mulf %941, %951 : vector<2x7x11xf32>
    %953 = arith.addf %930, %952 : vector<2x7x11xf32>
    %c212 = arith.constant 212 : index
    %954 = memref.load %arg3[%c212] : memref<300xf32, #tpu.memory_space<smem>>
    %955 = vector.broadcast %954 : f32 to vector<2x7x11xf32>
    %956 = arith.mulf %941, %955 : vector<2x7x11xf32>
    %957 = arith.addf %934, %956 : vector<2x7x11xf32>
    %c272 = arith.constant 272 : index
    %958 = memref.load %arg3[%c272] : memref<300xf32, #tpu.memory_space<smem>>
    %959 = vector.broadcast %958 : f32 to vector<2x7x11xf32>
    %960 = arith.mulf %941, %959 : vector<2x7x11xf32>
    %961 = arith.addf %938, %960 : vector<2x7x11xf32>
    %962 = vector.extract_strided_slice %940 {offsets = [0, 0, 0], sizes = [2, 7, 11], strides = [1, 1, 1]} : vector<2x8x11xf32> to vector<2x7x11xf32>
    %c37 = arith.constant 37 : index
    %963 = memref.load %arg3[%c37] : memref<300xf32, #tpu.memory_space<smem>>
    %964 = vector.broadcast %963 : f32 to vector<2x7x11xf32>
    %965 = arith.mulf %962, %964 : vector<2x7x11xf32>
    %966 = arith.addf %945, %965 : vector<2x7x11xf32>
    %c97 = arith.constant 97 : index
    %967 = memref.load %arg3[%c97] : memref<300xf32, #tpu.memory_space<smem>>
    %968 = vector.broadcast %967 : f32 to vector<2x7x11xf32>
    %969 = arith.mulf %962, %968 : vector<2x7x11xf32>
    %970 = arith.addf %949, %969 : vector<2x7x11xf32>
    %c157 = arith.constant 157 : index
    %971 = memref.load %arg3[%c157] : memref<300xf32, #tpu.memory_space<smem>>
    %972 = vector.broadcast %971 : f32 to vector<2x7x11xf32>
    %973 = arith.mulf %962, %972 : vector<2x7x11xf32>
    %974 = arith.addf %953, %973 : vector<2x7x11xf32>
    %c217 = arith.constant 217 : index
    %975 = memref.load %arg3[%c217] : memref<300xf32, #tpu.memory_space<smem>>
    %976 = vector.broadcast %975 : f32 to vector<2x7x11xf32>
    %977 = arith.mulf %962, %976 : vector<2x7x11xf32>
    %978 = arith.addf %957, %977 : vector<2x7x11xf32>
    %c277 = arith.constant 277 : index
    %979 = memref.load %arg3[%c277] : memref<300xf32, #tpu.memory_space<smem>>
    %980 = vector.broadcast %979 : f32 to vector<2x7x11xf32>
    %981 = arith.mulf %962, %980 : vector<2x7x11xf32>
    %982 = arith.addf %961, %981 : vector<2x7x11xf32>
    %983 = vector.extract_strided_slice %939 {offsets = [0, 1, 0], sizes = [2, 7, 11], strides = [1, 1, 1]} : vector<2x8x11xf32> to vector<2x7x11xf32>
    %c42 = arith.constant 42 : index
    %984 = memref.load %arg3[%c42] : memref<300xf32, #tpu.memory_space<smem>>
    %985 = vector.broadcast %984 : f32 to vector<2x7x11xf32>
    %986 = arith.mulf %983, %985 : vector<2x7x11xf32>
    %987 = arith.addf %966, %986 : vector<2x7x11xf32>
    %c102 = arith.constant 102 : index
    %988 = memref.load %arg3[%c102] : memref<300xf32, #tpu.memory_space<smem>>
    %989 = vector.broadcast %988 : f32 to vector<2x7x11xf32>
    %990 = arith.mulf %983, %989 : vector<2x7x11xf32>
    %991 = arith.addf %970, %990 : vector<2x7x11xf32>
    %c162 = arith.constant 162 : index
    %992 = memref.load %arg3[%c162] : memref<300xf32, #tpu.memory_space<smem>>
    %993 = vector.broadcast %992 : f32 to vector<2x7x11xf32>
    %994 = arith.mulf %983, %993 : vector<2x7x11xf32>
    %995 = arith.addf %974, %994 : vector<2x7x11xf32>
    %c222 = arith.constant 222 : index
    %996 = memref.load %arg3[%c222] : memref<300xf32, #tpu.memory_space<smem>>
    %997 = vector.broadcast %996 : f32 to vector<2x7x11xf32>
    %998 = arith.mulf %983, %997 : vector<2x7x11xf32>
    %999 = arith.addf %978, %998 : vector<2x7x11xf32>
    %c282 = arith.constant 282 : index
    %1000 = memref.load %arg3[%c282] : memref<300xf32, #tpu.memory_space<smem>>
    %1001 = vector.broadcast %1000 : f32 to vector<2x7x11xf32>
    %1002 = arith.mulf %983, %1001 : vector<2x7x11xf32>
    %1003 = arith.addf %982, %1002 : vector<2x7x11xf32>
    %1004 = vector.extract_strided_slice %781 {offsets = [0, 0, 3], sizes = [2, 8, 11], strides = [1, 1, 1]} : vector<2x8x16xf32> to vector<2x8x11xf32>
    %1005 = vector.extract_strided_slice %808 {offsets = [0, 0, 3], sizes = [2, 8, 11], strides = [1, 1, 1]} : vector<2x8x16xf32> to vector<2x8x11xf32>
    %1006 = vector.extract_strided_slice %1004 {offsets = [0, 0, 0], sizes = [2, 7, 11], strides = [1, 1, 1]} : vector<2x8x11xf32> to vector<2x7x11xf32>
    %c33 = arith.constant 33 : index
    %1007 = memref.load %arg3[%c33] : memref<300xf32, #tpu.memory_space<smem>>
    %1008 = vector.broadcast %1007 : f32 to vector<2x7x11xf32>
    %1009 = arith.mulf %1006, %1008 : vector<2x7x11xf32>
    %1010 = arith.addf %987, %1009 : vector<2x7x11xf32>
    %c93 = arith.constant 93 : index
    %1011 = memref.load %arg3[%c93] : memref<300xf32, #tpu.memory_space<smem>>
    %1012 = vector.broadcast %1011 : f32 to vector<2x7x11xf32>
    %1013 = arith.mulf %1006, %1012 : vector<2x7x11xf32>
    %1014 = arith.addf %991, %1013 : vector<2x7x11xf32>
    %c153 = arith.constant 153 : index
    %1015 = memref.load %arg3[%c153] : memref<300xf32, #tpu.memory_space<smem>>
    %1016 = vector.broadcast %1015 : f32 to vector<2x7x11xf32>
    %1017 = arith.mulf %1006, %1016 : vector<2x7x11xf32>
    %1018 = arith.addf %995, %1017 : vector<2x7x11xf32>
    %c213 = arith.constant 213 : index
    %1019 = memref.load %arg3[%c213] : memref<300xf32, #tpu.memory_space<smem>>
    %1020 = vector.broadcast %1019 : f32 to vector<2x7x11xf32>
    %1021 = arith.mulf %1006, %1020 : vector<2x7x11xf32>
    %1022 = arith.addf %999, %1021 : vector<2x7x11xf32>
    %c273 = arith.constant 273 : index
    %1023 = memref.load %arg3[%c273] : memref<300xf32, #tpu.memory_space<smem>>
    %1024 = vector.broadcast %1023 : f32 to vector<2x7x11xf32>
    %1025 = arith.mulf %1006, %1024 : vector<2x7x11xf32>
    %1026 = arith.addf %1003, %1025 : vector<2x7x11xf32>
    %1027 = vector.extract_strided_slice %1005 {offsets = [0, 0, 0], sizes = [2, 7, 11], strides = [1, 1, 1]} : vector<2x8x11xf32> to vector<2x7x11xf32>
    %c38 = arith.constant 38 : index
    %1028 = memref.load %arg3[%c38] : memref<300xf32, #tpu.memory_space<smem>>
    %1029 = vector.broadcast %1028 : f32 to vector<2x7x11xf32>
    %1030 = arith.mulf %1027, %1029 : vector<2x7x11xf32>
    %1031 = arith.addf %1010, %1030 : vector<2x7x11xf32>
    %c98 = arith.constant 98 : index
    %1032 = memref.load %arg3[%c98] : memref<300xf32, #tpu.memory_space<smem>>
    %1033 = vector.broadcast %1032 : f32 to vector<2x7x11xf32>
    %1034 = arith.mulf %1027, %1033 : vector<2x7x11xf32>
    %1035 = arith.addf %1014, %1034 : vector<2x7x11xf32>
    %c158 = arith.constant 158 : index
    %1036 = memref.load %arg3[%c158] : memref<300xf32, #tpu.memory_space<smem>>
    %1037 = vector.broadcast %1036 : f32 to vector<2x7x11xf32>
    %1038 = arith.mulf %1027, %1037 : vector<2x7x11xf32>
    %1039 = arith.addf %1018, %1038 : vector<2x7x11xf32>
    %c218 = arith.constant 218 : index
    %1040 = memref.load %arg3[%c218] : memref<300xf32, #tpu.memory_space<smem>>
    %1041 = vector.broadcast %1040 : f32 to vector<2x7x11xf32>
    %1042 = arith.mulf %1027, %1041 : vector<2x7x11xf32>
    %1043 = arith.addf %1022, %1042 : vector<2x7x11xf32>
    %c278 = arith.constant 278 : index
    %1044 = memref.load %arg3[%c278] : memref<300xf32, #tpu.memory_space<smem>>
    %1045 = vector.broadcast %1044 : f32 to vector<2x7x11xf32>
    %1046 = arith.mulf %1027, %1045 : vector<2x7x11xf32>
    %1047 = arith.addf %1026, %1046 : vector<2x7x11xf32>
    %1048 = vector.extract_strided_slice %1004 {offsets = [0, 1, 0], sizes = [2, 7, 11], strides = [1, 1, 1]} : vector<2x8x11xf32> to vector<2x7x11xf32>
    %c43 = arith.constant 43 : index
    %1049 = memref.load %arg3[%c43] : memref<300xf32, #tpu.memory_space<smem>>
    %1050 = vector.broadcast %1049 : f32 to vector<2x7x11xf32>
    %1051 = arith.mulf %1048, %1050 : vector<2x7x11xf32>
    %1052 = arith.addf %1031, %1051 : vector<2x7x11xf32>
    %c103 = arith.constant 103 : index
    %1053 = memref.load %arg3[%c103] : memref<300xf32, #tpu.memory_space<smem>>
    %1054 = vector.broadcast %1053 : f32 to vector<2x7x11xf32>
    %1055 = arith.mulf %1048, %1054 : vector<2x7x11xf32>
    %1056 = arith.addf %1035, %1055 : vector<2x7x11xf32>
    %c163 = arith.constant 163 : index
    %1057 = memref.load %arg3[%c163] : memref<300xf32, #tpu.memory_space<smem>>
    %1058 = vector.broadcast %1057 : f32 to vector<2x7x11xf32>
    %1059 = arith.mulf %1048, %1058 : vector<2x7x11xf32>
    %1060 = arith.addf %1039, %1059 : vector<2x7x11xf32>
    %c223 = arith.constant 223 : index
    %1061 = memref.load %arg3[%c223] : memref<300xf32, #tpu.memory_space<smem>>
    %1062 = vector.broadcast %1061 : f32 to vector<2x7x11xf32>
    %1063 = arith.mulf %1048, %1062 : vector<2x7x11xf32>
    %1064 = arith.addf %1043, %1063 : vector<2x7x11xf32>
    %c283 = arith.constant 283 : index
    %1065 = memref.load %arg3[%c283] : memref<300xf32, #tpu.memory_space<smem>>
    %1066 = vector.broadcast %1065 : f32 to vector<2x7x11xf32>
    %1067 = arith.mulf %1048, %1066 : vector<2x7x11xf32>
    %1068 = arith.addf %1047, %1067 : vector<2x7x11xf32>
    %1069 = vector.extract_strided_slice %781 {offsets = [0, 0, 4], sizes = [2, 8, 11], strides = [1, 1, 1]} : vector<2x8x16xf32> to vector<2x8x11xf32>
    %1070 = vector.extract_strided_slice %808 {offsets = [0, 0, 4], sizes = [2, 8, 11], strides = [1, 1, 1]} : vector<2x8x16xf32> to vector<2x8x11xf32>
    %1071 = vector.extract_strided_slice %1069 {offsets = [0, 0, 0], sizes = [2, 7, 11], strides = [1, 1, 1]} : vector<2x8x11xf32> to vector<2x7x11xf32>
    %c34 = arith.constant 34 : index
    %1072 = memref.load %arg3[%c34] : memref<300xf32, #tpu.memory_space<smem>>
    %1073 = vector.broadcast %1072 : f32 to vector<2x7x11xf32>
    %1074 = arith.mulf %1071, %1073 : vector<2x7x11xf32>
    %1075 = arith.addf %1052, %1074 : vector<2x7x11xf32>
    %c94 = arith.constant 94 : index
    %1076 = memref.load %arg3[%c94] : memref<300xf32, #tpu.memory_space<smem>>
    %1077 = vector.broadcast %1076 : f32 to vector<2x7x11xf32>
    %1078 = arith.mulf %1071, %1077 : vector<2x7x11xf32>
    %1079 = arith.addf %1056, %1078 : vector<2x7x11xf32>
    %c154 = arith.constant 154 : index
    %1080 = memref.load %arg3[%c154] : memref<300xf32, #tpu.memory_space<smem>>
    %1081 = vector.broadcast %1080 : f32 to vector<2x7x11xf32>
    %1082 = arith.mulf %1071, %1081 : vector<2x7x11xf32>
    %1083 = arith.addf %1060, %1082 : vector<2x7x11xf32>
    %c214 = arith.constant 214 : index
    %1084 = memref.load %arg3[%c214] : memref<300xf32, #tpu.memory_space<smem>>
    %1085 = vector.broadcast %1084 : f32 to vector<2x7x11xf32>
    %1086 = arith.mulf %1071, %1085 : vector<2x7x11xf32>
    %1087 = arith.addf %1064, %1086 : vector<2x7x11xf32>
    %c274 = arith.constant 274 : index
    %1088 = memref.load %arg3[%c274] : memref<300xf32, #tpu.memory_space<smem>>
    %1089 = vector.broadcast %1088 : f32 to vector<2x7x11xf32>
    %1090 = arith.mulf %1071, %1089 : vector<2x7x11xf32>
    %1091 = arith.addf %1068, %1090 : vector<2x7x11xf32>
    %1092 = vector.extract_strided_slice %1070 {offsets = [0, 0, 0], sizes = [2, 7, 11], strides = [1, 1, 1]} : vector<2x8x11xf32> to vector<2x7x11xf32>
    %c39 = arith.constant 39 : index
    %1093 = memref.load %arg3[%c39] : memref<300xf32, #tpu.memory_space<smem>>
    %1094 = vector.broadcast %1093 : f32 to vector<2x7x11xf32>
    %1095 = arith.mulf %1092, %1094 : vector<2x7x11xf32>
    %1096 = arith.addf %1075, %1095 : vector<2x7x11xf32>
    %c99 = arith.constant 99 : index
    %1097 = memref.load %arg3[%c99] : memref<300xf32, #tpu.memory_space<smem>>
    %1098 = vector.broadcast %1097 : f32 to vector<2x7x11xf32>
    %1099 = arith.mulf %1092, %1098 : vector<2x7x11xf32>
    %1100 = arith.addf %1079, %1099 : vector<2x7x11xf32>
    %c159 = arith.constant 159 : index
    %1101 = memref.load %arg3[%c159] : memref<300xf32, #tpu.memory_space<smem>>
    %1102 = vector.broadcast %1101 : f32 to vector<2x7x11xf32>
    %1103 = arith.mulf %1092, %1102 : vector<2x7x11xf32>
    %1104 = arith.addf %1083, %1103 : vector<2x7x11xf32>
    %c219 = arith.constant 219 : index
    %1105 = memref.load %arg3[%c219] : memref<300xf32, #tpu.memory_space<smem>>
    %1106 = vector.broadcast %1105 : f32 to vector<2x7x11xf32>
    %1107 = arith.mulf %1092, %1106 : vector<2x7x11xf32>
    %1108 = arith.addf %1087, %1107 : vector<2x7x11xf32>
    %c279 = arith.constant 279 : index
    %1109 = memref.load %arg3[%c279] : memref<300xf32, #tpu.memory_space<smem>>
    %1110 = vector.broadcast %1109 : f32 to vector<2x7x11xf32>
    %1111 = arith.mulf %1092, %1110 : vector<2x7x11xf32>
    %1112 = arith.addf %1091, %1111 : vector<2x7x11xf32>
    %1113 = vector.extract_strided_slice %1069 {offsets = [0, 1, 0], sizes = [2, 7, 11], strides = [1, 1, 1]} : vector<2x8x11xf32> to vector<2x7x11xf32>
    %c44 = arith.constant 44 : index
    %1114 = memref.load %arg3[%c44] : memref<300xf32, #tpu.memory_space<smem>>
    %1115 = vector.broadcast %1114 : f32 to vector<2x7x11xf32>
    %1116 = arith.mulf %1113, %1115 : vector<2x7x11xf32>
    %1117 = arith.addf %1096, %1116 : vector<2x7x11xf32>
    %c104 = arith.constant 104 : index
    %1118 = memref.load %arg3[%c104] : memref<300xf32, #tpu.memory_space<smem>>
    %1119 = vector.broadcast %1118 : f32 to vector<2x7x11xf32>
    %1120 = arith.mulf %1113, %1119 : vector<2x7x11xf32>
    %1121 = arith.addf %1100, %1120 : vector<2x7x11xf32>
    %c164 = arith.constant 164 : index
    %1122 = memref.load %arg3[%c164] : memref<300xf32, #tpu.memory_space<smem>>
    %1123 = vector.broadcast %1122 : f32 to vector<2x7x11xf32>
    %1124 = arith.mulf %1113, %1123 : vector<2x7x11xf32>
    %1125 = arith.addf %1104, %1124 : vector<2x7x11xf32>
    %c224 = arith.constant 224 : index
    %1126 = memref.load %arg3[%c224] : memref<300xf32, #tpu.memory_space<smem>>
    %1127 = vector.broadcast %1126 : f32 to vector<2x7x11xf32>
    %1128 = arith.mulf %1113, %1127 : vector<2x7x11xf32>
    %1129 = arith.addf %1108, %1128 : vector<2x7x11xf32>
    %c284 = arith.constant 284 : index
    %1130 = memref.load %arg3[%c284] : memref<300xf32, #tpu.memory_space<smem>>
    %1131 = vector.broadcast %1130 : f32 to vector<2x7x11xf32>
    %1132 = arith.mulf %1113, %1131 : vector<2x7x11xf32>
    %1133 = arith.addf %1112, %1132 : vector<2x7x11xf32>
    %1134 = vector.extract_strided_slice %0 {offsets = [0, 0, 0, 0], sizes = [2, 1, 8, 16], strides = [1, 1, 1, 1]} : vector<2x4x8x16xf32> to vector<2x1x8x16xf32>
    %1135 = vector.shape_cast %1134 : vector<2x1x8x16xf32> to vector<2x8x16xf32>
    %c3_38 = arith.constant 3 : index
    %1136 = memref.load %arg1[%c3_38] : memref<16xf32, #tpu.memory_space<smem>>
    %1137 = vector.broadcast %1136 : f32 to vector<2x8x16xf32>
    %1138 = arith.mulf %1135, %1137 : vector<2x8x16xf32>
    %1139 = vector.extract_strided_slice %0 {offsets = [0, 1, 0, 0], sizes = [2, 1, 8, 16], strides = [1, 1, 1, 1]} : vector<2x4x8x16xf32> to vector<2x1x8x16xf32>
    %1140 = vector.shape_cast %1139 : vector<2x1x8x16xf32> to vector<2x8x16xf32>
    %c7_39 = arith.constant 7 : index
    %1141 = memref.load %arg1[%c7_39] : memref<16xf32, #tpu.memory_space<smem>>
    %1142 = vector.broadcast %1141 : f32 to vector<2x8x16xf32>
    %1143 = arith.mulf %1140, %1142 : vector<2x8x16xf32>
    %1144 = arith.addf %1138, %1143 : vector<2x8x16xf32>
    %1145 = vector.extract_strided_slice %0 {offsets = [0, 2, 0, 0], sizes = [2, 1, 8, 16], strides = [1, 1, 1, 1]} : vector<2x4x8x16xf32> to vector<2x1x8x16xf32>
    %1146 = vector.shape_cast %1145 : vector<2x1x8x16xf32> to vector<2x8x16xf32>
    %c11_40 = arith.constant 11 : index
    %1147 = memref.load %arg1[%c11_40] : memref<16xf32, #tpu.memory_space<smem>>
    %1148 = vector.broadcast %1147 : f32 to vector<2x8x16xf32>
    %1149 = arith.mulf %1146, %1148 : vector<2x8x16xf32>
    %1150 = arith.addf %1144, %1149 : vector<2x8x16xf32>
    %1151 = vector.extract_strided_slice %0 {offsets = [0, 3, 0, 0], sizes = [2, 1, 8, 16], strides = [1, 1, 1, 1]} : vector<2x4x8x16xf32> to vector<2x1x8x16xf32>
    %1152 = vector.shape_cast %1151 : vector<2x1x8x16xf32> to vector<2x8x16xf32>
    %c15_41 = arith.constant 15 : index
    %1153 = memref.load %arg1[%c15_41] : memref<16xf32, #tpu.memory_space<smem>>
    %1154 = vector.broadcast %1153 : f32 to vector<2x8x16xf32>
    %1155 = arith.mulf %1152, %1154 : vector<2x8x16xf32>
    %1156 = arith.addf %1150, %1155 : vector<2x8x16xf32>
    %c3_42 = arith.constant 3 : index
    %1157 = memref.load %arg2[%c3_42] : memref<4xf32, #tpu.memory_space<smem>>
    %1158 = vector.broadcast %1157 : f32 to vector<2x8x16xf32>
    %1159 = arith.addf %1156, %1158 : vector<2x8x16xf32>
    %1160 = math.tanh %1159 : vector<2x8x16xf32>
    %1161 = vector.extract_strided_slice %1 {offsets = [0, 0, 0, 0], sizes = [2, 1, 8, 16], strides = [1, 1, 1, 1]} : vector<2x4x8x16xf32> to vector<2x1x8x16xf32>
    %1162 = vector.shape_cast %1161 : vector<2x1x8x16xf32> to vector<2x8x16xf32>
    %c3_43 = arith.constant 3 : index
    %1163 = memref.load %arg1[%c3_43] : memref<16xf32, #tpu.memory_space<smem>>
    %1164 = vector.broadcast %1163 : f32 to vector<2x8x16xf32>
    %1165 = arith.mulf %1162, %1164 : vector<2x8x16xf32>
    %1166 = vector.extract_strided_slice %1 {offsets = [0, 1, 0, 0], sizes = [2, 1, 8, 16], strides = [1, 1, 1, 1]} : vector<2x4x8x16xf32> to vector<2x1x8x16xf32>
    %1167 = vector.shape_cast %1166 : vector<2x1x8x16xf32> to vector<2x8x16xf32>
    %c7_44 = arith.constant 7 : index
    %1168 = memref.load %arg1[%c7_44] : memref<16xf32, #tpu.memory_space<smem>>
    %1169 = vector.broadcast %1168 : f32 to vector<2x8x16xf32>
    %1170 = arith.mulf %1167, %1169 : vector<2x8x16xf32>
    %1171 = arith.addf %1165, %1170 : vector<2x8x16xf32>
    %1172 = vector.extract_strided_slice %1 {offsets = [0, 2, 0, 0], sizes = [2, 1, 8, 16], strides = [1, 1, 1, 1]} : vector<2x4x8x16xf32> to vector<2x1x8x16xf32>
    %1173 = vector.shape_cast %1172 : vector<2x1x8x16xf32> to vector<2x8x16xf32>
    %c11_45 = arith.constant 11 : index
    %1174 = memref.load %arg1[%c11_45] : memref<16xf32, #tpu.memory_space<smem>>
    %1175 = vector.broadcast %1174 : f32 to vector<2x8x16xf32>
    %1176 = arith.mulf %1173, %1175 : vector<2x8x16xf32>
    %1177 = arith.addf %1171, %1176 : vector<2x8x16xf32>
    %1178 = vector.extract_strided_slice %1 {offsets = [0, 3, 0, 0], sizes = [2, 1, 8, 16], strides = [1, 1, 1, 1]} : vector<2x4x8x16xf32> to vector<2x1x8x16xf32>
    %1179 = vector.shape_cast %1178 : vector<2x1x8x16xf32> to vector<2x8x16xf32>
    %c15_46 = arith.constant 15 : index
    %1180 = memref.load %arg1[%c15_46] : memref<16xf32, #tpu.memory_space<smem>>
    %1181 = vector.broadcast %1180 : f32 to vector<2x8x16xf32>
    %1182 = arith.mulf %1179, %1181 : vector<2x8x16xf32>
    %1183 = arith.addf %1177, %1182 : vector<2x8x16xf32>
    %c3_47 = arith.constant 3 : index
    %1184 = memref.load %arg2[%c3_47] : memref<4xf32, #tpu.memory_space<smem>>
    %1185 = vector.broadcast %1184 : f32 to vector<2x8x16xf32>
    %1186 = arith.addf %1183, %1185 : vector<2x8x16xf32>
    %1187 = math.tanh %1186 : vector<2x8x16xf32>
    %1188 = vector.extract_strided_slice %1160 {offsets = [0, 0, 0], sizes = [2, 8, 11], strides = [1, 1, 1]} : vector<2x8x16xf32> to vector<2x8x11xf32>
    %1189 = vector.extract_strided_slice %1187 {offsets = [0, 0, 0], sizes = [2, 8, 11], strides = [1, 1, 1]} : vector<2x8x16xf32> to vector<2x8x11xf32>
    %1190 = vector.extract_strided_slice %1188 {offsets = [0, 0, 0], sizes = [2, 7, 11], strides = [1, 1, 1]} : vector<2x8x11xf32> to vector<2x7x11xf32>
    %c45 = arith.constant 45 : index
    %1191 = memref.load %arg3[%c45] : memref<300xf32, #tpu.memory_space<smem>>
    %1192 = vector.broadcast %1191 : f32 to vector<2x7x11xf32>
    %1193 = arith.mulf %1190, %1192 : vector<2x7x11xf32>
    %1194 = arith.addf %1117, %1193 : vector<2x7x11xf32>
    %c105 = arith.constant 105 : index
    %1195 = memref.load %arg3[%c105] : memref<300xf32, #tpu.memory_space<smem>>
    %1196 = vector.broadcast %1195 : f32 to vector<2x7x11xf32>
    %1197 = arith.mulf %1190, %1196 : vector<2x7x11xf32>
    %1198 = arith.addf %1121, %1197 : vector<2x7x11xf32>
    %c165 = arith.constant 165 : index
    %1199 = memref.load %arg3[%c165] : memref<300xf32, #tpu.memory_space<smem>>
    %1200 = vector.broadcast %1199 : f32 to vector<2x7x11xf32>
    %1201 = arith.mulf %1190, %1200 : vector<2x7x11xf32>
    %1202 = arith.addf %1125, %1201 : vector<2x7x11xf32>
    %c225 = arith.constant 225 : index
    %1203 = memref.load %arg3[%c225] : memref<300xf32, #tpu.memory_space<smem>>
    %1204 = vector.broadcast %1203 : f32 to vector<2x7x11xf32>
    %1205 = arith.mulf %1190, %1204 : vector<2x7x11xf32>
    %1206 = arith.addf %1129, %1205 : vector<2x7x11xf32>
    %c285 = arith.constant 285 : index
    %1207 = memref.load %arg3[%c285] : memref<300xf32, #tpu.memory_space<smem>>
    %1208 = vector.broadcast %1207 : f32 to vector<2x7x11xf32>
    %1209 = arith.mulf %1190, %1208 : vector<2x7x11xf32>
    %1210 = arith.addf %1133, %1209 : vector<2x7x11xf32>
    %1211 = vector.extract_strided_slice %1189 {offsets = [0, 0, 0], sizes = [2, 7, 11], strides = [1, 1, 1]} : vector<2x8x11xf32> to vector<2x7x11xf32>
    %c50 = arith.constant 50 : index
    %1212 = memref.load %arg3[%c50] : memref<300xf32, #tpu.memory_space<smem>>
    %1213 = vector.broadcast %1212 : f32 to vector<2x7x11xf32>
    %1214 = arith.mulf %1211, %1213 : vector<2x7x11xf32>
    %1215 = arith.addf %1194, %1214 : vector<2x7x11xf32>
    %c110 = arith.constant 110 : index
    %1216 = memref.load %arg3[%c110] : memref<300xf32, #tpu.memory_space<smem>>
    %1217 = vector.broadcast %1216 : f32 to vector<2x7x11xf32>
    %1218 = arith.mulf %1211, %1217 : vector<2x7x11xf32>
    %1219 = arith.addf %1198, %1218 : vector<2x7x11xf32>
    %c170 = arith.constant 170 : index
    %1220 = memref.load %arg3[%c170] : memref<300xf32, #tpu.memory_space<smem>>
    %1221 = vector.broadcast %1220 : f32 to vector<2x7x11xf32>
    %1222 = arith.mulf %1211, %1221 : vector<2x7x11xf32>
    %1223 = arith.addf %1202, %1222 : vector<2x7x11xf32>
    %c230 = arith.constant 230 : index
    %1224 = memref.load %arg3[%c230] : memref<300xf32, #tpu.memory_space<smem>>
    %1225 = vector.broadcast %1224 : f32 to vector<2x7x11xf32>
    %1226 = arith.mulf %1211, %1225 : vector<2x7x11xf32>
    %1227 = arith.addf %1206, %1226 : vector<2x7x11xf32>
    %c290 = arith.constant 290 : index
    %1228 = memref.load %arg3[%c290] : memref<300xf32, #tpu.memory_space<smem>>
    %1229 = vector.broadcast %1228 : f32 to vector<2x7x11xf32>
    %1230 = arith.mulf %1211, %1229 : vector<2x7x11xf32>
    %1231 = arith.addf %1210, %1230 : vector<2x7x11xf32>
    %1232 = vector.extract_strided_slice %1188 {offsets = [0, 1, 0], sizes = [2, 7, 11], strides = [1, 1, 1]} : vector<2x8x11xf32> to vector<2x7x11xf32>
    %c55 = arith.constant 55 : index
    %1233 = memref.load %arg3[%c55] : memref<300xf32, #tpu.memory_space<smem>>
    %1234 = vector.broadcast %1233 : f32 to vector<2x7x11xf32>
    %1235 = arith.mulf %1232, %1234 : vector<2x7x11xf32>
    %1236 = arith.addf %1215, %1235 : vector<2x7x11xf32>
    %c115 = arith.constant 115 : index
    %1237 = memref.load %arg3[%c115] : memref<300xf32, #tpu.memory_space<smem>>
    %1238 = vector.broadcast %1237 : f32 to vector<2x7x11xf32>
    %1239 = arith.mulf %1232, %1238 : vector<2x7x11xf32>
    %1240 = arith.addf %1219, %1239 : vector<2x7x11xf32>
    %c175 = arith.constant 175 : index
    %1241 = memref.load %arg3[%c175] : memref<300xf32, #tpu.memory_space<smem>>
    %1242 = vector.broadcast %1241 : f32 to vector<2x7x11xf32>
    %1243 = arith.mulf %1232, %1242 : vector<2x7x11xf32>
    %1244 = arith.addf %1223, %1243 : vector<2x7x11xf32>
    %c235 = arith.constant 235 : index
    %1245 = memref.load %arg3[%c235] : memref<300xf32, #tpu.memory_space<smem>>
    %1246 = vector.broadcast %1245 : f32 to vector<2x7x11xf32>
    %1247 = arith.mulf %1232, %1246 : vector<2x7x11xf32>
    %1248 = arith.addf %1227, %1247 : vector<2x7x11xf32>
    %c295 = arith.constant 295 : index
    %1249 = memref.load %arg3[%c295] : memref<300xf32, #tpu.memory_space<smem>>
    %1250 = vector.broadcast %1249 : f32 to vector<2x7x11xf32>
    %1251 = arith.mulf %1232, %1250 : vector<2x7x11xf32>
    %1252 = arith.addf %1231, %1251 : vector<2x7x11xf32>
    %1253 = vector.extract_strided_slice %1160 {offsets = [0, 0, 1], sizes = [2, 8, 11], strides = [1, 1, 1]} : vector<2x8x16xf32> to vector<2x8x11xf32>
    %1254 = vector.extract_strided_slice %1187 {offsets = [0, 0, 1], sizes = [2, 8, 11], strides = [1, 1, 1]} : vector<2x8x16xf32> to vector<2x8x11xf32>
    %1255 = vector.extract_strided_slice %1253 {offsets = [0, 0, 0], sizes = [2, 7, 11], strides = [1, 1, 1]} : vector<2x8x11xf32> to vector<2x7x11xf32>
    %c46 = arith.constant 46 : index
    %1256 = memref.load %arg3[%c46] : memref<300xf32, #tpu.memory_space<smem>>
    %1257 = vector.broadcast %1256 : f32 to vector<2x7x11xf32>
    %1258 = arith.mulf %1255, %1257 : vector<2x7x11xf32>
    %1259 = arith.addf %1236, %1258 : vector<2x7x11xf32>
    %c106 = arith.constant 106 : index
    %1260 = memref.load %arg3[%c106] : memref<300xf32, #tpu.memory_space<smem>>
    %1261 = vector.broadcast %1260 : f32 to vector<2x7x11xf32>
    %1262 = arith.mulf %1255, %1261 : vector<2x7x11xf32>
    %1263 = arith.addf %1240, %1262 : vector<2x7x11xf32>
    %c166 = arith.constant 166 : index
    %1264 = memref.load %arg3[%c166] : memref<300xf32, #tpu.memory_space<smem>>
    %1265 = vector.broadcast %1264 : f32 to vector<2x7x11xf32>
    %1266 = arith.mulf %1255, %1265 : vector<2x7x11xf32>
    %1267 = arith.addf %1244, %1266 : vector<2x7x11xf32>
    %c226 = arith.constant 226 : index
    %1268 = memref.load %arg3[%c226] : memref<300xf32, #tpu.memory_space<smem>>
    %1269 = vector.broadcast %1268 : f32 to vector<2x7x11xf32>
    %1270 = arith.mulf %1255, %1269 : vector<2x7x11xf32>
    %1271 = arith.addf %1248, %1270 : vector<2x7x11xf32>
    %c286 = arith.constant 286 : index
    %1272 = memref.load %arg3[%c286] : memref<300xf32, #tpu.memory_space<smem>>
    %1273 = vector.broadcast %1272 : f32 to vector<2x7x11xf32>
    %1274 = arith.mulf %1255, %1273 : vector<2x7x11xf32>
    %1275 = arith.addf %1252, %1274 : vector<2x7x11xf32>
    %1276 = vector.extract_strided_slice %1254 {offsets = [0, 0, 0], sizes = [2, 7, 11], strides = [1, 1, 1]} : vector<2x8x11xf32> to vector<2x7x11xf32>
    %c51 = arith.constant 51 : index
    %1277 = memref.load %arg3[%c51] : memref<300xf32, #tpu.memory_space<smem>>
    %1278 = vector.broadcast %1277 : f32 to vector<2x7x11xf32>
    %1279 = arith.mulf %1276, %1278 : vector<2x7x11xf32>
    %1280 = arith.addf %1259, %1279 : vector<2x7x11xf32>
    %c111 = arith.constant 111 : index
    %1281 = memref.load %arg3[%c111] : memref<300xf32, #tpu.memory_space<smem>>
    %1282 = vector.broadcast %1281 : f32 to vector<2x7x11xf32>
    %1283 = arith.mulf %1276, %1282 : vector<2x7x11xf32>
    %1284 = arith.addf %1263, %1283 : vector<2x7x11xf32>
    %c171 = arith.constant 171 : index
    %1285 = memref.load %arg3[%c171] : memref<300xf32, #tpu.memory_space<smem>>
    %1286 = vector.broadcast %1285 : f32 to vector<2x7x11xf32>
    %1287 = arith.mulf %1276, %1286 : vector<2x7x11xf32>
    %1288 = arith.addf %1267, %1287 : vector<2x7x11xf32>
    %c231 = arith.constant 231 : index
    %1289 = memref.load %arg3[%c231] : memref<300xf32, #tpu.memory_space<smem>>
    %1290 = vector.broadcast %1289 : f32 to vector<2x7x11xf32>
    %1291 = arith.mulf %1276, %1290 : vector<2x7x11xf32>
    %1292 = arith.addf %1271, %1291 : vector<2x7x11xf32>
    %c291 = arith.constant 291 : index
    %1293 = memref.load %arg3[%c291] : memref<300xf32, #tpu.memory_space<smem>>
    %1294 = vector.broadcast %1293 : f32 to vector<2x7x11xf32>
    %1295 = arith.mulf %1276, %1294 : vector<2x7x11xf32>
    %1296 = arith.addf %1275, %1295 : vector<2x7x11xf32>
    %1297 = vector.extract_strided_slice %1253 {offsets = [0, 1, 0], sizes = [2, 7, 11], strides = [1, 1, 1]} : vector<2x8x11xf32> to vector<2x7x11xf32>
    %c56 = arith.constant 56 : index
    %1298 = memref.load %arg3[%c56] : memref<300xf32, #tpu.memory_space<smem>>
    %1299 = vector.broadcast %1298 : f32 to vector<2x7x11xf32>
    %1300 = arith.mulf %1297, %1299 : vector<2x7x11xf32>
    %1301 = arith.addf %1280, %1300 : vector<2x7x11xf32>
    %c116 = arith.constant 116 : index
    %1302 = memref.load %arg3[%c116] : memref<300xf32, #tpu.memory_space<smem>>
    %1303 = vector.broadcast %1302 : f32 to vector<2x7x11xf32>
    %1304 = arith.mulf %1297, %1303 : vector<2x7x11xf32>
    %1305 = arith.addf %1284, %1304 : vector<2x7x11xf32>
    %c176 = arith.constant 176 : index
    %1306 = memref.load %arg3[%c176] : memref<300xf32, #tpu.memory_space<smem>>
    %1307 = vector.broadcast %1306 : f32 to vector<2x7x11xf32>
    %1308 = arith.mulf %1297, %1307 : vector<2x7x11xf32>
    %1309 = arith.addf %1288, %1308 : vector<2x7x11xf32>
    %c236 = arith.constant 236 : index
    %1310 = memref.load %arg3[%c236] : memref<300xf32, #tpu.memory_space<smem>>
    %1311 = vector.broadcast %1310 : f32 to vector<2x7x11xf32>
    %1312 = arith.mulf %1297, %1311 : vector<2x7x11xf32>
    %1313 = arith.addf %1292, %1312 : vector<2x7x11xf32>
    %c296 = arith.constant 296 : index
    %1314 = memref.load %arg3[%c296] : memref<300xf32, #tpu.memory_space<smem>>
    %1315 = vector.broadcast %1314 : f32 to vector<2x7x11xf32>
    %1316 = arith.mulf %1297, %1315 : vector<2x7x11xf32>
    %1317 = arith.addf %1296, %1316 : vector<2x7x11xf32>
    %1318 = vector.extract_strided_slice %1160 {offsets = [0, 0, 2], sizes = [2, 8, 11], strides = [1, 1, 1]} : vector<2x8x16xf32> to vector<2x8x11xf32>
    %1319 = vector.extract_strided_slice %1187 {offsets = [0, 0, 2], sizes = [2, 8, 11], strides = [1, 1, 1]} : vector<2x8x16xf32> to vector<2x8x11xf32>
    %1320 = vector.extract_strided_slice %1318 {offsets = [0, 0, 0], sizes = [2, 7, 11], strides = [1, 1, 1]} : vector<2x8x11xf32> to vector<2x7x11xf32>
    %c47 = arith.constant 47 : index
    %1321 = memref.load %arg3[%c47] : memref<300xf32, #tpu.memory_space<smem>>
    %1322 = vector.broadcast %1321 : f32 to vector<2x7x11xf32>
    %1323 = arith.mulf %1320, %1322 : vector<2x7x11xf32>
    %1324 = arith.addf %1301, %1323 : vector<2x7x11xf32>
    %c107 = arith.constant 107 : index
    %1325 = memref.load %arg3[%c107] : memref<300xf32, #tpu.memory_space<smem>>
    %1326 = vector.broadcast %1325 : f32 to vector<2x7x11xf32>
    %1327 = arith.mulf %1320, %1326 : vector<2x7x11xf32>
    %1328 = arith.addf %1305, %1327 : vector<2x7x11xf32>
    %c167 = arith.constant 167 : index
    %1329 = memref.load %arg3[%c167] : memref<300xf32, #tpu.memory_space<smem>>
    %1330 = vector.broadcast %1329 : f32 to vector<2x7x11xf32>
    %1331 = arith.mulf %1320, %1330 : vector<2x7x11xf32>
    %1332 = arith.addf %1309, %1331 : vector<2x7x11xf32>
    %c227 = arith.constant 227 : index
    %1333 = memref.load %arg3[%c227] : memref<300xf32, #tpu.memory_space<smem>>
    %1334 = vector.broadcast %1333 : f32 to vector<2x7x11xf32>
    %1335 = arith.mulf %1320, %1334 : vector<2x7x11xf32>
    %1336 = arith.addf %1313, %1335 : vector<2x7x11xf32>
    %c287 = arith.constant 287 : index
    %1337 = memref.load %arg3[%c287] : memref<300xf32, #tpu.memory_space<smem>>
    %1338 = vector.broadcast %1337 : f32 to vector<2x7x11xf32>
    %1339 = arith.mulf %1320, %1338 : vector<2x7x11xf32>
    %1340 = arith.addf %1317, %1339 : vector<2x7x11xf32>
    %1341 = vector.extract_strided_slice %1319 {offsets = [0, 0, 0], sizes = [2, 7, 11], strides = [1, 1, 1]} : vector<2x8x11xf32> to vector<2x7x11xf32>
    %c52 = arith.constant 52 : index
    %1342 = memref.load %arg3[%c52] : memref<300xf32, #tpu.memory_space<smem>>
    %1343 = vector.broadcast %1342 : f32 to vector<2x7x11xf32>
    %1344 = arith.mulf %1341, %1343 : vector<2x7x11xf32>
    %1345 = arith.addf %1324, %1344 : vector<2x7x11xf32>
    %c112 = arith.constant 112 : index
    %1346 = memref.load %arg3[%c112] : memref<300xf32, #tpu.memory_space<smem>>
    %1347 = vector.broadcast %1346 : f32 to vector<2x7x11xf32>
    %1348 = arith.mulf %1341, %1347 : vector<2x7x11xf32>
    %1349 = arith.addf %1328, %1348 : vector<2x7x11xf32>
    %c172 = arith.constant 172 : index
    %1350 = memref.load %arg3[%c172] : memref<300xf32, #tpu.memory_space<smem>>
    %1351 = vector.broadcast %1350 : f32 to vector<2x7x11xf32>
    %1352 = arith.mulf %1341, %1351 : vector<2x7x11xf32>
    %1353 = arith.addf %1332, %1352 : vector<2x7x11xf32>
    %c232 = arith.constant 232 : index
    %1354 = memref.load %arg3[%c232] : memref<300xf32, #tpu.memory_space<smem>>
    %1355 = vector.broadcast %1354 : f32 to vector<2x7x11xf32>
    %1356 = arith.mulf %1341, %1355 : vector<2x7x11xf32>
    %1357 = arith.addf %1336, %1356 : vector<2x7x11xf32>
    %c292 = arith.constant 292 : index
    %1358 = memref.load %arg3[%c292] : memref<300xf32, #tpu.memory_space<smem>>
    %1359 = vector.broadcast %1358 : f32 to vector<2x7x11xf32>
    %1360 = arith.mulf %1341, %1359 : vector<2x7x11xf32>
    %1361 = arith.addf %1340, %1360 : vector<2x7x11xf32>
    %1362 = vector.extract_strided_slice %1318 {offsets = [0, 1, 0], sizes = [2, 7, 11], strides = [1, 1, 1]} : vector<2x8x11xf32> to vector<2x7x11xf32>
    %c57 = arith.constant 57 : index
    %1363 = memref.load %arg3[%c57] : memref<300xf32, #tpu.memory_space<smem>>
    %1364 = vector.broadcast %1363 : f32 to vector<2x7x11xf32>
    %1365 = arith.mulf %1362, %1364 : vector<2x7x11xf32>
    %1366 = arith.addf %1345, %1365 : vector<2x7x11xf32>
    %c117 = arith.constant 117 : index
    %1367 = memref.load %arg3[%c117] : memref<300xf32, #tpu.memory_space<smem>>
    %1368 = vector.broadcast %1367 : f32 to vector<2x7x11xf32>
    %1369 = arith.mulf %1362, %1368 : vector<2x7x11xf32>
    %1370 = arith.addf %1349, %1369 : vector<2x7x11xf32>
    %c177 = arith.constant 177 : index
    %1371 = memref.load %arg3[%c177] : memref<300xf32, #tpu.memory_space<smem>>
    %1372 = vector.broadcast %1371 : f32 to vector<2x7x11xf32>
    %1373 = arith.mulf %1362, %1372 : vector<2x7x11xf32>
    %1374 = arith.addf %1353, %1373 : vector<2x7x11xf32>
    %c237 = arith.constant 237 : index
    %1375 = memref.load %arg3[%c237] : memref<300xf32, #tpu.memory_space<smem>>
    %1376 = vector.broadcast %1375 : f32 to vector<2x7x11xf32>
    %1377 = arith.mulf %1362, %1376 : vector<2x7x11xf32>
    %1378 = arith.addf %1357, %1377 : vector<2x7x11xf32>
    %c297 = arith.constant 297 : index
    %1379 = memref.load %arg3[%c297] : memref<300xf32, #tpu.memory_space<smem>>
    %1380 = vector.broadcast %1379 : f32 to vector<2x7x11xf32>
    %1381 = arith.mulf %1362, %1380 : vector<2x7x11xf32>
    %1382 = arith.addf %1361, %1381 : vector<2x7x11xf32>
    %1383 = vector.extract_strided_slice %1160 {offsets = [0, 0, 3], sizes = [2, 8, 11], strides = [1, 1, 1]} : vector<2x8x16xf32> to vector<2x8x11xf32>
    %1384 = vector.extract_strided_slice %1187 {offsets = [0, 0, 3], sizes = [2, 8, 11], strides = [1, 1, 1]} : vector<2x8x16xf32> to vector<2x8x11xf32>
    %1385 = vector.extract_strided_slice %1383 {offsets = [0, 0, 0], sizes = [2, 7, 11], strides = [1, 1, 1]} : vector<2x8x11xf32> to vector<2x7x11xf32>
    %c48 = arith.constant 48 : index
    %1386 = memref.load %arg3[%c48] : memref<300xf32, #tpu.memory_space<smem>>
    %1387 = vector.broadcast %1386 : f32 to vector<2x7x11xf32>
    %1388 = arith.mulf %1385, %1387 : vector<2x7x11xf32>
    %1389 = arith.addf %1366, %1388 : vector<2x7x11xf32>
    %c108 = arith.constant 108 : index
    %1390 = memref.load %arg3[%c108] : memref<300xf32, #tpu.memory_space<smem>>
    %1391 = vector.broadcast %1390 : f32 to vector<2x7x11xf32>
    %1392 = arith.mulf %1385, %1391 : vector<2x7x11xf32>
    %1393 = arith.addf %1370, %1392 : vector<2x7x11xf32>
    %c168 = arith.constant 168 : index
    %1394 = memref.load %arg3[%c168] : memref<300xf32, #tpu.memory_space<smem>>
    %1395 = vector.broadcast %1394 : f32 to vector<2x7x11xf32>
    %1396 = arith.mulf %1385, %1395 : vector<2x7x11xf32>
    %1397 = arith.addf %1374, %1396 : vector<2x7x11xf32>
    %c228 = arith.constant 228 : index
    %1398 = memref.load %arg3[%c228] : memref<300xf32, #tpu.memory_space<smem>>
    %1399 = vector.broadcast %1398 : f32 to vector<2x7x11xf32>
    %1400 = arith.mulf %1385, %1399 : vector<2x7x11xf32>
    %1401 = arith.addf %1378, %1400 : vector<2x7x11xf32>
    %c288 = arith.constant 288 : index
    %1402 = memref.load %arg3[%c288] : memref<300xf32, #tpu.memory_space<smem>>
    %1403 = vector.broadcast %1402 : f32 to vector<2x7x11xf32>
    %1404 = arith.mulf %1385, %1403 : vector<2x7x11xf32>
    %1405 = arith.addf %1382, %1404 : vector<2x7x11xf32>
    %1406 = vector.extract_strided_slice %1384 {offsets = [0, 0, 0], sizes = [2, 7, 11], strides = [1, 1, 1]} : vector<2x8x11xf32> to vector<2x7x11xf32>
    %c53 = arith.constant 53 : index
    %1407 = memref.load %arg3[%c53] : memref<300xf32, #tpu.memory_space<smem>>
    %1408 = vector.broadcast %1407 : f32 to vector<2x7x11xf32>
    %1409 = arith.mulf %1406, %1408 : vector<2x7x11xf32>
    %1410 = arith.addf %1389, %1409 : vector<2x7x11xf32>
    %c113 = arith.constant 113 : index
    %1411 = memref.load %arg3[%c113] : memref<300xf32, #tpu.memory_space<smem>>
    %1412 = vector.broadcast %1411 : f32 to vector<2x7x11xf32>
    %1413 = arith.mulf %1406, %1412 : vector<2x7x11xf32>
    %1414 = arith.addf %1393, %1413 : vector<2x7x11xf32>
    %c173 = arith.constant 173 : index
    %1415 = memref.load %arg3[%c173] : memref<300xf32, #tpu.memory_space<smem>>
    %1416 = vector.broadcast %1415 : f32 to vector<2x7x11xf32>
    %1417 = arith.mulf %1406, %1416 : vector<2x7x11xf32>
    %1418 = arith.addf %1397, %1417 : vector<2x7x11xf32>
    %c233 = arith.constant 233 : index
    %1419 = memref.load %arg3[%c233] : memref<300xf32, #tpu.memory_space<smem>>
    %1420 = vector.broadcast %1419 : f32 to vector<2x7x11xf32>
    %1421 = arith.mulf %1406, %1420 : vector<2x7x11xf32>
    %1422 = arith.addf %1401, %1421 : vector<2x7x11xf32>
    %c293 = arith.constant 293 : index
    %1423 = memref.load %arg3[%c293] : memref<300xf32, #tpu.memory_space<smem>>
    %1424 = vector.broadcast %1423 : f32 to vector<2x7x11xf32>
    %1425 = arith.mulf %1406, %1424 : vector<2x7x11xf32>
    %1426 = arith.addf %1405, %1425 : vector<2x7x11xf32>
    %1427 = vector.extract_strided_slice %1383 {offsets = [0, 1, 0], sizes = [2, 7, 11], strides = [1, 1, 1]} : vector<2x8x11xf32> to vector<2x7x11xf32>
    %c58 = arith.constant 58 : index
    %1428 = memref.load %arg3[%c58] : memref<300xf32, #tpu.memory_space<smem>>
    %1429 = vector.broadcast %1428 : f32 to vector<2x7x11xf32>
    %1430 = arith.mulf %1427, %1429 : vector<2x7x11xf32>
    %1431 = arith.addf %1410, %1430 : vector<2x7x11xf32>
    %c118 = arith.constant 118 : index
    %1432 = memref.load %arg3[%c118] : memref<300xf32, #tpu.memory_space<smem>>
    %1433 = vector.broadcast %1432 : f32 to vector<2x7x11xf32>
    %1434 = arith.mulf %1427, %1433 : vector<2x7x11xf32>
    %1435 = arith.addf %1414, %1434 : vector<2x7x11xf32>
    %c178 = arith.constant 178 : index
    %1436 = memref.load %arg3[%c178] : memref<300xf32, #tpu.memory_space<smem>>
    %1437 = vector.broadcast %1436 : f32 to vector<2x7x11xf32>
    %1438 = arith.mulf %1427, %1437 : vector<2x7x11xf32>
    %1439 = arith.addf %1418, %1438 : vector<2x7x11xf32>
    %c238 = arith.constant 238 : index
    %1440 = memref.load %arg3[%c238] : memref<300xf32, #tpu.memory_space<smem>>
    %1441 = vector.broadcast %1440 : f32 to vector<2x7x11xf32>
    %1442 = arith.mulf %1427, %1441 : vector<2x7x11xf32>
    %1443 = arith.addf %1422, %1442 : vector<2x7x11xf32>
    %c298 = arith.constant 298 : index
    %1444 = memref.load %arg3[%c298] : memref<300xf32, #tpu.memory_space<smem>>
    %1445 = vector.broadcast %1444 : f32 to vector<2x7x11xf32>
    %1446 = arith.mulf %1427, %1445 : vector<2x7x11xf32>
    %1447 = arith.addf %1426, %1446 : vector<2x7x11xf32>
    %1448 = vector.extract_strided_slice %1160 {offsets = [0, 0, 4], sizes = [2, 8, 11], strides = [1, 1, 1]} : vector<2x8x16xf32> to vector<2x8x11xf32>
    %1449 = vector.extract_strided_slice %1187 {offsets = [0, 0, 4], sizes = [2, 8, 11], strides = [1, 1, 1]} : vector<2x8x16xf32> to vector<2x8x11xf32>
    %1450 = vector.extract_strided_slice %1448 {offsets = [0, 0, 0], sizes = [2, 7, 11], strides = [1, 1, 1]} : vector<2x8x11xf32> to vector<2x7x11xf32>
    %c49 = arith.constant 49 : index
    %1451 = memref.load %arg3[%c49] : memref<300xf32, #tpu.memory_space<smem>>
    %1452 = vector.broadcast %1451 : f32 to vector<2x7x11xf32>
    %1453 = arith.mulf %1450, %1452 : vector<2x7x11xf32>
    %1454 = arith.addf %1431, %1453 : vector<2x7x11xf32>
    %c109 = arith.constant 109 : index
    %1455 = memref.load %arg3[%c109] : memref<300xf32, #tpu.memory_space<smem>>
    %1456 = vector.broadcast %1455 : f32 to vector<2x7x11xf32>
    %1457 = arith.mulf %1450, %1456 : vector<2x7x11xf32>
    %1458 = arith.addf %1435, %1457 : vector<2x7x11xf32>
    %c169 = arith.constant 169 : index
    %1459 = memref.load %arg3[%c169] : memref<300xf32, #tpu.memory_space<smem>>
    %1460 = vector.broadcast %1459 : f32 to vector<2x7x11xf32>
    %1461 = arith.mulf %1450, %1460 : vector<2x7x11xf32>
    %1462 = arith.addf %1439, %1461 : vector<2x7x11xf32>
    %c229 = arith.constant 229 : index
    %1463 = memref.load %arg3[%c229] : memref<300xf32, #tpu.memory_space<smem>>
    %1464 = vector.broadcast %1463 : f32 to vector<2x7x11xf32>
    %1465 = arith.mulf %1450, %1464 : vector<2x7x11xf32>
    %1466 = arith.addf %1443, %1465 : vector<2x7x11xf32>
    %c289 = arith.constant 289 : index
    %1467 = memref.load %arg3[%c289] : memref<300xf32, #tpu.memory_space<smem>>
    %1468 = vector.broadcast %1467 : f32 to vector<2x7x11xf32>
    %1469 = arith.mulf %1450, %1468 : vector<2x7x11xf32>
    %1470 = arith.addf %1447, %1469 : vector<2x7x11xf32>
    %1471 = vector.extract_strided_slice %1449 {offsets = [0, 0, 0], sizes = [2, 7, 11], strides = [1, 1, 1]} : vector<2x8x11xf32> to vector<2x7x11xf32>
    %c54 = arith.constant 54 : index
    %1472 = memref.load %arg3[%c54] : memref<300xf32, #tpu.memory_space<smem>>
    %1473 = vector.broadcast %1472 : f32 to vector<2x7x11xf32>
    %1474 = arith.mulf %1471, %1473 : vector<2x7x11xf32>
    %1475 = arith.addf %1454, %1474 : vector<2x7x11xf32>
    %c114 = arith.constant 114 : index
    %1476 = memref.load %arg3[%c114] : memref<300xf32, #tpu.memory_space<smem>>
    %1477 = vector.broadcast %1476 : f32 to vector<2x7x11xf32>
    %1478 = arith.mulf %1471, %1477 : vector<2x7x11xf32>
    %1479 = arith.addf %1458, %1478 : vector<2x7x11xf32>
    %c174 = arith.constant 174 : index
    %1480 = memref.load %arg3[%c174] : memref<300xf32, #tpu.memory_space<smem>>
    %1481 = vector.broadcast %1480 : f32 to vector<2x7x11xf32>
    %1482 = arith.mulf %1471, %1481 : vector<2x7x11xf32>
    %1483 = arith.addf %1462, %1482 : vector<2x7x11xf32>
    %c234 = arith.constant 234 : index
    %1484 = memref.load %arg3[%c234] : memref<300xf32, #tpu.memory_space<smem>>
    %1485 = vector.broadcast %1484 : f32 to vector<2x7x11xf32>
    %1486 = arith.mulf %1471, %1485 : vector<2x7x11xf32>
    %1487 = arith.addf %1466, %1486 : vector<2x7x11xf32>
    %c294 = arith.constant 294 : index
    %1488 = memref.load %arg3[%c294] : memref<300xf32, #tpu.memory_space<smem>>
    %1489 = vector.broadcast %1488 : f32 to vector<2x7x11xf32>
    %1490 = arith.mulf %1471, %1489 : vector<2x7x11xf32>
    %1491 = arith.addf %1470, %1490 : vector<2x7x11xf32>
    %1492 = vector.extract_strided_slice %1448 {offsets = [0, 1, 0], sizes = [2, 7, 11], strides = [1, 1, 1]} : vector<2x8x11xf32> to vector<2x7x11xf32>
    %c59 = arith.constant 59 : index
    %1493 = memref.load %arg3[%c59] : memref<300xf32, #tpu.memory_space<smem>>
    %1494 = vector.broadcast %1493 : f32 to vector<2x7x11xf32>
    %1495 = arith.mulf %1492, %1494 : vector<2x7x11xf32>
    %1496 = arith.addf %1475, %1495 : vector<2x7x11xf32>
    %c119 = arith.constant 119 : index
    %1497 = memref.load %arg3[%c119] : memref<300xf32, #tpu.memory_space<smem>>
    %1498 = vector.broadcast %1497 : f32 to vector<2x7x11xf32>
    %1499 = arith.mulf %1492, %1498 : vector<2x7x11xf32>
    %1500 = arith.addf %1479, %1499 : vector<2x7x11xf32>
    %c179 = arith.constant 179 : index
    %1501 = memref.load %arg3[%c179] : memref<300xf32, #tpu.memory_space<smem>>
    %1502 = vector.broadcast %1501 : f32 to vector<2x7x11xf32>
    %1503 = arith.mulf %1492, %1502 : vector<2x7x11xf32>
    %1504 = arith.addf %1483, %1503 : vector<2x7x11xf32>
    %c239 = arith.constant 239 : index
    %1505 = memref.load %arg3[%c239] : memref<300xf32, #tpu.memory_space<smem>>
    %1506 = vector.broadcast %1505 : f32 to vector<2x7x11xf32>
    %1507 = arith.mulf %1492, %1506 : vector<2x7x11xf32>
    %1508 = arith.addf %1487, %1507 : vector<2x7x11xf32>
    %c299 = arith.constant 299 : index
    %1509 = memref.load %arg3[%c299] : memref<300xf32, #tpu.memory_space<smem>>
    %1510 = vector.broadcast %1509 : f32 to vector<2x7x11xf32>
    %1511 = arith.mulf %1492, %1510 : vector<2x7x11xf32>
    %1512 = arith.addf %1491, %1511 : vector<2x7x11xf32>
    %c0_48 = arith.constant 0 : index
    %1513 = memref.load %arg4[%c0_48] : memref<5xf32, #tpu.memory_space<smem>>
    %1514 = vector.broadcast %1513 : f32 to vector<2x7x11xf32>
    %1515 = arith.addf %1496, %1514 : vector<2x7x11xf32>
    %1516 = math.tanh %1515 : vector<2x7x11xf32>
    %c1_49 = arith.constant 1 : index
    %1517 = memref.load %arg4[%c1_49] : memref<5xf32, #tpu.memory_space<smem>>
    %1518 = vector.broadcast %1517 : f32 to vector<2x7x11xf32>
    %1519 = arith.addf %1500, %1518 : vector<2x7x11xf32>
    %1520 = math.tanh %1519 : vector<2x7x11xf32>
    %c2_50 = arith.constant 2 : index
    %1521 = memref.load %arg4[%c2_50] : memref<5xf32, #tpu.memory_space<smem>>
    %1522 = vector.broadcast %1521 : f32 to vector<2x7x11xf32>
    %1523 = arith.addf %1504, %1522 : vector<2x7x11xf32>
    %1524 = math.tanh %1523 : vector<2x7x11xf32>
    %c3_51 = arith.constant 3 : index
    %1525 = memref.load %arg4[%c3_51] : memref<5xf32, #tpu.memory_space<smem>>
    %1526 = vector.broadcast %1525 : f32 to vector<2x7x11xf32>
    %1527 = arith.addf %1508, %1526 : vector<2x7x11xf32>
    %1528 = math.tanh %1527 : vector<2x7x11xf32>
    %c4_52 = arith.constant 4 : index
    %1529 = memref.load %arg4[%c4_52] : memref<5xf32, #tpu.memory_space<smem>>
    %1530 = vector.broadcast %1529 : f32 to vector<2x7x11xf32>
    %1531 = arith.addf %1512, %1530 : vector<2x7x11xf32>
    %1532 = math.tanh %1531 : vector<2x7x11xf32>
    %1533 = vector.shape_cast %1516 : vector<2x7x11xf32> to vector<2x1x7x11xf32>
    %1534 = vector.shape_cast %1520 : vector<2x7x11xf32> to vector<2x1x7x11xf32>
    %1535 = vector.shape_cast %1524 : vector<2x7x11xf32> to vector<2x1x7x11xf32>
    %1536 = vector.shape_cast %1528 : vector<2x7x11xf32> to vector<2x1x7x11xf32>
    %1537 = vector.shape_cast %1532 : vector<2x7x11xf32> to vector<2x1x7x11xf32>
    %1538 = tpu.concatenate %1533, %1534, %1535, %1536, %1537 in 1 : vector<2x1x7x11xf32>, vector<2x1x7x11xf32>, vector<2x1x7x11xf32>, vector<2x1x7x11xf32>, vector<2x1x7x11xf32> -> vector<2x5x7x11xf32>
    %1539 = vector.extract_strided_slice %1538 {offsets = [0, 0, 0, 0], sizes = [2, 5, 7, 1], strides = [1, 1, 1, 1]} : vector<2x5x7x11xf32> to vector<2x5x7x1xf32>
    %1540 = vector.extract_strided_slice %1538 {offsets = [0, 0, 0, 2], sizes = [2, 5, 7, 1], strides = [1, 1, 1, 1]} : vector<2x5x7x11xf32> to vector<2x5x7x1xf32>
    %1541 = vector.extract_strided_slice %1538 {offsets = [0, 0, 0, 4], sizes = [2, 5, 7, 1], strides = [1, 1, 1, 1]} : vector<2x5x7x11xf32> to vector<2x5x7x1xf32>
    %1542 = vector.extract_strided_slice %1538 {offsets = [0, 0, 0, 6], sizes = [2, 5, 7, 1], strides = [1, 1, 1, 1]} : vector<2x5x7x11xf32> to vector<2x5x7x1xf32>
    %1543 = vector.extract_strided_slice %1538 {offsets = [0, 0, 0, 8], sizes = [2, 5, 7, 1], strides = [1, 1, 1, 1]} : vector<2x5x7x11xf32> to vector<2x5x7x1xf32>
    %1544 = vector.extract_strided_slice %1538 {offsets = [0, 0, 0, 10], sizes = [2, 5, 7, 1], strides = [1, 1, 1, 1]} : vector<2x5x7x11xf32> to vector<2x5x7x1xf32>
    %1545 = tpu.concatenate %1539, %1540, %1541, %1542, %1543, %1544 in 3 : vector<2x5x7x1xf32>, vector<2x5x7x1xf32>, vector<2x5x7x1xf32>, vector<2x5x7x1xf32>, vector<2x5x7x1xf32>, vector<2x5x7x1xf32> -> vector<2x5x7x6xf32>
    %c0_53 = arith.constant 0 : index
    %c0_54 = arith.constant 0 : index
    %c0_55 = arith.constant 0 : index
    %c0_56 = arith.constant 0 : index
    %1546 = vector.load %arg5[%c0_53, %c0_54, %c0_55, %c0_56] : memref<2x5x7x6xf32, #tpu.memory_space<vmem>>, vector<2x5x7x6xf32>
    tpu.vector_store %arg5[%c0_53, %c0_54, %c0_55, %c0_56], %1545 {strides = array<i32>} : memref<2x5x7x6xf32, #tpu.memory_space<vmem>>, vector<2x5x7x6xf32>,
    return
  }
}

</mosaic_0001>

<llo_original>
// kernel: model_forward.1
$region0: #{model_forward.1}
  #allocation0 [shape = 'u32[]', space=smem, size = 0x4, offset = 0x4, fixed_abs, tag = 'smem constant byte address 0x4 - core index']
  #allocation1 [shape = 'u32[144,128]{1,0:T(1,128)}', space=vmem, size = 0x12000, scoped, tag = 'internal scratch']
  %s0 = inlined_call_operand.hbm [shape: f32[2,4,16,16], index: 0, kind: input, shape index: {}]
  %s1 = inlined_call_operand.vmem [shape: f32[16], index: 1, kind: input, shape index: {}]
  %s2 = inlined_call_operand.hbm [shape: f32[4], index: 2, kind: input, shape index: {}]
  %s3 = inlined_call_operand.vmem [shape: f32[300], index: 3, kind: input, shape index: {}]
  %s4 = inlined_call_operand.vmem [shape: f32[5], index: 4, kind: input, shape index: {}]
  %s5 = inlined_call_operand.vmem [shape: f32[2,5,7,6], index: 5, kind: output, shape index: {}]
  %s6 = sld [smem:[#allocation0]]
  $region50: #{model_forward.1} parent=0
    _
  %s8 = ssub.s32 1, %s6
  %s9 = scalar_select 0, %s8, %s6
  $region1: #{model_forward.1} parent=0
    #allocation2 [shape = 'u8[65536]{0}', space=vmem, size = 0x10000, scoped, tag = 'input window, operand 0, single buffered']
    #allocation3 [shape = 's32[1]{0}', space=sflag, size = 0x4, scoped, tag = 'scoped memory for model_forward.1']
    #allocation4 [shape = 's32[1]{0}', space=sflag, size = 0x4, scoped, tag = 'scoped memory for model_forward.1']
    #allocation5 [shape = 's32[1]{0}', space=sflag, size = 0x4, scoped, tag = 'scoped memory for model_forward.1']
    #allocation6 [shape = 'u8[512]{0}', space=smem, size = 0x200, scoped, tag = 'input window, operand 1, single buffered']
    #allocation7 [shape = 'u8[512]{0}', space=smem, size = 0x200, scoped, tag = 'input window, operand 2, single buffered']
    #allocation8 [shape = 'u8[1536]{0}', space=smem, size = 0x600, scoped, tag = 'input window, operand 3, single buffered']
    #allocation9 [shape = 's32[1]{0}', space=sflag, size = 0x4, scoped, tag = 'scoped memory for model_forward.1']
    #allocation10 [shape = 'u8[512]{0}', space=smem, size = 0x200, scoped, tag = 'input window, operand 4, single buffered']
    %10 = vsyncpa [#allocation3], 0
    %11 = vsyncpa [#allocation5], 0
    %12 = vsyncpa [#allocation4], 0
    %13 = vsyncpa [#allocation9], 0
    // Predicated region
    $region2: #{model_forward.1} parent=1 // pred_check
      _
    $region3: #{model_forward.1} parent=1 // pred_check_branch
      %15 = sbr.rel (0) target = $region5
    $region4: #{model_forward.1} parent=1 // pred_region
      %s17 = ssub.s32 2048, 2048
      %18 = vsyncadd [#allocation3], %s17
      %s19 = sshll.u32 [#allocation2], 4
      %s20 = int_to_ptr.vmem [resolvable:$true] %s19
      %25 = dma.hbm_to_vmem [thread:$0]  %s0, 2048, %s20, [#allocation3], 128, 128, 8
    $region5: #{model_forward.1} parent=1 // pred_fallthru
      _
    // Predicated region
    $region6: #{model_forward.1} parent=1 // pred_check
      _
    $region7: #{model_forward.1} parent=1 // pred_check_branch
      %27 = sbr.rel (0) target = $region9
    $region8: #{model_forward.1} parent=1 // pred_region
      %s29 = ssub.s32 16, 16
      %30 = vsyncadd [#allocation5], %s29
      %s32 = sshll.u32 %s1, 4
      %s33 = int_to_ptr.vmem [resolvable:$true] %s32
      %35 = dma.vmem_to_smem %s33, 16, [#allocation6], [#allocation5]
    $region9: #{model_forward.1} parent=1 // pred_fallthru
      _
    // Predicated region
    $region10: #{model_forward.1} parent=1 // pred_check
      _
    $region11: #{model_forward.1} parent=1 // pred_check_branch
      %37 = sbr.rel (0) target = $region13
    $region12: #{model_forward.1} parent=1 // pred_region
      %s39 = ssub.s32 16, 16
      %40 = vsyncadd [#allocation4], %s39
      %43 = dma.hbm_to_smem %s2, 16, [#allocation7], [#allocation4]
    $region13: #{model_forward.1} parent=1 // pred_fallthru
      _
    // Predicated region
    $region14: #{model_forward.1} parent=1 // pred_check
      _
    $region15: #{model_forward.1} parent=1 // pred_check_branch
      %45 = sbr.rel (0) target = $region17
    $region16: #{model_forward.1} parent=1 // pred_region
      %s47 = ssub.s32 48, 48
      %48 = vsyncadd [#allocation9], %s47
      %s50 = sshll.u32 %s3, 4
      %s51 = int_to_ptr.vmem [resolvable:$true] %s50
      %53 = dma.vmem_to_smem %s51, 48, [#allocation8], [#allocation9]
    $region17: #{model_forward.1} parent=1 // pred_fallthru
      _
    // Predicated region
    $region18: #{model_forward.1} parent=1 // pred_check
      _
    $region19: #{model_forward.1} parent=1 // pred_check_branch
      %55 = sbr.rel (0) target = $region21
    $region20: #{model_forward.1} parent=1 // pred_region
      %s57 = ssub.s32 16, 16
      %58 = vsyncadd [#allocation9], %s57
      %s60 = sshll.u32 %s4, 4
      %s61 = int_to_ptr.vmem [resolvable:$true] %s60
      %63 = dma.vmem_to_smem %s61, 16, [#allocation10], [#allocation9]
    $region21: #{model_forward.1} parent=1 // pred_fallthru
      _
    // Predicated region
    $region22: #{model_forward.1} parent=1 // pred_check
      _
    $region23: #{model_forward.1} parent=1 // pred_check_branch
      %65 = sbr.rel (0) target = $region25
    $region24: #{model_forward.1} parent=1 // pred_region
      %66 = dma.done [#allocation3], 2048
    $region25: #{model_forward.1} parent=1 // pred_fallthru
      _
    // Predicated region
    $region26: #{model_forward.1} parent=1 // pred_check
      _
    $region27: #{model_forward.1} parent=1 // pred_check_branch
      %68 = sbr.rel (0) target = $region29
    $region28: #{model_forward.1} parent=1 // pred_region
      %69 = dma.done [#allocation5], 16
    $region29: #{model_forward.1} parent=1 // pred_fallthru
      _
    // Predicated region
    $region30: #{model_forward.1} parent=1 // pred_check
      _
    $region31: #{model_forward.1} parent=1 // pred_check_branch
      %71 = sbr.rel (0) target = $region33
    $region32: #{model_forward.1} parent=1 // pred_region
      %72 = dma.done [#allocation4], 16
    $region33: #{model_forward.1} parent=1 // pred_fallthru
      _
    // Predicated region
    $region34: #{model_forward.1} parent=1 // pred_check
      _
    $region35: #{model_forward.1} parent=1 // pred_check_branch
      %74 = sbr.rel (0) target = $region37
    $region36: #{model_forward.1} parent=1 // pred_region
      %75 = dma.done [#allocation9], 48
    $region37: #{model_forward.1} parent=1 // pred_fallthru
      _
    // Predicated region
    $region38: #{model_forward.1} parent=1 // pred_check
      _
    $region39: #{model_forward.1} parent=1 // pred_check_branch
      %77 = sbr.rel (0) target = $region41
    $region40: #{model_forward.1} parent=1 // pred_region
      %78 = dma.done [#allocation9], 16
    $region41: #{model_forward.1} parent=1 // pred_fallthru
      _
    %79 = sfence
    %v80 = vld [vmem:[#allocation2] ss:$2 sm:$0xff]
    %s81 = scalar_lea.vmem [#allocation2], 16
    %v82 = vld [vmem:[%s81] ss:$2 sm:$0xff]
    %s83 = scalar_lea.vmem [#allocation2], 32
    %v84 = vld [vmem:[%s83] ss:$2 sm:$0xff]
    %s85 = scalar_lea.vmem [#allocation2], 48
    %v86 = vld [vmem:[%s85] ss:$2 sm:$0xff]
    %s87 = scalar_lea.vmem [#allocation2], 64
    %v88 = vld [vmem:[%s87] ss:$2 sm:$0xff]
    %s89 = scalar_lea.vmem [#allocation2], 80
    %v90 = vld [vmem:[%s89] ss:$2 sm:$0xff]
    %s91 = scalar_lea.vmem [#allocation2], 96
    %v92 = vld [vmem:[%s91] ss:$2 sm:$0xff]
    %s93 = scalar_lea.vmem [#allocation2], 112
    %v94 = vld [vmem:[%s93] ss:$2 sm:$0xff]
    %s95 = scalar_lea.vmem [#allocation2], 1
    %v96 = vld [vmem:[%s95] ss:$2 sm:$0xff]
    %s97 = scalar_lea.vmem [#allocation2], 17
    %v98 = vld [vmem:[%s97] ss:$2 sm:$0xff]
    %s99 = scalar_lea.vmem [#allocation2], 33
    %v100 = vld [vmem:[%s99] ss:$2 sm:$0xff]
    %s101 = scalar_lea.vmem [#allocation2], 49
    %v102 = vld [vmem:[%s101] ss:$2 sm:$0xff]
    %s103 = scalar_lea.vmem [#allocation2], 65
    %v104 = vld [vmem:[%s103] ss:$2 sm:$0xff]
    %s105 = scalar_lea.vmem [#allocation2], 81
    %v106 = vld [vmem:[%s105] ss:$2 sm:$0xff]
    %s107 = scalar_lea.vmem [#allocation2], 97
    %v108 = vld [vmem:[%s107] ss:$2 sm:$0xff]
    %s109 = scalar_lea.vmem [#allocation2], 113
    %v110 = vld [vmem:[%s109] ss:$2 sm:$0xff]
    %s111 = sld [smem:[#allocation6]]
    %v112 = vstv %s111
    %v113 = vmul.f32 %v80, %v112
    %v114 = vmul.f32 %v88, %v112
    %s115 = sld [smem:[#allocation6 + $0x4]]
    %v116 = vstv %s115
    %v117 = vmul.f32 %v82, %v116
    %v118 = vmul.f32 %v90, %v116
    %v119 = vadd.f32 %v113, %v117
    %v120 = vadd.f32 %v114, %v118
    %s121 = sld [smem:[#allocation6 + $0x8]]
    %v122 = vstv %s121
    %v123 = vmul.f32 %v84, %v122
    %v124 = vmul.f32 %v92, %v122
    %v125 = vadd.f32 %v119, %v123
    %v126 = vadd.f32 %v120, %v124
    %s127 = sld [smem:[#allocation6 + $0xc]]
    %v128 = vstv %s127
    %v129 = vmul.f32 %v86, %v128
    %v130 = vmul.f32 %v94, %v128
    %v131 = vadd.f32 %v125, %v129
    %v132 = vadd.f32 %v126, %v130
    %s133 = sld [smem:[#allocation7]]
    %v134 = vstv %s133
    %v135 = vadd.f32 %v131, %v134
    %v136 = vadd.f32 %v132, %v134
    %v137 = vtanh.pop %v135
    %v138 = vtanh.pop %v136
    %v139 = vmul.f32 %v96, %v112
    %v140 = vmul.f32 %v104, %v112
    %v141 = vmul.f32 %v98, %v116
    %v142 = vmul.f32 %v106, %v116
    %v143 = vadd.f32 %v139, %v141
    %v144 = vadd.f32 %v140, %v142
    %v145 = vmul.f32 %v100, %v122
    %v146 = vmul.f32 %v108, %v122
    %v147 = vadd.f32 %v143, %v145
    %v148 = vadd.f32 %v144, %v146
    %v149 = vmul.f32 %v102, %v128
    %v150 = vmul.f32 %v110, %v128
    %v151 = vadd.f32 %v147, %v149
    %v152 = vadd.f32 %v148, %v150
    %v153 = vadd.f32 %v151, %v134
    %v154 = vadd.f32 %v152, %v134
    %v155 = vtanh.pop %v153
    %v156 = vtanh.pop %v154
    %s157 = sld [smem:[#allocation8]]
    %v158 = vstv %s157
    %v159 = vmul.f32 %v137, %v158
    %v160 = vmul.f32 %v138, %v158
    %s161 = sld [smem:[#allocation8 + $0x3c]]
    %v162 = vstv %s161
    %v163 = vmul.f32 %v137, %v162
    %v164 = vmul.f32 %v138, %v162
    %s165 = sld [smem:[#allocation8 + $0x78]]
    %v166 = vstv %s165
    %v167 = vmul.f32 %v137, %v166
    %v168 = vmul.f32 %v138, %v166
    %s169 = sld [smem:[#allocation8 + $0xb4]]
    %v170 = vstv %s169
    %v171 = vmul.f32 %v137, %v170
    %v172 = vmul.f32 %v138, %v170
    %s173 = sld [smem:[#allocation8 + $0xf0]]
    %v174 = vstv %s173
    %v175 = vmul.f32 %v137, %v174
    %v176 = vmul.f32 %v138, %v174
    %s177 = sld [smem:[#allocation8 + $0x5]]
    %v178 = vstv %s177
    %v179 = vmul.f32 %v155, %v178
    %v180 = vmul.f32 %v156, %v178
    %v181 = vadd.f32 %v159, %v179
    %v182 = vadd.f32 %v160, %v180
    %s183 = sld [smem:[#allocation8 + $0x41]]
    %v184 = vstv %s183
    %v185 = vmul.f32 %v155, %v184
    %v186 = vmul.f32 %v156, %v184
    %v187 = vadd.f32 %v163, %v185
    %v188 = vadd.f32 %v164, %v186
    %s189 = sld [smem:[#allocation8 + $0x7d]]
    %v190 = vstv %s189
    %v191 = vmul.f32 %v155, %v190
    %v192 = vmul.f32 %v156, %v190
    %v193 = vadd.f32 %v167, %v191
    %v194 = vadd.f32 %v168, %v192
    %s195 = sld [smem:[#allocation8 + $0xb9]]
    %v196 = vstv %s195
    %v197 = vmul.f32 %v155, %v196
    %v198 = vmul.f32 %v156, %v196
    %v199 = vadd.f32 %v171, %v197
    %v200 = vadd.f32 %v172, %v198
    %s201 = sld [smem:[#allocation8 + $0xf5]]
    %v202 = vstv %s201
    %v203 = vmul.f32 %v155, %v202
    %v204 = vmul.f32 %v156, %v202
    %v205 = vadd.f32 %v175, %v203
    %v206 = vadd.f32 %v176, %v204
    %s207 = sld [smem:[#allocation8 + $0xa]]
    %v208 = vstv %s207
    %v209 = vmul.f32 %v137, %v208
    %v210 = vmul.f32 %v138, %v208
    %v213 = vrot.slane %v209, 1
    %v214 = vrot.slane %v210, 1
    %v217 = vadd.f32 %v181, %v213
    %v218 = vadd.f32 %v182, %v214
    %s219 = sld [smem:[#allocation8 + $0x46]]
    %v220 = vstv %s219
    %v221 = vmul.f32 %v137, %v220
    %v222 = vmul.f32 %v138, %v220
    %v225 = vrot.slane %v221, 1
    %v226 = vrot.slane %v222, 1
    %v229 = vadd.f32 %v187, %v225
    %v230 = vadd.f32 %v188, %v226
    %s231 = sld [smem:[#allocation8 + $0x82]]
    %v232 = vstv %s231
    %v233 = vmul.f32 %v137, %v232
    %v234 = vmul.f32 %v138, %v232
    %v237 = vrot.slane %v233, 1
    %v238 = vrot.slane %v234, 1
    %v241 = vadd.f32 %v193, %v237
    %v242 = vadd.f32 %v194, %v238
    %s243 = sld [smem:[#allocation8 + $0xbe]]
    %v244 = vstv %s243
    %v245 = vmul.f32 %v137, %v244
    %v246 = vmul.f32 %v138, %v244
    %v249 = vrot.slane %v245, 1
    %v250 = vrot.slane %v246, 1
    %v253 = vadd.f32 %v199, %v249
    %v254 = vadd.f32 %v200, %v250
    %s255 = sld [smem:[#allocation8 + $0xfa]]
    %v256 = vstv %s255
    %v257 = vmul.f32 %v137, %v256
    %v258 = vmul.f32 %v138, %v256
    %v261 = vrot.slane %v257, 1
    %v262 = vrot.slane %v258, 1
    %v265 = vadd.f32 %v205, %v261
    %v266 = vadd.f32 %v206, %v262
    %s267 = sld [smem:[#allocation8 + $0x1]]
    %v268 = vstv %s267
    %v269 = vmul.f32 %v137, %v268
    %v270 = vmul.f32 %v138, %v268
    %273 = vrot.lane.b32.xlu0 %v269, 127
    %v274 = vpop.permute.xlu0 %273
    %275 = vrot.lane.b32.xlu0 %v270, 127
    %v276 = vpop.permute.xlu0 %275
    %v279 = vadd.f32 %v217, %v274
    %v280 = vadd.f32 %v218, %v276
    %s281 = sld [smem:[#allocation8 + $0x3d]]
    %v282 = vstv %s281
    %v283 = vmul.f32 %v137, %v282
    %v284 = vmul.f32 %v138, %v282
    %287 = vrot.lane.b32.xlu0 %v283, 127
    %v288 = vpop.permute.xlu0 %287
    %289 = vrot.lane.b32.xlu0 %v284, 127
    %v290 = vpop.permute.xlu0 %289
    %v293 = vadd.f32 %v229, %v288
    %v294 = vadd.f32 %v230, %v290
    %s295 = sld [smem:[#allocation8 + $0x79]]
    %v296 = vstv %s295
    %v297 = vmul.f32 %v137, %v296
    %v298 = vmul.f32 %v138, %v296
    %301 = vrot.lane.b32.xlu0 %v297, 127
    %v302 = vpop.permute.xlu0 %301
    %303 = vrot.lane.b32.xlu0 %v298, 127
    %v304 = vpop.permute.xlu0 %303
    %v307 = vadd.f32 %v241, %v302
    %v308 = vadd.f32 %v242, %v304
    %s309 = sld [smem:[#allocation8 + $0xb5]]
    %v310 = vstv %s309
    %v311 = vmul.f32 %v137, %v310
    %v312 = vmul.f32 %v138, %v310
    %315 = vrot.lane.b32.xlu0 %v311, 127
    %v316 = vpop.permute.xlu0 %315
    %317 = vrot.lane.b32.xlu0 %v312, 127
    %v318 = vpop.permute.xlu0 %317
    %v321 = vadd.f32 %v253, %v316
    %v322 = vadd.f32 %v254, %v318
    %s323 = sld [smem:[#allocation8 + $0xf1]]
    %v324 = vstv %s323
    %v325 = vmul.f32 %v137, %v324
    %v326 = vmul.f32 %v138, %v324
    %329 = vrot.lane.b32.xlu0 %v325, 127
    %v330 = vpop.permute.xlu0 %329
    %331 = vrot.lane.b32.xlu0 %v326, 127
    %v332 = vpop.permute.xlu0 %331
    %v335 = vadd.f32 %v265, %v330
    %v336 = vadd.f32 %v266, %v332
    %s337 = sld [smem:[#allocation8 + $0x6]]
    %v338 = vstv %s337
    %v339 = vmul.f32 %v155, %v338
    %v340 = vmul.f32 %v156, %v338
    %343 = vrot.lane.b32.xlu0 %v339, 127
    %v344 = vpop.permute.xlu0 %343
    %345 = vrot.lane.b32.xlu0 %v340, 127
    %v346 = vpop.permute.xlu0 %345
    %v349 = vadd.f32 %v279, %v344
    %v350 = vadd.f32 %v280, %v346
    %s351 = sld [smem:[#allocation8 + $0x42]]
    %v352 = vstv %s351
    %v353 = vmul.f32 %v155, %v352
    %v354 = vmul.f32 %v156, %v352
    %357 = vrot.lane.b32.xlu0 %v353, 127
    %v358 = vpop.permute.xlu0 %357
    %359 = vrot.lane.b32.xlu0 %v354, 127
    %v360 = vpop.permute.xlu0 %359
    %v363 = vadd.f32 %v293, %v358
    %v364 = vadd.f32 %v294, %v360
    %s365 = sld [smem:[#allocation8 + $0x7e]]
    %v366 = vstv %s365
    %v367 = vmul.f32 %v155, %v366
    %v368 = vmul.f32 %v156, %v366
    %371 = vrot.lane.b32.xlu0 %v367, 127
    %v372 = vpop.permute.xlu0 %371
    %373 = vrot.lane.b32.xlu0 %v368, 127
    %v374 = vpop.permute.xlu0 %373
    %v377 = vadd.f32 %v307, %v372
    %v378 = vadd.f32 %v308, %v374
    %s379 = sld [smem:[#allocation8 + $0xba]]
    %v380 = vstv %s379
    %v381 = vmul.f32 %v155, %v380
    %v382 = vmul.f32 %v156, %v380
    %385 = vrot.lane.b32.xlu0 %v381, 127
    %v386 = vpop.permute.xlu0 %385
    %387 = vrot.lane.b32.xlu0 %v382, 127
    %v388 = vpop.permute.xlu0 %387
    %v391 = vadd.f32 %v321, %v386
    %v392 = vadd.f32 %v322, %v388
    %s393 = sld [smem:[#allocation8 + $0xf6]]
    %v394 = vstv %s393
    %v395 = vmul.f32 %v155, %v394
    %v396 = vmul.f32 %v156, %v394
    %399 = vrot.lane.b32.xlu0 %v395, 127
    %v400 = vpop.permute.xlu0 %399
    %401 = vrot.lane.b32.xlu0 %v396, 127
    %v402 = vpop.permute.xlu0 %401
    %v405 = vadd.f32 %v335, %v400
    %v406 = vadd.f32 %v336, %v402
    %s407 = sld [smem:[#allocation8 + $0xb]]
    %v408 = vstv %s407
    %v409 = vmul.f32 %v137, %v408
    %v410 = vmul.f32 %v138, %v408
    %v413 = vrot.slane %v409, 1
    %v414 = vrot.slane %v410, 1
    %415 = vrot.lane.b32.xlu0 %v413, 127
    %v416 = vpop.permute.xlu0 %415
    %417 = vrot.lane.b32.xlu0 %v414, 127
    %v418 = vpop.permute.xlu0 %417
    %v421 = vadd.f32 %v349, %v416
    %v422 = vadd.f32 %v350, %v418
    %s423 = sld [smem:[#allocation8 + $0x47]]
    %v424 = vstv %s423
    %v425 = vmul.f32 %v137, %v424
    %v426 = vmul.f32 %v138, %v424
    %v429 = vrot.slane %v425, 1
    %v430 = vrot.slane %v426, 1
    %431 = vrot.lane.b32.xlu0 %v429, 127
    %v432 = vpop.permute.xlu0 %431
    %433 = vrot.lane.b32.xlu0 %v430, 127
    %v434 = vpop.permute.xlu0 %433
    %v437 = vadd.f32 %v363, %v432
    %v438 = vadd.f32 %v364, %v434
    %s439 = sld [smem:[#allocation8 + $0x83]]
    %v440 = vstv %s439
    %v441 = vmul.f32 %v137, %v440
    %v442 = vmul.f32 %v138, %v440
    %v445 = vrot.slane %v441, 1
    %v446 = vrot.slane %v442, 1
    %447 = vrot.lane.b32.xlu0 %v445, 127
    %v448 = vpop.permute.xlu0 %447
    %449 = vrot.lane.b32.xlu0 %v446, 127
    %v450 = vpop.permute.xlu0 %449
    %v453 = vadd.f32 %v377, %v448
    %v454 = vadd.f32 %v378, %v450
    %s455 = sld [smem:[#allocation8 + $0xbf]]
    %v456 = vstv %s455
    %v457 = vmul.f32 %v137, %v456
    %v458 = vmul.f32 %v138, %v456
    %v461 = vrot.slane %v457, 1
    %v462 = vrot.slane %v458, 1
    %463 = vrot.lane.b32.xlu0 %v461, 127
    %v464 = vpop.permute.xlu0 %463
    %465 = vrot.lane.b32.xlu0 %v462, 127
    %v466 = vpop.permute.xlu0 %465
    %v469 = vadd.f32 %v391, %v464
    %v470 = vadd.f32 %v392, %v466
    %s471 = sld [smem:[#allocation8 + $0xfb]]
    %v472 = vstv %s471
    %v473 = vmul.f32 %v137, %v472
    %v474 = vmul.f32 %v138, %v472
    %v477 = vrot.slane %v473, 1
    %v478 = vrot.slane %v474, 1
    %479 = vrot.lane.b32.xlu0 %v477, 127
    %v480 = vpop.permute.xlu0 %479
    %481 = vrot.lane.b32.xlu0 %v478, 127
    %v482 = vpop.permute.xlu0 %481
    %v485 = vadd.f32 %v405, %v480
    %v486 = vadd.f32 %v406, %v482
    %s487 = sld [smem:[#allocation8 + $0x2]]
    %v488 = vstv %s487
    %v489 = vmul.f32 %v137, %v488
    %v490 = vmul.f32 %v138, %v488
    %493 = vrot.lane.b32.xlu0 %v489, 126
    %v494 = vpop.permute.xlu0 %493
    %495 = vrot.lane.b32.xlu0 %v490, 126
    %v496 = vpop.permute.xlu0 %495
    %v499 = vadd.f32 %v421, %v494
    %v500 = vadd.f32 %v422, %v496
    %s501 = sld [smem:[#allocation8 + $0x3e]]
    %v502 = vstv %s501
    %v503 = vmul.f32 %v137, %v502
    %v504 = vmul.f32 %v138, %v502
    %507 = vrot.lane.b32.xlu0 %v503, 126
    %v508 = vpop.permute.xlu0 %507
    %509 = vrot.lane.b32.xlu0 %v504, 126
    %v510 = vpop.permute.xlu0 %509
    %v513 = vadd.f32 %v437, %v508
    %v514 = vadd.f32 %v438, %v510
    %s515 = sld [smem:[#allocation8 + $0x7a]]
    %v516 = vstv %s515
    %v517 = vmul.f32 %v137, %v516
    %v518 = vmul.f32 %v138, %v516
    %521 = vrot.lane.b32.xlu0 %v517, 126
    %v522 = vpop.permute.xlu0 %521
    %523 = vrot.lane.b32.xlu0 %v518, 126
    %v524 = vpop.permute.xlu0 %523
    %v527 = vadd.f32 %v453, %v522
    %v528 = vadd.f32 %v454, %v524
    %s529 = sld [smem:[#allocation8 + $0xb6]]
    %v530 = vstv %s529
    %v531 = vmul.f32 %v137, %v530
    %v532 = vmul.f32 %v138, %v530
    %535 = vrot.lane.b32.xlu0 %v531, 126
    %v536 = vpop.permute.xlu0 %535
    %537 = vrot.lane.b32.xlu0 %v532, 126
    %v538 = vpop.permute.xlu0 %537
    %v541 = vadd.f32 %v469, %v536
    %v542 = vadd.f32 %v470, %v538
    %s543 = sld [smem:[#allocation8 + $0xf2]]
    %v544 = vstv %s543
    %v545 = vmul.f32 %v137, %v544
    %v546 = vmul.f32 %v138, %v544
    %549 = vrot.lane.b32.xlu0 %v545, 126
    %v550 = vpop.permute.xlu0 %549
    %551 = vrot.lane.b32.xlu0 %v546, 126
    %v552 = vpop.permute.xlu0 %551
    %v555 = vadd.f32 %v485, %v550
    %v556 = vadd.f32 %v486, %v552
    %s557 = sld [smem:[#allocation8 + $0x7]]
    %v558 = vstv %s557
    %v559 = vmul.f32 %v155, %v558
    %v560 = vmul.f32 %v156, %v558
    %563 = vrot.lane.b32.xlu0 %v559, 126
    %v564 = vpop.permute.xlu0 %563
    %565 = vrot.lane.b32.xlu0 %v560, 126
    %v566 = vpop.permute.xlu0 %565
    %v569 = vadd.f32 %v499, %v564
    %v570 = vadd.f32 %v500, %v566
    %s571 = sld [smem:[#allocation8 + $0x43]]
    %v572 = vstv %s571
    %v573 = vmul.f32 %v155, %v572
    %v574 = vmul.f32 %v156, %v572
    %577 = vrot.lane.b32.xlu0 %v573, 126
    %v578 = vpop.permute.xlu0 %577
    %579 = vrot.lane.b32.xlu0 %v574, 126
    %v580 = vpop.permute.xlu0 %579
    %v583 = vadd.f32 %v513, %v578
    %v584 = vadd.f32 %v514, %v580
    %s585 = sld [smem:[#allocation8 + $0x7f]]
    %v586 = vstv %s585
    %v587 = vmul.f32 %v155, %v586
    %v588 = vmul.f32 %v156, %v586
    %591 = vrot.lane.b32.xlu0 %v587, 126
    %v592 = vpop.permute.xlu0 %591
    %593 = vrot.lane.b32.xlu0 %v588, 126
    %v594 = vpop.permute.xlu0 %593
    %v597 = vadd.f32 %v527, %v592
    %v598 = vadd.f32 %v528, %v594
    %s599 = sld [smem:[#allocation8 + $0xbb]]
    %v600 = vstv %s599
    %v601 = vmul.f32 %v155, %v600
    %v602 = vmul.f32 %v156, %v600
    %605 = vrot.lane.b32.xlu0 %v601, 126
    %v606 = vpop.permute.xlu0 %605
    %607 = vrot.lane.b32.xlu0 %v602, 126
    %v608 = vpop.permute.xlu0 %607
    %v611 = vadd.f32 %v541, %v606
    %v612 = vadd.f32 %v542, %v608
    %s613 = sld [smem:[#allocation8 + $0xf7]]
    %v614 = vstv %s613
    %v615 = vmul.f32 %v155, %v614
    %v616 = vmul.f32 %v156, %v614
    %619 = vrot.lane.b32.xlu0 %v615, 126
    %v620 = vpop.permute.xlu0 %619
    %621 = vrot.lane.b32.xlu0 %v616, 126
    %v622 = vpop.permute.xlu0 %621
    %v625 = vadd.f32 %v555, %v620
    %v626 = vadd.f32 %v556, %v622
    %s627 = sld [smem:[#allocation8 + $0xc]]
    %v628 = vstv %s627
    %v629 = vmul.f32 %v137, %v628
    %v630 = vmul.f32 %v138, %v628
    %v633 = vrot.slane %v629, 1
    %v634 = vrot.slane %v630, 1
    %635 = vrot.lane.b32.xlu0 %v633, 126
    %v636 = vpop.permute.xlu0 %635
    %637 = vrot.lane.b32.xlu0 %v634, 126
    %v638 = vpop.permute.xlu0 %637
    %v641 = vadd.f32 %v569, %v636
    %v642 = vadd.f32 %v570, %v638
    %s643 = sld [smem:[#allocation8 + $0x48]]
    %v644 = vstv %s643
    %v645 = vmul.f32 %v137, %v644
    %v646 = vmul.f32 %v138, %v644
    %v649 = vrot.slane %v645, 1
    %v650 = vrot.slane %v646, 1
    %651 = vrot.lane.b32.xlu0 %v649, 126
    %v652 = vpop.permute.xlu0 %651
    %653 = vrot.lane.b32.xlu0 %v650, 126
    %v654 = vpop.permute.xlu0 %653
    %v657 = vadd.f32 %v583, %v652
    %v658 = vadd.f32 %v584, %v654
    %s659 = sld [smem:[#allocation8 + $0x84]]
    %v660 = vstv %s659
    %v661 = vmul.f32 %v137, %v660
    %v662 = vmul.f32 %v138, %v660
    %v665 = vrot.slane %v661, 1
    %v666 = vrot.slane %v662, 1
    %667 = vrot.lane.b32.xlu0 %v665, 126
    %v668 = vpop.permute.xlu0 %667
    %669 = vrot.lane.b32.xlu0 %v666, 126
    %v670 = vpop.permute.xlu0 %669
    %v673 = vadd.f32 %v597, %v668
    %v674 = vadd.f32 %v598, %v670
    %s675 = sld [smem:[#allocation8 + $0xc0]]
    %v676 = vstv %s675
    %v677 = vmul.f32 %v137, %v676
    %v678 = vmul.f32 %v138, %v676
    %v681 = vrot.slane %v677, 1
    %v682 = vrot.slane %v678, 1
    %683 = vrot.lane.b32.xlu0 %v681, 126
    %v684 = vpop.permute.xlu0 %683
    %685 = vrot.lane.b32.xlu0 %v682, 126
    %v686 = vpop.permute.xlu0 %685
    %v689 = vadd.f32 %v611, %v684
    %v690 = vadd.f32 %v612, %v686
    %s691 = sld [smem:[#allocation8 + $0xfc]]
    %v692 = vstv %s691
    %v693 = vmul.f32 %v137, %v692
    %v694 = vmul.f32 %v138, %v692
    %v697 = vrot.slane %v693, 1
    %v698 = vrot.slane %v694, 1
    %699 = vrot.lane.b32.xlu0 %v697, 126
    %v700 = vpop.permute.xlu0 %699
    %701 = vrot.lane.b32.xlu0 %v698, 126
    %v702 = vpop.permute.xlu0 %701
    %v705 = vadd.f32 %v625, %v700
    %v706 = vadd.f32 %v626, %v702
    %s707 = sld [smem:[#allocation8 + $0x3]]
    %v708 = vstv %s707
    %v709 = vmul.f32 %v137, %v708
    %v710 = vmul.f32 %v138, %v708
    %713 = vrot.lane.b32.xlu0 %v709, 125
    %v714 = vpop.permute.xlu0 %713
    %715 = vrot.lane.b32.xlu0 %v710, 125
    %v716 = vpop.permute.xlu0 %715
    %v719 = vadd.f32 %v641, %v714
    %v720 = vadd.f32 %v642, %v716
    %s721 = sld [smem:[#allocation8 + $0x3f]]
    %v722 = vstv %s721
    %v723 = vmul.f32 %v137, %v722
    %v724 = vmul.f32 %v138, %v722
    %727 = vrot.lane.b32.xlu0 %v723, 125
    %v728 = vpop.permute.xlu0 %727
    %729 = vrot.lane.b32.xlu0 %v724, 125
    %v730 = vpop.permute.xlu0 %729
    %v733 = vadd.f32 %v657, %v728
    %v734 = vadd.f32 %v658, %v730
    %s735 = sld [smem:[#allocation8 + $0x7b]]
    %v736 = vstv %s735
    %v737 = vmul.f32 %v137, %v736
    %v738 = vmul.f32 %v138, %v736
    %741 = vrot.lane.b32.xlu0 %v737, 125
    %v742 = vpop.permute.xlu0 %741
    %743 = vrot.lane.b32.xlu0 %v738, 125
    %v744 = vpop.permute.xlu0 %743
    %v747 = vadd.f32 %v673, %v742
    %v748 = vadd.f32 %v674, %v744
    %s749 = sld [smem:[#allocation8 + $0xb7]]
    %v750 = vstv %s749
    %v751 = vmul.f32 %v137, %v750
    %v752 = vmul.f32 %v138, %v750
    %755 = vrot.lane.b32.xlu0 %v751, 125
    %v756 = vpop.permute.xlu0 %755
    %757 = vrot.lane.b32.xlu0 %v752, 125
    %v758 = vpop.permute.xlu0 %757
    %v761 = vadd.f32 %v689, %v756
    %v762 = vadd.f32 %v690, %v758
    %s763 = sld [smem:[#allocation8 + $0xf3]]
    %v764 = vstv %s763
    %v765 = vmul.f32 %v137, %v764
    %v766 = vmul.f32 %v138, %v764
    %769 = vrot.lane.b32.xlu0 %v765, 125
    %v770 = vpop.permute.xlu0 %769
    %771 = vrot.lane.b32.xlu0 %v766, 125
    %v772 = vpop.permute.xlu0 %771
    %v775 = vadd.f32 %v705, %v770
    %v776 = vadd.f32 %v706, %v772
    %s777 = sld [smem:[#allocation8 + $0x8]]
    %v778 = vstv %s777
    %v779 = vmul.f32 %v155, %v778
    %v780 = vmul.f32 %v156, %v778
    %783 = vrot.lane.b32.xlu0 %v779, 125
    %v784 = vpop.permute.xlu0 %783
    %785 = vrot.lane.b32.xlu0 %v780, 125
    %v786 = vpop.permute.xlu0 %785
    %v789 = vadd.f32 %v719, %v784
    %v790 = vadd.f32 %v720, %v786
    %s791 = sld [smem:[#allocation8 + $0x44]]
    %v792 = vstv %s791
    %v793 = vmul.f32 %v155, %v792
    %v794 = vmul.f32 %v156, %v792
    %797 = vrot.lane.b32.xlu0 %v793, 125
    %v798 = vpop.permute.xlu0 %797
    %799 = vrot.lane.b32.xlu0 %v794, 125
    %v800 = vpop.permute.xlu0 %799
    %v803 = vadd.f32 %v733, %v798
    %v804 = vadd.f32 %v734, %v800
    %s805 = sld [smem:[#allocation8 + $0x80]]
    %v806 = vstv %s805
    %v807 = vmul.f32 %v155, %v806
    %v808 = vmul.f32 %v156, %v806
    %811 = vrot.lane.b32.xlu0 %v807, 125
    %v812 = vpop.permute.xlu0 %811
    %813 = vrot.lane.b32.xlu0 %v808, 125
    %v814 = vpop.permute.xlu0 %813
    %v817 = vadd.f32 %v747, %v812
    %v818 = vadd.f32 %v748, %v814
    %s819 = sld [smem:[#allocation8 + $0xbc]]
    %v820 = vstv %s819
    %v821 = vmul.f32 %v155, %v820
    %v822 = vmul.f32 %v156, %v820
    %825 = vrot.lane.b32.xlu0 %v821, 125
    %v826 = vpop.permute.xlu0 %825
    %827 = vrot.lane.b32.xlu0 %v822, 125
    %v828 = vpop.permute.xlu0 %827
    %v831 = vadd.f32 %v761, %v826
    %v832 = vadd.f32 %v762, %v828
    %s833 = sld [smem:[#allocation8 + $0xf8]]
    %v834 = vstv %s833
    %v835 = vmul.f32 %v155, %v834
    %v836 = vmul.f32 %v156, %v834
    %839 = vrot.lane.b32.xlu0 %v835, 125
    %v840 = vpop.permute.xlu0 %839
    %841 = vrot.lane.b32.xlu0 %v836, 125
    %v842 = vpop.permute.xlu0 %841
    %v845 = vadd.f32 %v775, %v840
    %v846 = vadd.f32 %v776, %v842
    %s847 = sld [smem:[#allocation8 + $0xd]]
    %v848 = vstv %s847
    %v849 = vmul.f32 %v137, %v848
    %v850 = vmul.f32 %v138, %v848
    %v853 = vrot.slane %v849, 1
    %v854 = vrot.slane %v850, 1
    %855 = vrot.lane.b32.xlu0 %v853, 125
    %v856 = vpop.permute.xlu0 %855
    %857 = vrot.lane.b32.xlu0 %v854, 125
    %v858 = vpop.permute.xlu0 %857
    %v861 = vadd.f32 %v789, %v856
    %v862 = vadd.f32 %v790, %v858
    %s863 = sld [smem:[#allocation8 + $0x49]]
    %v864 = vstv %s863
    %v865 = vmul.f32 %v137, %v864
    %v866 = vmul.f32 %v138, %v864
    %v869 = vrot.slane %v865, 1
    %v870 = vrot.slane %v866, 1
    %871 = vrot.lane.b32.xlu0 %v869, 125
    %v872 = vpop.permute.xlu0 %871
    %873 = vrot.lane.b32.xlu0 %v870, 125
    %v874 = vpop.permute.xlu0 %873
    %v877 = vadd.f32 %v803, %v872
    %v878 = vadd.f32 %v804, %v874
    %s879 = sld [smem:[#allocation8 + $0x85]]
    %v880 = vstv %s879
    %v881 = vmul.f32 %v137, %v880
    %v882 = vmul.f32 %v138, %v880
    %v885 = vrot.slane %v881, 1
    %v886 = vrot.slane %v882, 1
    %887 = vrot.lane.b32.xlu0 %v885, 125
    %v888 = vpop.permute.xlu0 %887
    %889 = vrot.lane.b32.xlu0 %v886, 125
    %v890 = vpop.permute.xlu0 %889
    %v893 = vadd.f32 %v817, %v888
    %v894 = vadd.f32 %v818, %v890
    %s895 = sld [smem:[#allocation8 + $0xc1]]
    %v896 = vstv %s895
    %v897 = vmul.f32 %v137, %v896
    %v898 = vmul.f32 %v138, %v896
    %v901 = vrot.slane %v897, 1
    %v902 = vrot.slane %v898, 1
    %903 = vrot.lane.b32.xlu0 %v901, 125
    %v904 = vpop.permute.xlu0 %903
    %905 = vrot.lane.b32.xlu0 %v902, 125
    %v906 = vpop.permute.xlu0 %905
    %v909 = vadd.f32 %v831, %v904
    %v910 = vadd.f32 %v832, %v906
    %s911 = sld [smem:[#allocation8 + $0xfd]]
    %v912 = vstv %s911
    %v913 = vmul.f32 %v137, %v912
    %v914 = vmul.f32 %v138, %v912
    %v917 = vrot.slane %v913, 1
    %v918 = vrot.slane %v914, 1
    %919 = vrot.lane.b32.xlu0 %v917, 125
    %v920 = vpop.permute.xlu0 %919
    %921 = vrot.lane.b32.xlu0 %v918, 125
    %v922 = vpop.permute.xlu0 %921
    %v925 = vadd.f32 %v845, %v920
    %v926 = vadd.f32 %v846, %v922
    %s927 = sld [smem:[#allocation8 + $0x4]]
    %v928 = vstv %s927
    %v929 = vmul.f32 %v137, %v928
    %v930 = vmul.f32 %v138, %v928
    %933 = vrot.lane.b32.xlu0 %v929, 124
    %v934 = vpop.permute.xlu0 %933
    %935 = vrot.lane.b32.xlu0 %v930, 124
    %v936 = vpop.permute.xlu0 %935
    %v939 = vadd.f32 %v861, %v934
    %v940 = vadd.f32 %v862, %v936
    %s941 = sld [smem:[#allocation8 + $0x40]]
    %v942 = vstv %s941
    %v943 = vmul.f32 %v137, %v942
    %v944 = vmul.f32 %v138, %v942
    %947 = vrot.lane.b32.xlu0 %v943, 124
    %v948 = vpop.permute.xlu0 %947
    %949 = vrot.lane.b32.xlu0 %v944, 124
    %v950 = vpop.permute.xlu0 %949
    %v953 = vadd.f32 %v877, %v948
    %v954 = vadd.f32 %v878, %v950
    %s955 = sld [smem:[#allocation8 + $0x7c]]
    %v956 = vstv %s955
    %v957 = vmul.f32 %v137, %v956
    %v958 = vmul.f32 %v138, %v956
    %961 = vrot.lane.b32.xlu0 %v957, 124
    %v962 = vpop.permute.xlu0 %961
    %963 = vrot.lane.b32.xlu0 %v958, 124
    %v964 = vpop.permute.xlu0 %963
    %v967 = vadd.f32 %v893, %v962
    %v968 = vadd.f32 %v894, %v964
    %s969 = sld [smem:[#allocation8 + $0xb8]]
    %v970 = vstv %s969
    %v971 = vmul.f32 %v137, %v970
    %v972 = vmul.f32 %v138, %v970
    %975 = vrot.lane.b32.xlu0 %v971, 124
    %v976 = vpop.permute.xlu0 %975
    %977 = vrot.lane.b32.xlu0 %v972, 124
    %v978 = vpop.permute.xlu0 %977
    %v981 = vadd.f32 %v909, %v976
    %v982 = vadd.f32 %v910, %v978
    %s983 = sld [smem:[#allocation8 + $0xf4]]
    %v984 = vstv %s983
    %v985 = vmul.f32 %v137, %v984
    %v986 = vmul.f32 %v138, %v984
    %989 = vrot.lane.b32.xlu0 %v985, 124
    %v990 = vpop.permute.xlu0 %989
    %991 = vrot.lane.b32.xlu0 %v986, 124
    %v992 = vpop.permute.xlu0 %991
    %v995 = vadd.f32 %v925, %v990
    %v996 = vadd.f32 %v926, %v992
    %s997 = sld [smem:[#allocation8 + $0x9]]
    %v998 = vstv %s997
    %v999 = vmul.f32 %v155, %v998
    %v1000 = vmul.f32 %v156, %v998
    %1003 = vrot.lane.b32.xlu0 %v999, 124
    %v1004 = vpop.permute.xlu0 %1003
    %1005 = vrot.lane.b32.xlu0 %v1000, 124
    %v1006 = vpop.permute.xlu0 %1005
    %v1009 = vadd.f32 %v939, %v1004
    %v1010 = vadd.f32 %v940, %v1006
    %s1011 = sld [smem:[#allocation8 + $0x45]]
    %v1012 = vstv %s1011
    %v1013 = vmul.f32 %v155, %v1012
    %v1014 = vmul.f32 %v156, %v1012
    %1017 = vrot.lane.b32.xlu0 %v1013, 124
    %v1018 = vpop.permute.xlu0 %1017
    %1019 = vrot.lane.b32.xlu0 %v1014, 124
    %v1020 = vpop.permute.xlu0 %1019
    %v1023 = vadd.f32 %v953, %v1018
    %v1024 = vadd.f32 %v954, %v1020
    %s1025 = sld [smem:[#allocation8 + $0x81]]
    %v1026 = vstv %s1025
    %v1027 = vmul.f32 %v155, %v1026
    %v1028 = vmul.f32 %v156, %v1026
    %1031 = vrot.lane.b32.xlu0 %v1027, 124
    %v1032 = vpop.permute.xlu0 %1031
    %1033 = vrot.lane.b32.xlu0 %v1028, 124
    %v1034 = vpop.permute.xlu0 %1033
    %v1037 = vadd.f32 %v967, %v1032
    %v1038 = vadd.f32 %v968, %v1034
    %s1039 = sld [smem:[#allocation8 + $0xbd]]
    %v1040 = vstv %s1039
    %v1041 = vmul.f32 %v155, %v1040
    %v1042 = vmul.f32 %v156, %v1040
    %1045 = vrot.lane.b32.xlu0 %v1041, 124
    %v1046 = vpop.permute.xlu0 %1045
    %1047 = vrot.lane.b32.xlu0 %v1042, 124
    %v1048 = vpop.permute.xlu0 %1047
    %v1051 = vadd.f32 %v981, %v1046
    %v1052 = vadd.f32 %v982, %v1048
    %s1053 = sld [smem:[#allocation8 + $0xf9]]
    %v1054 = vstv %s1053
    %v1055 = vmul.f32 %v155, %v1054
    %v1056 = vmul.f32 %v156, %v1054
    %1059 = vrot.lane.b32.xlu0 %v1055, 124
    %v1060 = vpop.permute.xlu0 %1059
    %1061 = vrot.lane.b32.xlu0 %v1056, 124
    %v1062 = vpop.permute.xlu0 %1061
    %v1065 = vadd.f32 %v995, %v1060
    %v1066 = vadd.f32 %v996, %v1062
    %s1067 = sld [smem:[#allocation8 + $0xe]]
    %v1068 = vstv %s1067
    %v1069 = vmul.f32 %v137, %v1068
    %v1070 = vmul.f32 %v138, %v1068
    %v1073 = vrot.slane %v1069, 1
    %v1074 = vrot.slane %v1070, 1
    %1075 = vrot.lane.b32.xlu0 %v1073, 124
    %v1076 = vpop.permute.xlu0 %1075
    %1077 = vrot.lane.b32.xlu0 %v1074, 124
    %v1078 = vpop.permute.xlu0 %1077
    %v1081 = vadd.f32 %v1009, %v1076
    %v1082 = vadd.f32 %v1010, %v1078
    %s1083 = sld [smem:[#allocation8 + $0x4a]]
    %v1084 = vstv %s1083
    %v1085 = vmul.f32 %v137, %v1084
    %v1086 = vmul.f32 %v138, %v1084
    %v1089 = vrot.slane %v1085, 1
    %v1090 = vrot.slane %v1086, 1
    %1091 = vrot.lane.b32.xlu0 %v1089, 124
    %v1092 = vpop.permute.xlu0 %1091
    %1093 = vrot.lane.b32.xlu0 %v1090, 124
    %v1094 = vpop.permute.xlu0 %1093
    %v1097 = vadd.f32 %v1023, %v1092
    %v1098 = vadd.f32 %v1024, %v1094
    %s1099 = sld [smem:[#allocation8 + $0x86]]
    %v1100 = vstv %s1099
    %v1101 = vmul.f32 %v137, %v1100
    %v1102 = vmul.f32 %v138, %v1100
    %v1105 = vrot.slane %v1101, 1
    %v1106 = vrot.slane %v1102, 1
    %1107 = vrot.lane.b32.xlu0 %v1105, 124
    %v1108 = vpop.permute.xlu0 %1107
    %1109 = vrot.lane.b32.xlu0 %v1106, 124
    %v1110 = vpop.permute.xlu0 %1109
    %v1113 = vadd.f32 %v1037, %v1108
    %v1114 = vadd.f32 %v1038, %v1110
    %s1115 = sld [smem:[#allocation8 + $0xc2]]
    %v1116 = vstv %s1115
    %v1117 = vmul.f32 %v137, %v1116
    %v1118 = vmul.f32 %v138, %v1116
    %v1121 = vrot.slane %v1117, 1
    %v1122 = vrot.slane %v1118, 1
    %1123 = vrot.lane.b32.xlu0 %v1121, 124
    %v1124 = vpop.permute.xlu0 %1123
    %1125 = vrot.lane.b32.xlu0 %v1122, 124
    %v1126 = vpop.permute.xlu0 %1125
    %v1129 = vadd.f32 %v1051, %v1124
    %v1130 = vadd.f32 %v1052, %v1126
    %s1131 = sld [smem:[#allocation8 + $0xfe]]
    %v1132 = vstv %s1131
    %v1133 = vmul.f32 %v137, %v1132
    %v1134 = vmul.f32 %v138, %v1132
    %v1137 = vrot.slane %v1133, 1
    %v1138 = vrot.slane %v1134, 1
    %1139 = vrot.lane.b32.xlu0 %v1137, 124
    %v1140 = vpop.permute.xlu0 %1139
    %1141 = vrot.lane.b32.xlu0 %v1138, 124
    %v1142 = vpop.permute.xlu0 %1141
    %v1145 = vadd.f32 %v1065, %v1140
    %v1146 = vadd.f32 %v1066, %v1142
    %s1147 = sld [smem:[#allocation6 + $0x1]]
    %v1148 = vstv %s1147
    %v1149 = vmul.f32 %v80, %v1148
    %v1150 = vmul.f32 %v88, %v1148
    %s1151 = sld [smem:[#allocation6 + $0x5]]
    %v1152 = vstv %s1151
    %v1153 = vmul.f32 %v82, %v1152
    %v1154 = vmul.f32 %v90, %v1152
    %v1155 = vadd.f32 %v1149, %v1153
    %v1156 = vadd.f32 %v1150, %v1154
    %s1157 = sld [smem:[#allocation6 + $0x9]]
    %v1158 = vstv %s1157
    %v1159 = vmul.f32 %v84, %v1158
    %v1160 = vmul.f32 %v92, %v1158
    %v1161 = vadd.f32 %v1155, %v1159
    %v1162 = vadd.f32 %v1156, %v1160
    %s1163 = sld [smem:[#allocation6 + $0xd]]
    %v1164 = vstv %s1163
    %v1165 = vmul.f32 %v86, %v1164
    %v1166 = vmul.f32 %v94, %v1164
    %v1167 = vadd.f32 %v1161, %v1165
    %v1168 = vadd.f32 %v1162, %v1166
    %s1169 = sld [smem:[#allocation7 + $0x1]]
    %v1170 = vstv %s1169
    %v1171 = vadd.f32 %v1167, %v1170
    %v1172 = vadd.f32 %v1168, %v1170
    %v1173 = vtanh.pop %v1171
    %v1174 = vtanh.pop %v1172
    %v1175 = vmul.f32 %v96, %v1148
    %v1176 = vmul.f32 %v104, %v1148
    %v1177 = vmul.f32 %v98, %v1152
    %v1178 = vmul.f32 %v106, %v1152
    %v1179 = vadd.f32 %v1175, %v1177
    %v1180 = vadd.f32 %v1176, %v1178
    %v1181 = vmul.f32 %v100, %v1158
    %v1182 = vmul.f32 %v108, %v1158
    %v1183 = vadd.f32 %v1179, %v1181
    %v1184 = vadd.f32 %v1180, %v1182
    %v1185 = vmul.f32 %v102, %v1164
    %v1186 = vmul.f32 %v110, %v1164
    %v1187 = vadd.f32 %v1183, %v1185
    %v1188 = vadd.f32 %v1184, %v1186
    %v1189 = vadd.f32 %v1187, %v1170
    %v1190 = vadd.f32 %v1188, %v1170
    %v1191 = vtanh.pop %v1189
    %v1192 = vtanh.pop %v1190
    %s1193 = sld [smem:[#allocation8 + $0xf]]
    %v1194 = vstv %s1193
    %v1195 = vmul.f32 %v1173, %v1194
    %v1196 = vmul.f32 %v1174, %v1194
    %v1197 = vadd.f32 %v1081, %v1195
    %v1198 = vadd.f32 %v1082, %v1196
    %s1199 = sld [smem:[#allocation8 + $0x4b]]
    %v1200 = vstv %s1199
    %v1201 = vmul.f32 %v1173, %v1200
    %v1202 = vmul.f32 %v1174, %v1200
    %v1203 = vadd.f32 %v1097, %v1201
    %v1204 = vadd.f32 %v1098, %v1202
    %s1205 = sld [smem:[#allocation8 + $0x87]]
    %v1206 = vstv %s1205
    %v1207 = vmul.f32 %v1173, %v1206
    %v1208 = vmul.f32 %v1174, %v1206
    %v1209 = vadd.f32 %v1113, %v1207
    %v1210 = vadd.f32 %v1114, %v1208
    %s1211 = sld [smem:[#allocation8 + $0xc3]]
    %v1212 = vstv %s1211
    %v1213 = vmul.f32 %v1173, %v1212
    %v1214 = vmul.f32 %v1174, %v1212
    %v1215 = vadd.f32 %v1129, %v1213
    %v1216 = vadd.f32 %v1130, %v1214
    %s1217 = sld [smem:[#allocation8 + $0xff]]
    %v1218 = vstv %s1217
    %v1219 = vmul.f32 %v1173, %v1218
    %v1220 = vmul.f32 %v1174, %v1218
    %v1221 = vadd.f32 %v1145, %v1219
    %v1222 = vadd.f32 %v1146, %v1220
    %s1223 = sld [smem:[#allocation8 + $0x14]]
    %v1224 = vstv %s1223
    %v1225 = vmul.f32 %v1191, %v1224
    %v1226 = vmul.f32 %v1192, %v1224
    %v1227 = vadd.f32 %v1197, %v1225
    %v1228 = vadd.f32 %v1198, %v1226
    %s1229 = sld [smem:[#allocation8 + $0x50]]
    %v1230 = vstv %s1229
    %v1231 = vmul.f32 %v1191, %v1230
    %v1232 = vmul.f32 %v1192, %v1230
    %v1233 = vadd.f32 %v1203, %v1231
    %v1234 = vadd.f32 %v1204, %v1232
    %s1235 = sld [smem:[#allocation8 + $0x8c]]
    %v1236 = vstv %s1235
    %v1237 = vmul.f32 %v1191, %v1236
    %v1238 = vmul.f32 %v1192, %v1236
    %v1239 = vadd.f32 %v1209, %v1237
    %v1240 = vadd.f32 %v1210, %v1238
    %s1241 = sld [smem:[#allocation8 + $0xc8]]
    %v1242 = vstv %s1241
    %v1243 = vmul.f32 %v1191, %v1242
    %v1244 = vmul.f32 %v1192, %v1242
    %v1245 = vadd.f32 %v1215, %v1243
    %v1246 = vadd.f32 %v1216, %v1244
    %s1247 = sld [smem:[#allocation8 + $0x104]]
    %v1248 = vstv %s1247
    %v1249 = vmul.f32 %v1191, %v1248
    %v1250 = vmul.f32 %v1192, %v1248
    %v1251 = vadd.f32 %v1221, %v1249
    %v1252 = vadd.f32 %v1222, %v1250
    %s1253 = sld [smem:[#allocation8 + $0x19]]
    %v1254 = vstv %s1253
    %v1255 = vmul.f32 %v1173, %v1254
    %v1256 = vmul.f32 %v1174, %v1254
    %v1259 = vrot.slane %v1255, 1
    %v1260 = vrot.slane %v1256, 1
    %v1263 = vadd.f32 %v1227, %v1259
    %v1264 = vadd.f32 %v1228, %v1260
    %s1265 = sld [smem:[#allocation8 + $0x55]]
    %v1266 = vstv %s1265
    %v1267 = vmul.f32 %v1173, %v1266
    %v1268 = vmul.f32 %v1174, %v1266
    %v1271 = vrot.slane %v1267, 1
    %v1272 = vrot.slane %v1268, 1
    %v1275 = vadd.f32 %v1233, %v1271
    %v1276 = vadd.f32 %v1234, %v1272
    %s1277 = sld [smem:[#allocation8 + $0x91]]
    %v1278 = vstv %s1277
    %v1279 = vmul.f32 %v1173, %v1278
    %v1280 = vmul.f32 %v1174, %v1278
    %v1283 = vrot.slane %v1279, 1
    %v1284 = vrot.slane %v1280, 1
    %v1287 = vadd.f32 %v1239, %v1283
    %v1288 = vadd.f32 %v1240, %v1284
    %s1289 = sld [smem:[#allocation8 + $0xcd]]
    %v1290 = vstv %s1289
    %v1291 = vmul.f32 %v1173, %v1290
    %v1292 = vmul.f32 %v1174, %v1290
    %v1295 = vrot.slane %v1291, 1
    %v1296 = vrot.slane %v1292, 1
    %v1299 = vadd.f32 %v1245, %v1295
    %v1300 = vadd.f32 %v1246, %v1296
    %s1301 = sld [smem:[#allocation8 + $0x109]]
    %v1302 = vstv %s1301
    %v1303 = vmul.f32 %v1173, %v1302
    %v1304 = vmul.f32 %v1174, %v1302
    %v1307 = vrot.slane %v1303, 1
    %v1308 = vrot.slane %v1304, 1
    %v1311 = vadd.f32 %v1251, %v1307
    %v1312 = vadd.f32 %v1252, %v1308
    %s1313 = sld [smem:[#allocation8 + $0x10]]
    %v1314 = vstv %s1313
    %v1315 = vmul.f32 %v1173, %v1314
    %v1316 = vmul.f32 %v1174, %v1314
    %1319 = vrot.lane.b32.xlu0 %v1315, 127
    %v1320 = vpop.permute.xlu0 %1319
    %1321 = vrot.lane.b32.xlu0 %v1316, 127
    %v1322 = vpop.permute.xlu0 %1321
    %v1325 = vadd.f32 %v1263, %v1320
    %v1326 = vadd.f32 %v1264, %v1322
    %s1327 = sld [smem:[#allocation8 + $0x4c]]
    %v1328 = vstv %s1327
    %v1329 = vmul.f32 %v1173, %v1328
    %v1330 = vmul.f32 %v1174, %v1328
    %1333 = vrot.lane.b32.xlu0 %v1329, 127
    %v1334 = vpop.permute.xlu0 %1333
    %1335 = vrot.lane.b32.xlu0 %v1330, 127
    %v1336 = vpop.permute.xlu0 %1335
    %v1339 = vadd.f32 %v1275, %v1334
    %v1340 = vadd.f32 %v1276, %v1336
    %s1341 = sld [smem:[#allocation8 + $0x88]]
    %v1342 = vstv %s1341
    %v1343 = vmul.f32 %v1173, %v1342
    %v1344 = vmul.f32 %v1174, %v1342
    %1347 = vrot.lane.b32.xlu0 %v1343, 127
    %v1348 = vpop.permute.xlu0 %1347
    %1349 = vrot.lane.b32.xlu0 %v1344, 127
    %v1350 = vpop.permute.xlu0 %1349
    %v1353 = vadd.f32 %v1287, %v1348
    %v1354 = vadd.f32 %v1288, %v1350
    %s1355 = sld [smem:[#allocation8 + $0xc4]]
    %v1356 = vstv %s1355
    %v1357 = vmul.f32 %v1173, %v1356
    %v1358 = vmul.f32 %v1174, %v1356
    %1361 = vrot.lane.b32.xlu0 %v1357, 127
    %v1362 = vpop.permute.xlu0 %1361
    %1363 = vrot.lane.b32.xlu0 %v1358, 127
    %v1364 = vpop.permute.xlu0 %1363
    %v1367 = vadd.f32 %v1299, %v1362
    %v1368 = vadd.f32 %v1300, %v1364
    %s1369 = sld [smem:[#allocation8 + $0x100]]
    %v1370 = vstv %s1369
    %v1371 = vmul.f32 %v1173, %v1370
    %v1372 = vmul.f32 %v1174, %v1370
    %1375 = vrot.lane.b32.xlu0 %v1371, 127
    %v1376 = vpop.permute.xlu0 %1375
    %1377 = vrot.lane.b32.xlu0 %v1372, 127
    %v1378 = vpop.permute.xlu0 %1377
    %v1381 = vadd.f32 %v1311, %v1376
    %v1382 = vadd.f32 %v1312, %v1378
    %s1383 = sld [smem:[#allocation8 + $0x15]]
    %v1384 = vstv %s1383
    %v1385 = vmul.f32 %v1191, %v1384
    %v1386 = vmul.f32 %v1192, %v1384
    %1389 = vrot.lane.b32.xlu0 %v1385, 127
    %v1390 = vpop.permute.xlu0 %1389
    %1391 = vrot.lane.b32.xlu0 %v1386, 127
    %v1392 = vpop.permute.xlu0 %1391
    %v1395 = vadd.f32 %v1325, %v1390
    %v1396 = vadd.f32 %v1326, %v1392
    %s1397 = sld [smem:[#allocation8 + $0x51]]
    %v1398 = vstv %s1397
    %v1399 = vmul.f32 %v1191, %v1398
    %v1400 = vmul.f32 %v1192, %v1398
    %1403 = vrot.lane.b32.xlu0 %v1399, 127
    %v1404 = vpop.permute.xlu0 %1403
    %1405 = vrot.lane.b32.xlu0 %v1400, 127
    %v1406 = vpop.permute.xlu0 %1405
    %v1409 = vadd.f32 %v1339, %v1404
    %v1410 = vadd.f32 %v1340, %v1406
    %s1411 = sld [smem:[#allocation8 + $0x8d]]
    %v1412 = vstv %s1411
    %v1413 = vmul.f32 %v1191, %v1412
    %v1414 = vmul.f32 %v1192, %v1412
    %1417 = vrot.lane.b32.xlu0 %v1413, 127
    %v1418 = vpop.permute.xlu0 %1417
    %1419 = vrot.lane.b32.xlu0 %v1414, 127
    %v1420 = vpop.permute.xlu0 %1419
    %v1423 = vadd.f32 %v1353, %v1418
    %v1424 = vadd.f32 %v1354, %v1420
    %s1425 = sld [smem:[#allocation8 + $0xc9]]
    %v1426 = vstv %s1425
    %v1427 = vmul.f32 %v1191, %v1426
    %v1428 = vmul.f32 %v1192, %v1426
    %1431 = vrot.lane.b32.xlu0 %v1427, 127
    %v1432 = vpop.permute.xlu0 %1431
    %1433 = vrot.lane.b32.xlu0 %v1428, 127
    %v1434 = vpop.permute.xlu0 %1433
    %v1437 = vadd.f32 %v1367, %v1432
    %v1438 = vadd.f32 %v1368, %v1434
    %s1439 = sld [smem:[#allocation8 + $0x105]]
    %v1440 = vstv %s1439
    %v1441 = vmul.f32 %v1191, %v1440
    %v1442 = vmul.f32 %v1192, %v1440
    %1445 = vrot.lane.b32.xlu0 %v1441, 127
    %v1446 = vpop.permute.xlu0 %1445
    %1447 = vrot.lane.b32.xlu0 %v1442, 127
    %v1448 = vpop.permute.xlu0 %1447
    %v1451 = vadd.f32 %v1381, %v1446
    %v1452 = vadd.f32 %v1382, %v1448
    %s1453 = sld [smem:[#allocation8 + $0x1a]]
    %v1454 = vstv %s1453
    %v1455 = vmul.f32 %v1173, %v1454
    %v1456 = vmul.f32 %v1174, %v1454
    %v1459 = vrot.slane %v1455, 1
    %v1460 = vrot.slane %v1456, 1
    %1461 = vrot.lane.b32.xlu0 %v1459, 127
    %v1462 = vpop.permute.xlu0 %1461
    %1463 = vrot.lane.b32.xlu0 %v1460, 127
    %v1464 = vpop.permute.xlu0 %1463
    %v1467 = vadd.f32 %v1395, %v1462
    %v1468 = vadd.f32 %v1396, %v1464
    %s1469 = sld [smem:[#allocation8 + $0x56]]
    %v1470 = vstv %s1469
    %v1471 = vmul.f32 %v1173, %v1470
    %v1472 = vmul.f32 %v1174, %v1470
    %v1475 = vrot.slane %v1471, 1
    %v1476 = vrot.slane %v1472, 1
    %1477 = vrot.lane.b32.xlu0 %v1475, 127
    %v1478 = vpop.permute.xlu0 %1477
    %1479 = vrot.lane.b32.xlu0 %v1476, 127
    %v1480 = vpop.permute.xlu0 %1479
    %v1483 = vadd.f32 %v1409, %v1478
    %v1484 = vadd.f32 %v1410, %v1480
    %s1485 = sld [smem:[#allocation8 + $0x92]]
    %v1486 = vstv %s1485
    %v1487 = vmul.f32 %v1173, %v1486
    %v1488 = vmul.f32 %v1174, %v1486
    %v1491 = vrot.slane %v1487, 1
    %v1492 = vrot.slane %v1488, 1
    %1493 = vrot.lane.b32.xlu0 %v1491, 127
    %v1494 = vpop.permute.xlu0 %1493
    %1495 = vrot.lane.b32.xlu0 %v1492, 127
    %v1496 = vpop.permute.xlu0 %1495
    %v1499 = vadd.f32 %v1423, %v1494
    %v1500 = vadd.f32 %v1424, %v1496
    %s1501 = sld [smem:[#allocation8 + $0xce]]
    %v1502 = vstv %s1501
    %v1503 = vmul.f32 %v1173, %v1502
    %v1504 = vmul.f32 %v1174, %v1502
    %v1507 = vrot.slane %v1503, 1
    %v1508 = vrot.slane %v1504, 1
    %1509 = vrot.lane.b32.xlu0 %v1507, 127
    %v1510 = vpop.permute.xlu0 %1509
    %1511 = vrot.lane.b32.xlu0 %v1508, 127
    %v1512 = vpop.permute.xlu0 %1511
    %v1515 = vadd.f32 %v1437, %v1510
    %v1516 = vadd.f32 %v1438, %v1512
    %s1517 = sld [smem:[#allocation8 + $0x10a]]
    %v1518 = vstv %s1517
    %v1519 = vmul.f32 %v1173, %v1518
    %v1520 = vmul.f32 %v1174, %v1518
    %v1523 = vrot.slane %v1519, 1
    %v1524 = vrot.slane %v1520, 1
    %1525 = vrot.lane.b32.xlu0 %v1523, 127
    %v1526 = vpop.permute.xlu0 %1525
    %1527 = vrot.lane.b32.xlu0 %v1524, 127
    %v1528 = vpop.permute.xlu0 %1527
    %v1531 = vadd.f32 %v1451, %v1526
    %v1532 = vadd.f32 %v1452, %v1528
    %s1533 = sld [smem:[#allocation8 + $0x11]]
    %v1534 = vstv %s1533
    %v1535 = vmul.f32 %v1173, %v1534
    %v1536 = vmul.f32 %v1174, %v1534
    %1539 = vrot.lane.b32.xlu0 %v1535, 126
    %v1540 = vpop.permute.xlu0 %1539
    %1541 = vrot.lane.b32.xlu0 %v1536, 126
    %v1542 = vpop.permute.xlu0 %1541
    %v1545 = vadd.f32 %v1467, %v1540
    %v1546 = vadd.f32 %v1468, %v1542
    %s1547 = sld [smem:[#allocation8 + $0x4d]]
    %v1548 = vstv %s1547
    %v1549 = vmul.f32 %v1173, %v1548
    %v1550 = vmul.f32 %v1174, %v1548
    %1553 = vrot.lane.b32.xlu0 %v1549, 126
    %v1554 = vpop.permute.xlu0 %1553
    %1555 = vrot.lane.b32.xlu0 %v1550, 126
    %v1556 = vpop.permute.xlu0 %1555
    %v1559 = vadd.f32 %v1483, %v1554
    %v1560 = vadd.f32 %v1484, %v1556
    %s1561 = sld [smem:[#allocation8 + $0x89]]
    %v1562 = vstv %s1561
    %v1563 = vmul.f32 %v1173, %v1562
    %v1564 = vmul.f32 %v1174, %v1562
    %1567 = vrot.lane.b32.xlu0 %v1563, 126
    %v1568 = vpop.permute.xlu0 %1567
    %1569 = vrot.lane.b32.xlu0 %v1564, 126
    %v1570 = vpop.permute.xlu0 %1569
    %v1573 = vadd.f32 %v1499, %v1568
    %v1574 = vadd.f32 %v1500, %v1570
    %s1575 = sld [smem:[#allocation8 + $0xc5]]
    %v1576 = vstv %s1575
    %v1577 = vmul.f32 %v1173, %v1576
    %v1578 = vmul.f32 %v1174, %v1576
    %1581 = vrot.lane.b32.xlu0 %v1577, 126
    %v1582 = vpop.permute.xlu0 %1581
    %1583 = vrot.lane.b32.xlu0 %v1578, 126
    %v1584 = vpop.permute.xlu0 %1583
    %v1587 = vadd.f32 %v1515, %v1582
    %v1588 = vadd.f32 %v1516, %v1584
    %s1589 = sld [smem:[#allocation8 + $0x101]]
    %v1590 = vstv %s1589
    %v1591 = vmul.f32 %v1173, %v1590
    %v1592 = vmul.f32 %v1174, %v1590
    %1595 = vrot.lane.b32.xlu0 %v1591, 126
    %v1596 = vpop.permute.xlu0 %1595
    %1597 = vrot.lane.b32.xlu0 %v1592, 126
    %v1598 = vpop.permute.xlu0 %1597
    %v1601 = vadd.f32 %v1531, %v1596
    %v1602 = vadd.f32 %v1532, %v1598
    %s1603 = sld [smem:[#allocation8 + $0x16]]
    %v1604 = vstv %s1603
    %v1605 = vmul.f32 %v1191, %v1604
    %v1606 = vmul.f32 %v1192, %v1604
    %1609 = vrot.lane.b32.xlu0 %v1605, 126
    %v1610 = vpop.permute.xlu0 %1609
    %1611 = vrot.lane.b32.xlu0 %v1606, 126
    %v1612 = vpop.permute.xlu0 %1611
    %v1615 = vadd.f32 %v1545, %v1610
    %v1616 = vadd.f32 %v1546, %v1612
    %s1617 = sld [smem:[#allocation8 + $0x52]]
    %v1618 = vstv %s1617
    %v1619 = vmul.f32 %v1191, %v1618
    %v1620 = vmul.f32 %v1192, %v1618
    %1623 = vrot.lane.b32.xlu0 %v1619, 126
    %v1624 = vpop.permute.xlu0 %1623
    %1625 = vrot.lane.b32.xlu0 %v1620, 126
    %v1626 = vpop.permute.xlu0 %1625
    %v1629 = vadd.f32 %v1559, %v1624
    %v1630 = vadd.f32 %v1560, %v1626
    %s1631 = sld [smem:[#allocation8 + $0x8e]]
    %v1632 = vstv %s1631
    %v1633 = vmul.f32 %v1191, %v1632
    %v1634 = vmul.f32 %v1192, %v1632
    %1637 = vrot.lane.b32.xlu0 %v1633, 126
    %v1638 = vpop.permute.xlu0 %1637
    %1639 = vrot.lane.b32.xlu0 %v1634, 126
    %v1640 = vpop.permute.xlu0 %1639
    %v1643 = vadd.f32 %v1573, %v1638
    %v1644 = vadd.f32 %v1574, %v1640
    %s1645 = sld [smem:[#allocation8 + $0xca]]
    %v1646 = vstv %s1645
    %v1647 = vmul.f32 %v1191, %v1646
    %v1648 = vmul.f32 %v1192, %v1646
    %1651 = vrot.lane.b32.xlu0 %v1647, 126
    %v1652 = vpop.permute.xlu0 %1651
    %1653 = vrot.lane.b32.xlu0 %v1648, 126
    %v1654 = vpop.permute.xlu0 %1653
    %v1657 = vadd.f32 %v1587, %v1652
    %v1658 = vadd.f32 %v1588, %v1654
    %s1659 = sld [smem:[#allocation8 + $0x106]]
    %v1660 = vstv %s1659
    %v1661 = vmul.f32 %v1191, %v1660
    %v1662 = vmul.f32 %v1192, %v1660
    %1665 = vrot.lane.b32.xlu0 %v1661, 126
    %v1666 = vpop.permute.xlu0 %1665
    %1667 = vrot.lane.b32.xlu0 %v1662, 126
    %v1668 = vpop.permute.xlu0 %1667
    %v1671 = vadd.f32 %v1601, %v1666
    %v1672 = vadd.f32 %v1602, %v1668
    %s1673 = sld [smem:[#allocation8 + $0x1b]]
    %v1674 = vstv %s1673
    %v1675 = vmul.f32 %v1173, %v1674
    %v1676 = vmul.f32 %v1174, %v1674
    %v1679 = vrot.slane %v1675, 1
    %v1680 = vrot.slane %v1676, 1
    %1681 = vrot.lane.b32.xlu0 %v1679, 126
    %v1682 = vpop.permute.xlu0 %1681
    %1683 = vrot.lane.b32.xlu0 %v1680, 126
    %v1684 = vpop.permute.xlu0 %1683
    %v1687 = vadd.f32 %v1615, %v1682
    %v1688 = vadd.f32 %v1616, %v1684
    %s1689 = sld [smem:[#allocation8 + $0x57]]
    %v1690 = vstv %s1689
    %v1691 = vmul.f32 %v1173, %v1690
    %v1692 = vmul.f32 %v1174, %v1690
    %v1695 = vrot.slane %v1691, 1
    %v1696 = vrot.slane %v1692, 1
    %1697 = vrot.lane.b32.xlu0 %v1695, 126
    %v1698 = vpop.permute.xlu0 %1697
    %1699 = vrot.lane.b32.xlu0 %v1696, 126
    %v1700 = vpop.permute.xlu0 %1699
    %v1703 = vadd.f32 %v1629, %v1698
    %v1704 = vadd.f32 %v1630, %v1700
    %s1705 = sld [smem:[#allocation8 + $0x93]]
    %v1706 = vstv %s1705
    %v1707 = vmul.f32 %v1173, %v1706
    %v1708 = vmul.f32 %v1174, %v1706
    %v1711 = vrot.slane %v1707, 1
    %v1712 = vrot.slane %v1708, 1
    %1713 = vrot.lane.b32.xlu0 %v1711, 126
    %v1714 = vpop.permute.xlu0 %1713
    %1715 = vrot.lane.b32.xlu0 %v1712, 126
    %v1716 = vpop.permute.xlu0 %1715
    %v1719 = vadd.f32 %v1643, %v1714
    %v1720 = vadd.f32 %v1644, %v1716
    %s1721 = sld [smem:[#allocation8 + $0xcf]]
    %v1722 = vstv %s1721
    %v1723 = vmul.f32 %v1173, %v1722
    %v1724 = vmul.f32 %v1174, %v1722
    %v1727 = vrot.slane %v1723, 1
    %v1728 = vrot.slane %v1724, 1
    %1729 = vrot.lane.b32.xlu0 %v1727, 126
    %v1730 = vpop.permute.xlu0 %1729
    %1731 = vrot.lane.b32.xlu0 %v1728, 126
    %v1732 = vpop.permute.xlu0 %1731
    %v1735 = vadd.f32 %v1657, %v1730
    %v1736 = vadd.f32 %v1658, %v1732
    %s1737 = sld [smem:[#allocation8 + $0x10b]]
    %v1738 = vstv %s1737
    %v1739 = vmul.f32 %v1173, %v1738
    %v1740 = vmul.f32 %v1174, %v1738
    %v1743 = vrot.slane %v1739, 1
    %v1744 = vrot.slane %v1740, 1
    %1745 = vrot.lane.b32.xlu0 %v1743, 126
    %v1746 = vpop.permute.xlu0 %1745
    %1747 = vrot.lane.b32.xlu0 %v1744, 126
    %v1748 = vpop.permute.xlu0 %1747
    %v1751 = vadd.f32 %v1671, %v1746
    %v1752 = vadd.f32 %v1672, %v1748
    %s1753 = sld [smem:[#allocation8 + $0x12]]
    %v1754 = vstv %s1753
    %v1755 = vmul.f32 %v1173, %v1754
    %v1756 = vmul.f32 %v1174, %v1754
    %1759 = vrot.lane.b32.xlu0 %v1755, 125
    %v1760 = vpop.permute.xlu0 %1759
    %1761 = vrot.lane.b32.xlu0 %v1756, 125
    %v1762 = vpop.permute.xlu0 %1761
    %v1765 = vadd.f32 %v1687, %v1760
    %v1766 = vadd.f32 %v1688, %v1762
    %s1767 = sld [smem:[#allocation8 + $0x4e]]
    %v1768 = vstv %s1767
    %v1769 = vmul.f32 %v1173, %v1768
    %v1770 = vmul.f32 %v1174, %v1768
    %1773 = vrot.lane.b32.xlu0 %v1769, 125
    %v1774 = vpop.permute.xlu0 %1773
    %1775 = vrot.lane.b32.xlu0 %v1770, 125
    %v1776 = vpop.permute.xlu0 %1775
    %v1779 = vadd.f32 %v1703, %v1774
    %v1780 = vadd.f32 %v1704, %v1776
    %s1781 = sld [smem:[#allocation8 + $0x8a]]
    %v1782 = vstv %s1781
    %v1783 = vmul.f32 %v1173, %v1782
    %v1784 = vmul.f32 %v1174, %v1782
    %1787 = vrot.lane.b32.xlu0 %v1783, 125
    %v1788 = vpop.permute.xlu0 %1787
    %1789 = vrot.lane.b32.xlu0 %v1784, 125
    %v1790 = vpop.permute.xlu0 %1789
    %v1793 = vadd.f32 %v1719, %v1788
    %v1794 = vadd.f32 %v1720, %v1790
    %s1795 = sld [smem:[#allocation8 + $0xc6]]
    %v1796 = vstv %s1795
    %v1797 = vmul.f32 %v1173, %v1796
    %v1798 = vmul.f32 %v1174, %v1796
    %1801 = vrot.lane.b32.xlu0 %v1797, 125
    %v1802 = vpop.permute.xlu0 %1801
    %1803 = vrot.lane.b32.xlu0 %v1798, 125
    %v1804 = vpop.permute.xlu0 %1803
    %v1807 = vadd.f32 %v1735, %v1802
    %v1808 = vadd.f32 %v1736, %v1804
    %s1809 = sld [smem:[#allocation8 + $0x102]]
    %v1810 = vstv %s1809
    %v1811 = vmul.f32 %v1173, %v1810
    %v1812 = vmul.f32 %v1174, %v1810
    %1815 = vrot.lane.b32.xlu0 %v1811, 125
    %v1816 = vpop.permute.xlu0 %1815
    %1817 = vrot.lane.b32.xlu0 %v1812, 125
    %v1818 = vpop.permute.xlu0 %1817
    %v1821 = vadd.f32 %v1751, %v1816
    %v1822 = vadd.f32 %v1752, %v1818
    %s1823 = sld [smem:[#allocation8 + $0x17]]
    %v1824 = vstv %s1823
    %v1825 = vmul.f32 %v1191, %v1824
    %v1826 = vmul.f32 %v1192, %v1824
    %1829 = vrot.lane.b32.xlu0 %v1825, 125
    %v1830 = vpop.permute.xlu0 %1829
    %1831 = vrot.lane.b32.xlu0 %v1826, 125
    %v1832 = vpop.permute.xlu0 %1831
    %v1835 = vadd.f32 %v1765, %v1830
    %v1836 = vadd.f32 %v1766, %v1832
    %s1837 = sld [smem:[#allocation8 + $0x53]]
    %v1838 = vstv %s1837
    %v1839 = vmul.f32 %v1191, %v1838
    %v1840 = vmul.f32 %v1192, %v1838
    %1843 = vrot.lane.b32.xlu0 %v1839, 125
    %v1844 = vpop.permute.xlu0 %1843
    %1845 = vrot.lane.b32.xlu0 %v1840, 125
    %v1846 = vpop.permute.xlu0 %1845
    %v1849 = vadd.f32 %v1779, %v1844
    %v1850 = vadd.f32 %v1780, %v1846
    %s1851 = sld [smem:[#allocation8 + $0x8f]]
    %v1852 = vstv %s1851
    %v1853 = vmul.f32 %v1191, %v1852
    %v1854 = vmul.f32 %v1192, %v1852
    %1857 = vrot.lane.b32.xlu0 %v1853, 125
    %v1858 = vpop.permute.xlu0 %1857
    %1859 = vrot.lane.b32.xlu0 %v1854, 125
    %v1860 = vpop.permute.xlu0 %1859
    %v1863 = vadd.f32 %v1793, %v1858
    %v1864 = vadd.f32 %v1794, %v1860
    %s1865 = sld [smem:[#allocation8 + $0xcb]]
    %v1866 = vstv %s1865
    %v1867 = vmul.f32 %v1191, %v1866
    %v1868 = vmul.f32 %v1192, %v1866
    %1871 = vrot.lane.b32.xlu0 %v1867, 125
    %v1872 = vpop.permute.xlu0 %1871
    %1873 = vrot.lane.b32.xlu0 %v1868, 125
    %v1874 = vpop.permute.xlu0 %1873
    %v1877 = vadd.f32 %v1807, %v1872
    %v1878 = vadd.f32 %v1808, %v1874
    %s1879 = sld [smem:[#allocation8 + $0x107]]
    %v1880 = vstv %s1879
    %v1881 = vmul.f32 %v1191, %v1880
    %v1882 = vmul.f32 %v1192, %v1880
    %1885 = vrot.lane.b32.xlu0 %v1881, 125
    %v1886 = vpop.permute.xlu0 %1885
    %1887 = vrot.lane.b32.xlu0 %v1882, 125
    %v1888 = vpop.permute.xlu0 %1887
    %v1891 = vadd.f32 %v1821, %v1886
    %v1892 = vadd.f32 %v1822, %v1888
    %s1893 = sld [smem:[#allocation8 + $0x1c]]
    %v1894 = vstv %s1893
    %v1895 = vmul.f32 %v1173, %v1894
    %v1896 = vmul.f32 %v1174, %v1894
    %v1899 = vrot.slane %v1895, 1
    %v1900 = vrot.slane %v1896, 1
    %1901 = vrot.lane.b32.xlu0 %v1899, 125
    %v1902 = vpop.permute.xlu0 %1901
    %1903 = vrot.lane.b32.xlu0 %v1900, 125
    %v1904 = vpop.permute.xlu0 %1903
    %v1907 = vadd.f32 %v1835, %v1902
    %v1908 = vadd.f32 %v1836, %v1904
    %s1909 = sld [smem:[#allocation8 + $0x58]]
    %v1910 = vstv %s1909
    %v1911 = vmul.f32 %v1173, %v1910
    %v1912 = vmul.f32 %v1174, %v1910
    %v1915 = vrot.slane %v1911, 1
    %v1916 = vrot.slane %v1912, 1
    %1917 = vrot.lane.b32.xlu0 %v1915, 125
    %v1918 = vpop.permute.xlu0 %1917
    %1919 = vrot.lane.b32.xlu0 %v1916, 125
    %v1920 = vpop.permute.xlu0 %1919
    %v1923 = vadd.f32 %v1849, %v1918
    %v1924 = vadd.f32 %v1850, %v1920
    %s1925 = sld [smem:[#allocation8 + $0x94]]
    %v1926 = vstv %s1925
    %v1927 = vmul.f32 %v1173, %v1926
    %v1928 = vmul.f32 %v1174, %v1926
    %v1931 = vrot.slane %v1927, 1
    %v1932 = vrot.slane %v1928, 1
    %1933 = vrot.lane.b32.xlu0 %v1931, 125
    %v1934 = vpop.permute.xlu0 %1933
    %1935 = vrot.lane.b32.xlu0 %v1932, 125
    %v1936 = vpop.permute.xlu0 %1935
    %v1939 = vadd.f32 %v1863, %v1934
    %v1940 = vadd.f32 %v1864, %v1936
    %s1941 = sld [smem:[#allocation8 + $0xd0]]
    %v1942 = vstv %s1941
    %v1943 = vmul.f32 %v1173, %v1942
    %v1944 = vmul.f32 %v1174, %v1942
    %v1947 = vrot.slane %v1943, 1
    %v1948 = vrot.slane %v1944, 1
    %1949 = vrot.lane.b32.xlu0 %v1947, 125
    %v1950 = vpop.permute.xlu0 %1949
    %1951 = vrot.lane.b32.xlu0 %v1948, 125
    %v1952 = vpop.permute.xlu0 %1951
    %v1955 = vadd.f32 %v1877, %v1950
    %v1956 = vadd.f32 %v1878, %v1952
    %s1957 = sld [smem:[#allocation8 + $0x10c]]
    %v1958 = vstv %s1957
    %v1959 = vmul.f32 %v1173, %v1958
    %v1960 = vmul.f32 %v1174, %v1958
    %v1963 = vrot.slane %v1959, 1
    %v1964 = vrot.slane %v1960, 1
    %1965 = vrot.lane.b32.xlu0 %v1963, 125
    %v1966 = vpop.permute.xlu0 %1965
    %1967 = vrot.lane.b32.xlu0 %v1964, 125
    %v1968 = vpop.permute.xlu0 %1967
    %v1971 = vadd.f32 %v1891, %v1966
    %v1972 = vadd.f32 %v1892, %v1968
    %s1973 = sld [smem:[#allocation8 + $0x13]]
    %v1974 = vstv %s1973
    %v1975 = vmul.f32 %v1173, %v1974
    %v1976 = vmul.f32 %v1174, %v1974
    %1979 = vrot.lane.b32.xlu0 %v1975, 124
    %v1980 = vpop.permute.xlu0 %1979
    %1981 = vrot.lane.b32.xlu0 %v1976, 124
    %v1982 = vpop.permute.xlu0 %1981
    %v1985 = vadd.f32 %v1907, %v1980
    %v1986 = vadd.f32 %v1908, %v1982
    %s1987 = sld [smem:[#allocation8 + $0x4f]]
    %v1988 = vstv %s1987
    %v1989 = vmul.f32 %v1173, %v1988
    %v1990 = vmul.f32 %v1174, %v1988
    %1993 = vrot.lane.b32.xlu0 %v1989, 124
    %v1994 = vpop.permute.xlu0 %1993
    %1995 = vrot.lane.b32.xlu0 %v1990, 124
    %v1996 = vpop.permute.xlu0 %1995
    %v1999 = vadd.f32 %v1923, %v1994
    %v2000 = vadd.f32 %v1924, %v1996
    %s2001 = sld [smem:[#allocation8 + $0x8b]]
    %v2002 = vstv %s2001
    %v2003 = vmul.f32 %v1173, %v2002
    %v2004 = vmul.f32 %v1174, %v2002
    %2007 = vrot.lane.b32.xlu0 %v2003, 124
    %v2008 = vpop.permute.xlu0 %2007
    %2009 = vrot.lane.b32.xlu0 %v2004, 124
    %v2010 = vpop.permute.xlu0 %2009
    %v2013 = vadd.f32 %v1939, %v2008
    %v2014 = vadd.f32 %v1940, %v2010
    %s2015 = sld [smem:[#allocation8 + $0xc7]]
    %v2016 = vstv %s2015
    %v2017 = vmul.f32 %v1173, %v2016
    %v2018 = vmul.f32 %v1174, %v2016
    %2021 = vrot.lane.b32.xlu0 %v2017, 124
    %v2022 = vpop.permute.xlu0 %2021
    %2023 = vrot.lane.b32.xlu0 %v2018, 124
    %v2024 = vpop.permute.xlu0 %2023
    %v2027 = vadd.f32 %v1955, %v2022
    %v2028 = vadd.f32 %v1956, %v2024
    %s2029 = sld [smem:[#allocation8 + $0x103]]
    %v2030 = vstv %s2029
    %v2031 = vmul.f32 %v1173, %v2030
    %v2032 = vmul.f32 %v1174, %v2030
    %2035 = vrot.lane.b32.xlu0 %v2031, 124
    %v2036 = vpop.permute.xlu0 %2035
    %2037 = vrot.lane.b32.xlu0 %v2032, 124
    %v2038 = vpop.permute.xlu0 %2037
    %v2041 = vadd.f32 %v1971, %v2036
    %v2042 = vadd.f32 %v1972, %v2038
    %s2043 = sld [smem:[#allocation8 + $0x18]]
    %v2044 = vstv %s2043
    %v2045 = vmul.f32 %v1191, %v2044
    %v2046 = vmul.f32 %v1192, %v2044
    %2049 = vrot.lane.b32.xlu0 %v2045, 124
    %v2050 = vpop.permute.xlu0 %2049
    %2051 = vrot.lane.b32.xlu0 %v2046, 124
    %v2052 = vpop.permute.xlu0 %2051
    %v2055 = vadd.f32 %v1985, %v2050
    %v2056 = vadd.f32 %v1986, %v2052
    %s2057 = sld [smem:[#allocation8 + $0x54]]
    %v2058 = vstv %s2057
    %v2059 = vmul.f32 %v1191, %v2058
    %v2060 = vmul.f32 %v1192, %v2058
    %2063 = vrot.lane.b32.xlu0 %v2059, 124
    %v2064 = vpop.permute.xlu0 %2063
    %2065 = vrot.lane.b32.xlu0 %v2060, 124
    %v2066 = vpop.permute.xlu0 %2065
    %v2069 = vadd.f32 %v1999, %v2064
    %v2070 = vadd.f32 %v2000, %v2066
    %s2071 = sld [smem:[#allocation8 + $0x90]]
    %v2072 = vstv %s2071
    %v2073 = vmul.f32 %v1191, %v2072
    %v2074 = vmul.f32 %v1192, %v2072
    %2077 = vrot.lane.b32.xlu0 %v2073, 124
    %v2078 = vpop.permute.xlu0 %2077
    %2079 = vrot.lane.b32.xlu0 %v2074, 124
    %v2080 = vpop.permute.xlu0 %2079
    %v2083 = vadd.f32 %v2013, %v2078
    %v2084 = vadd.f32 %v2014, %v2080
    %s2085 = sld [smem:[#allocation8 + $0xcc]]
    %v2086 = vstv %s2085
    %v2087 = vmul.f32 %v1191, %v2086
    %v2088 = vmul.f32 %v1192, %v2086
    %2091 = vrot.lane.b32.xlu0 %v2087, 124
    %v2092 = vpop.permute.xlu0 %2091
    %2093 = vrot.lane.b32.xlu0 %v2088, 124
    %v2094 = vpop.permute.xlu0 %2093
    %v2097 = vadd.f32 %v2027, %v2092
    %v2098 = vadd.f32 %v2028, %v2094
    %s2099 = sld [smem:[#allocation8 + $0x108]]
    %v2100 = vstv %s2099
    %v2101 = vmul.f32 %v1191, %v2100
    %v2102 = vmul.f32 %v1192, %v2100
    %2105 = vrot.lane.b32.xlu0 %v2101, 124
    %v2106 = vpop.permute.xlu0 %2105
    %2107 = vrot.lane.b32.xlu0 %v2102, 124
    %v2108 = vpop.permute.xlu0 %2107
    %v2111 = vadd.f32 %v2041, %v2106
    %v2112 = vadd.f32 %v2042, %v2108
    %s2113 = sld [smem:[#allocation8 + $0x1d]]
    %v2114 = vstv %s2113
    %v2115 = vmul.f32 %v1173, %v2114
    %v2116 = vmul.f32 %v1174, %v2114
    %v2119 = vrot.slane %v2115, 1
    %v2120 = vrot.slane %v2116, 1
    %2121 = vrot.lane.b32.xlu0 %v2119, 124
    %v2122 = vpop.permute.xlu0 %2121
    %2123 = vrot.lane.b32.xlu0 %v2120, 124
    %v2124 = vpop.permute.xlu0 %2123
    %v2127 = vadd.f32 %v2055, %v2122
    %v2128 = vadd.f32 %v2056, %v2124
    %s2129 = sld [smem:[#allocation8 + $0x59]]
    %v2130 = vstv %s2129
    %v2131 = vmul.f32 %v1173, %v2130
    %v2132 = vmul.f32 %v1174, %v2130
    %v2135 = vrot.slane %v2131, 1
    %v2136 = vrot.slane %v2132, 1
    %2137 = vrot.lane.b32.xlu0 %v2135, 124
    %v2138 = vpop.permute.xlu0 %2137
    %2139 = vrot.lane.b32.xlu0 %v2136, 124
    %v2140 = vpop.permute.xlu0 %2139
    %v2143 = vadd.f32 %v2069, %v2138
    %v2144 = vadd.f32 %v2070, %v2140
    %s2145 = sld [smem:[#allocation8 + $0x95]]
    %v2146 = vstv %s2145
    %v2147 = vmul.f32 %v1173, %v2146
    %v2148 = vmul.f32 %v1174, %v2146
    %v2151 = vrot.slane %v2147, 1
    %v2152 = vrot.slane %v2148, 1
    %2153 = vrot.lane.b32.xlu0 %v2151, 124
    %v2154 = vpop.permute.xlu0 %2153
    %2155 = vrot.lane.b32.xlu0 %v2152, 124
    %v2156 = vpop.permute.xlu0 %2155
    %v2159 = vadd.f32 %v2083, %v2154
    %v2160 = vadd.f32 %v2084, %v2156
    %s2161 = sld [smem:[#allocation8 + $0xd1]]
    %v2162 = vstv %s2161
    %v2163 = vmul.f32 %v1173, %v2162
    %v2164 = vmul.f32 %v1174, %v2162
    %v2167 = vrot.slane %v2163, 1
    %v2168 = vrot.slane %v2164, 1
    %2169 = vrot.lane.b32.xlu0 %v2167, 124
    %v2170 = vpop.permute.xlu0 %2169
    %2171 = vrot.lane.b32.xlu0 %v2168, 124
    %v2172 = vpop.permute.xlu0 %2171
    %v2175 = vadd.f32 %v2097, %v2170
    %v2176 = vadd.f32 %v2098, %v2172
    %s2177 = sld [smem:[#allocation8 + $0x10d]]
    %v2178 = vstv %s2177
    %v2179 = vmul.f32 %v1173, %v2178
    %v2180 = vmul.f32 %v1174, %v2178
    %v2183 = vrot.slane %v2179, 1
    %v2184 = vrot.slane %v2180, 1
    %2185 = vrot.lane.b32.xlu0 %v2183, 124
    %v2186 = vpop.permute.xlu0 %2185
    %2187 = vrot.lane.b32.xlu0 %v2184, 124
    %v2188 = vpop.permute.xlu0 %2187
    %v2191 = vadd.f32 %v2111, %v2186
    %v2192 = vadd.f32 %v2112, %v2188
    %s2193 = sld [smem:[#allocation6 + $0x2]]
    %v2194 = vstv %s2193
    %v2195 = vmul.f32 %v80, %v2194
    %v2196 = vmul.f32 %v88, %v2194
    %s2197 = sld [smem:[#allocation6 + $0x6]]
    %v2198 = vstv %s2197
    %v2199 = vmul.f32 %v82, %v2198
    %v2200 = vmul.f32 %v90, %v2198
    %v2201 = vadd.f32 %v2195, %v2199
    %v2202 = vadd.f32 %v2196, %v2200
    %s2203 = sld [smem:[#allocation6 + $0xa]]
    %v2204 = vstv %s2203
    %v2205 = vmul.f32 %v84, %v2204
    %v2206 = vmul.f32 %v92, %v2204
    %v2207 = vadd.f32 %v2201, %v2205
    %v2208 = vadd.f32 %v2202, %v2206
    %s2209 = sld [smem:[#allocation6 + $0xe]]
    %v2210 = vstv %s2209
    %v2211 = vmul.f32 %v86, %v2210
    %v2212 = vmul.f32 %v94, %v2210
    %v2213 = vadd.f32 %v2207, %v2211
    %v2214 = vadd.f32 %v2208, %v2212
    %s2215 = sld [smem:[#allocation7 + $0x2]]
    %v2216 = vstv %s2215
    %v2217 = vadd.f32 %v2213, %v2216
    %v2218 = vadd.f32 %v2214, %v2216
    %v2219 = vtanh.pop %v2217
    %v2220 = vtanh.pop %v2218
    %v2221 = vmul.f32 %v96, %v2194
    %v2222 = vmul.f32 %v104, %v2194
    %v2223 = vmul.f32 %v98, %v2198
    %v2224 = vmul.f32 %v106, %v2198
    %v2225 = vadd.f32 %v2221, %v2223
    %v2226 = vadd.f32 %v2222, %v2224
    %v2227 = vmul.f32 %v100, %v2204
    %v2228 = vmul.f32 %v108, %v2204
    %v2229 = vadd.f32 %v2225, %v2227
    %v2230 = vadd.f32 %v2226, %v2228
    %v2231 = vmul.f32 %v102, %v2210
    %v2232 = vmul.f32 %v110, %v2210
    %v2233 = vadd.f32 %v2229, %v2231
    %v2234 = vadd.f32 %v2230, %v2232
    %v2235 = vadd.f32 %v2233, %v2216
    %v2236 = vadd.f32 %v2234, %v2216
    %v2237 = vtanh.pop %v2235
    %v2238 = vtanh.pop %v2236
    %s2239 = sld [smem:[#allocation8 + $0x1e]]
    %v2240 = vstv %s2239
    %v2241 = vmul.f32 %v2219, %v2240
    %v2242 = vmul.f32 %v2220, %v2240
    %v2243 = vadd.f32 %v2127, %v2241
    %v2244 = vadd.f32 %v2128, %v2242
    %s2245 = sld [smem:[#allocation8 + $0x5a]]
    %v2246 = vstv %s2245
    %v2247 = vmul.f32 %v2219, %v2246
    %v2248 = vmul.f32 %v2220, %v2246
    %v2249 = vadd.f32 %v2143, %v2247
    %v2250 = vadd.f32 %v2144, %v2248
    %s2251 = sld [smem:[#allocation8 + $0x96]]
    %v2252 = vstv %s2251
    %v2253 = vmul.f32 %v2219, %v2252
    %v2254 = vmul.f32 %v2220, %v2252
    %v2255 = vadd.f32 %v2159, %v2253
    %v2256 = vadd.f32 %v2160, %v2254
    %s2257 = sld [smem:[#allocation8 + $0xd2]]
    %v2258 = vstv %s2257
    %v2259 = vmul.f32 %v2219, %v2258
    %v2260 = vmul.f32 %v2220, %v2258
    %v2261 = vadd.f32 %v2175, %v2259
    %v2262 = vadd.f32 %v2176, %v2260
    %s2263 = sld [smem:[#allocation8 + $0x10e]]
    %v2264 = vstv %s2263
    %v2265 = vmul.f32 %v2219, %v2264
    %v2266 = vmul.f32 %v2220, %v2264
    %v2267 = vadd.f32 %v2191, %v2265
    %v2268 = vadd.f32 %v2192, %v2266
    %s2269 = sld [smem:[#allocation8 + $0x23]]
    %v2270 = vstv %s2269
    %v2271 = vmul.f32 %v2237, %v2270
    %v2272 = vmul.f32 %v2238, %v2270
    %v2273 = vadd.f32 %v2243, %v2271
    %v2274 = vadd.f32 %v2244, %v2272
    %s2275 = sld [smem:[#allocation8 + $0x5f]]
    %v2276 = vstv %s2275
    %v2277 = vmul.f32 %v2237, %v2276
    %v2278 = vmul.f32 %v2238, %v2276
    %v2279 = vadd.f32 %v2249, %v2277
    %v2280 = vadd.f32 %v2250, %v2278
    %s2281 = sld [smem:[#allocation8 + $0x9b]]
    %v2282 = vstv %s2281
    %v2283 = vmul.f32 %v2237, %v2282
    %v2284 = vmul.f32 %v2238, %v2282
    %v2285 = vadd.f32 %v2255, %v2283
    %v2286 = vadd.f32 %v2256, %v2284
    %s2287 = sld [smem:[#allocation8 + $0xd7]]
    %v2288 = vstv %s2287
    %v2289 = vmul.f32 %v2237, %v2288
    %v2290 = vmul.f32 %v2238, %v2288
    %v2291 = vadd.f32 %v2261, %v2289
    %v2292 = vadd.f32 %v2262, %v2290
    %s2293 = sld [smem:[#allocation8 + $0x113]]
    %v2294 = vstv %s2293
    %v2295 = vmul.f32 %v2237, %v2294
    %v2296 = vmul.f32 %v2238, %v2294
    %v2297 = vadd.f32 %v2267, %v2295
    %v2298 = vadd.f32 %v2268, %v2296
    %s2299 = sld [smem:[#allocation8 + $0x28]]
    %v2300 = vstv %s2299
    %v2301 = vmul.f32 %v2219, %v2300
    %v2302 = vmul.f32 %v2220, %v2300
    %v2305 = vrot.slane %v2301, 1
    %v2306 = vrot.slane %v2302, 1
    %v2309 = vadd.f32 %v2273, %v2305
    %v2310 = vadd.f32 %v2274, %v2306
    %s2311 = sld [smem:[#allocation8 + $0x64]]
    %v2312 = vstv %s2311
    %v2313 = vmul.f32 %v2219, %v2312
    %v2314 = vmul.f32 %v2220, %v2312
    %v2317 = vrot.slane %v2313, 1
    %v2318 = vrot.slane %v2314, 1
    %v2321 = vadd.f32 %v2279, %v2317
    %v2322 = vadd.f32 %v2280, %v2318
    %s2323 = sld [smem:[#allocation8 + $0xa0]]
    %v2324 = vstv %s2323
    %v2325 = vmul.f32 %v2219, %v2324
    %v2326 = vmul.f32 %v2220, %v2324
    %v2329 = vrot.slane %v2325, 1
    %v2330 = vrot.slane %v2326, 1
    %v2333 = vadd.f32 %v2285, %v2329
    %v2334 = vadd.f32 %v2286, %v2330
    %s2335 = sld [smem:[#allocation8 + $0xdc]]
    %v2336 = vstv %s2335
    %v2337 = vmul.f32 %v2219, %v2336
    %v2338 = vmul.f32 %v2220, %v2336
    %v2341 = vrot.slane %v2337, 1
    %v2342 = vrot.slane %v2338, 1
    %v2345 = vadd.f32 %v2291, %v2341
    %v2346 = vadd.f32 %v2292, %v2342
    %s2347 = sld [smem:[#allocation8 + $0x118]]
    %v2348 = vstv %s2347
    %v2349 = vmul.f32 %v2219, %v2348
    %v2350 = vmul.f32 %v2220, %v2348
    %v2353 = vrot.slane %v2349, 1
    %v2354 = vrot.slane %v2350, 1
    %v2357 = vadd.f32 %v2297, %v2353
    %v2358 = vadd.f32 %v2298, %v2354
    %s2359 = sld [smem:[#allocation8 + $0x1f]]
    %v2360 = vstv %s2359
    %v2361 = vmul.f32 %v2219, %v2360
    %v2362 = vmul.f32 %v2220, %v2360
    %2365 = vrot.lane.b32.xlu0 %v2361, 127
    %v2366 = vpop.permute.xlu0 %2365
    %2367 = vrot.lane.b32.xlu0 %v2362, 127
    %v2368 = vpop.permute.xlu0 %2367
    %v2371 = vadd.f32 %v2309, %v2366
    %v2372 = vadd.f32 %v2310, %v2368
    %s2373 = sld [smem:[#allocation8 + $0x5b]]
    %v2374 = vstv %s2373
    %v2375 = vmul.f32 %v2219, %v2374
    %v2376 = vmul.f32 %v2220, %v2374
    %2379 = vrot.lane.b32.xlu0 %v2375, 127
    %v2380 = vpop.permute.xlu0 %2379
    %2381 = vrot.lane.b32.xlu0 %v2376, 127
    %v2382 = vpop.permute.xlu0 %2381
    %v2385 = vadd.f32 %v2321, %v2380
    %v2386 = vadd.f32 %v2322, %v2382
    %s2387 = sld [smem:[#allocation8 + $0x97]]
    %v2388 = vstv %s2387
    %v2389 = vmul.f32 %v2219, %v2388
    %v2390 = vmul.f32 %v2220, %v2388
    %2393 = vrot.lane.b32.xlu0 %v2389, 127
    %v2394 = vpop.permute.xlu0 %2393
    %2395 = vrot.lane.b32.xlu0 %v2390, 127
    %v2396 = vpop.permute.xlu0 %2395
    %v2399 = vadd.f32 %v2333, %v2394
    %v2400 = vadd.f32 %v2334, %v2396
    %s2401 = sld [smem:[#allocation8 + $0xd3]]
    %v2402 = vstv %s2401
    %v2403 = vmul.f32 %v2219, %v2402
    %v2404 = vmul.f32 %v2220, %v2402
    %2407 = vrot.lane.b32.xlu0 %v2403, 127
    %v2408 = vpop.permute.xlu0 %2407
    %2409 = vrot.lane.b32.xlu0 %v2404, 127
    %v2410 = vpop.permute.xlu0 %2409
    %v2413 = vadd.f32 %v2345, %v2408
    %v2414 = vadd.f32 %v2346, %v2410
    %s2415 = sld [smem:[#allocation8 + $0x10f]]
    %v2416 = vstv %s2415
    %v2417 = vmul.f32 %v2219, %v2416
    %v2418 = vmul.f32 %v2220, %v2416
    %2421 = vrot.lane.b32.xlu0 %v2417, 127
    %v2422 = vpop.permute.xlu0 %2421
    %2423 = vrot.lane.b32.xlu0 %v2418, 127
    %v2424 = vpop.permute.xlu0 %2423
    %v2427 = vadd.f32 %v2357, %v2422
    %v2428 = vadd.f32 %v2358, %v2424
    %s2429 = sld [smem:[#allocation8 + $0x24]]
    %v2430 = vstv %s2429
    %v2431 = vmul.f32 %v2237, %v2430
    %v2432 = vmul.f32 %v2238, %v2430
    %2435 = vrot.lane.b32.xlu0 %v2431, 127
    %v2436 = vpop.permute.xlu0 %2435
    %2437 = vrot.lane.b32.xlu0 %v2432, 127
    %v2438 = vpop.permute.xlu0 %2437
    %v2441 = vadd.f32 %v2371, %v2436
    %v2442 = vadd.f32 %v2372, %v2438
    %s2443 = sld [smem:[#allocation8 + $0x60]]
    %v2444 = vstv %s2443
    %v2445 = vmul.f32 %v2237, %v2444
    %v2446 = vmul.f32 %v2238, %v2444
    %2449 = vrot.lane.b32.xlu0 %v2445, 127
    %v2450 = vpop.permute.xlu0 %2449
    %2451 = vrot.lane.b32.xlu0 %v2446, 127
    %v2452 = vpop.permute.xlu0 %2451
    %v2455 = vadd.f32 %v2385, %v2450
    %v2456 = vadd.f32 %v2386, %v2452
    %s2457 = sld [smem:[#allocation8 + $0x9c]]
    %v2458 = vstv %s2457
    %v2459 = vmul.f32 %v2237, %v2458
    %v2460 = vmul.f32 %v2238, %v2458
    %2463 = vrot.lane.b32.xlu0 %v2459, 127
    %v2464 = vpop.permute.xlu0 %2463
    %2465 = vrot.lane.b32.xlu0 %v2460, 127
    %v2466 = vpop.permute.xlu0 %2465
    %v2469 = vadd.f32 %v2399, %v2464
    %v2470 = vadd.f32 %v2400, %v2466
    %s2471 = sld [smem:[#allocation8 + $0xd8]]
    %v2472 = vstv %s2471
    %v2473 = vmul.f32 %v2237, %v2472
    %v2474 = vmul.f32 %v2238, %v2472
    %2477 = vrot.lane.b32.xlu0 %v2473, 127
    %v2478 = vpop.permute.xlu0 %2477
    %2479 = vrot.lane.b32.xlu0 %v2474, 127
    %v2480 = vpop.permute.xlu0 %2479
    %v2483 = vadd.f32 %v2413, %v2478
    %v2484 = vadd.f32 %v2414, %v2480
    %s2485 = sld [smem:[#allocation8 + $0x114]]
    %v2486 = vstv %s2485
    %v2487 = vmul.f32 %v2237, %v2486
    %v2488 = vmul.f32 %v2238, %v2486
    %2491 = vrot.lane.b32.xlu0 %v2487, 127
    %v2492 = vpop.permute.xlu0 %2491
    %2493 = vrot.lane.b32.xlu0 %v2488, 127
    %v2494 = vpop.permute.xlu0 %2493
    %v2497 = vadd.f32 %v2427, %v2492
    %v2498 = vadd.f32 %v2428, %v2494
    %s2499 = sld [smem:[#allocation8 + $0x29]]
    %v2500 = vstv %s2499
    %v2501 = vmul.f32 %v2219, %v2500
    %v2502 = vmul.f32 %v2220, %v2500
    %v2505 = vrot.slane %v2501, 1
    %v2506 = vrot.slane %v2502, 1
    %2507 = vrot.lane.b32.xlu0 %v2505, 127
    %v2508 = vpop.permute.xlu0 %2507
    %2509 = vrot.lane.b32.xlu0 %v2506, 127
    %v2510 = vpop.permute.xlu0 %2509
    %v2513 = vadd.f32 %v2441, %v2508
    %v2514 = vadd.f32 %v2442, %v2510
    %s2515 = sld [smem:[#allocation8 + $0x65]]
    %v2516 = vstv %s2515
    %v2517 = vmul.f32 %v2219, %v2516
    %v2518 = vmul.f32 %v2220, %v2516
    %v2521 = vrot.slane %v2517, 1
    %v2522 = vrot.slane %v2518, 1
    %2523 = vrot.lane.b32.xlu0 %v2521, 127
    %v2524 = vpop.permute.xlu0 %2523
    %2525 = vrot.lane.b32.xlu0 %v2522, 127
    %v2526 = vpop.permute.xlu0 %2525
    %v2529 = vadd.f32 %v2455, %v2524
    %v2530 = vadd.f32 %v2456, %v2526
    %s2531 = sld [smem:[#allocation8 + $0xa1]]
    %v2532 = vstv %s2531
    %v2533 = vmul.f32 %v2219, %v2532
    %v2534 = vmul.f32 %v2220, %v2532
    %v2537 = vrot.slane %v2533, 1
    %v2538 = vrot.slane %v2534, 1
    %2539 = vrot.lane.b32.xlu0 %v2537, 127
    %v2540 = vpop.permute.xlu0 %2539
    %2541 = vrot.lane.b32.xlu0 %v2538, 127
    %v2542 = vpop.permute.xlu0 %2541
    %v2545 = vadd.f32 %v2469, %v2540
    %v2546 = vadd.f32 %v2470, %v2542
    %s2547 = sld [smem:[#allocation8 + $0xdd]]
    %v2548 = vstv %s2547
    %v2549 = vmul.f32 %v2219, %v2548
    %v2550 = vmul.f32 %v2220, %v2548
    %v2553 = vrot.slane %v2549, 1
    %v2554 = vrot.slane %v2550, 1
    %2555 = vrot.lane.b32.xlu0 %v2553, 127
    %v2556 = vpop.permute.xlu0 %2555
    %2557 = vrot.lane.b32.xlu0 %v2554, 127
    %v2558 = vpop.permute.xlu0 %2557
    %v2561 = vadd.f32 %v2483, %v2556
    %v2562 = vadd.f32 %v2484, %v2558
    %s2563 = sld [smem:[#allocation8 + $0x119]]
    %v2564 = vstv %s2563
    %v2565 = vmul.f32 %v2219, %v2564
    %v2566 = vmul.f32 %v2220, %v2564
    %v2569 = vrot.slane %v2565, 1
    %v2570 = vrot.slane %v2566, 1
    %2571 = vrot.lane.b32.xlu0 %v2569, 127
    %v2572 = vpop.permute.xlu0 %2571
    %2573 = vrot.lane.b32.xlu0 %v2570, 127
    %v2574 = vpop.permute.xlu0 %2573
    %v2577 = vadd.f32 %v2497, %v2572
    %v2578 = vadd.f32 %v2498, %v2574
    %s2579 = sld [smem:[#allocation8 + $0x20]]
    %v2580 = vstv %s2579
    %v2581 = vmul.f32 %v2219, %v2580
    %v2582 = vmul.f32 %v2220, %v2580
    %2585 = vrot.lane.b32.xlu0 %v2581, 126
    %v2586 = vpop.permute.xlu0 %2585
    %2587 = vrot.lane.b32.xlu0 %v2582, 126
    %v2588 = vpop.permute.xlu0 %2587
    %v2591 = vadd.f32 %v2513, %v2586
    %v2592 = vadd.f32 %v2514, %v2588
    %s2593 = sld [smem:[#allocation8 + $0x5c]]
    %v2594 = vstv %s2593
    %v2595 = vmul.f32 %v2219, %v2594
    %v2596 = vmul.f32 %v2220, %v2594
    %2599 = vrot.lane.b32.xlu0 %v2595, 126
    %v2600 = vpop.permute.xlu0 %2599
    %2601 = vrot.lane.b32.xlu0 %v2596, 126
    %v2602 = vpop.permute.xlu0 %2601
    %v2605 = vadd.f32 %v2529, %v2600
    %v2606 = vadd.f32 %v2530, %v2602
    %s2607 = sld [smem:[#allocation8 + $0x98]]
    %v2608 = vstv %s2607
    %v2609 = vmul.f32 %v2219, %v2608
    %v2610 = vmul.f32 %v2220, %v2608
    %2613 = vrot.lane.b32.xlu0 %v2609, 126
    %v2614 = vpop.permute.xlu0 %2613
    %2615 = vrot.lane.b32.xlu0 %v2610, 126
    %v2616 = vpop.permute.xlu0 %2615
    %v2619 = vadd.f32 %v2545, %v2614
    %v2620 = vadd.f32 %v2546, %v2616
    %s2621 = sld [smem:[#allocation8 + $0xd4]]
    %v2622 = vstv %s2621
    %v2623 = vmul.f32 %v2219, %v2622
    %v2624 = vmul.f32 %v2220, %v2622
    %2627 = vrot.lane.b32.xlu0 %v2623, 126
    %v2628 = vpop.permute.xlu0 %2627
    %2629 = vrot.lane.b32.xlu0 %v2624, 126
    %v2630 = vpop.permute.xlu0 %2629
    %v2633 = vadd.f32 %v2561, %v2628
    %v2634 = vadd.f32 %v2562, %v2630
    %s2635 = sld [smem:[#allocation8 + $0x110]]
    %v2636 = vstv %s2635
    %v2637 = vmul.f32 %v2219, %v2636
    %v2638 = vmul.f32 %v2220, %v2636
    %2641 = vrot.lane.b32.xlu0 %v2637, 126
    %v2642 = vpop.permute.xlu0 %2641
    %2643 = vrot.lane.b32.xlu0 %v2638, 126
    %v2644 = vpop.permute.xlu0 %2643
    %v2647 = vadd.f32 %v2577, %v2642
    %v2648 = vadd.f32 %v2578, %v2644
    %s2649 = sld [smem:[#allocation8 + $0x25]]
    %v2650 = vstv %s2649
    %v2651 = vmul.f32 %v2237, %v2650
    %v2652 = vmul.f32 %v2238, %v2650
    %2655 = vrot.lane.b32.xlu0 %v2651, 126
    %v2656 = vpop.permute.xlu0 %2655
    %2657 = vrot.lane.b32.xlu0 %v2652, 126
    %v2658 = vpop.permute.xlu0 %2657
    %v2661 = vadd.f32 %v2591, %v2656
    %v2662 = vadd.f32 %v2592, %v2658
    %s2663 = sld [smem:[#allocation8 + $0x61]]
    %v2664 = vstv %s2663
    %v2665 = vmul.f32 %v2237, %v2664
    %v2666 = vmul.f32 %v2238, %v2664
    %2669 = vrot.lane.b32.xlu0 %v2665, 126
    %v2670 = vpop.permute.xlu0 %2669
    %2671 = vrot.lane.b32.xlu0 %v2666, 126
    %v2672 = vpop.permute.xlu0 %2671
    %v2675 = vadd.f32 %v2605, %v2670
    %v2676 = vadd.f32 %v2606, %v2672
    %s2677 = sld [smem:[#allocation8 + $0x9d]]
    %v2678 = vstv %s2677
    %v2679 = vmul.f32 %v2237, %v2678
    %v2680 = vmul.f32 %v2238, %v2678
    %2683 = vrot.lane.b32.xlu0 %v2679, 126
    %v2684 = vpop.permute.xlu0 %2683
    %2685 = vrot.lane.b32.xlu0 %v2680, 126
    %v2686 = vpop.permute.xlu0 %2685
    %v2689 = vadd.f32 %v2619, %v2684
    %v2690 = vadd.f32 %v2620, %v2686
    %s2691 = sld [smem:[#allocation8 + $0xd9]]
    %v2692 = vstv %s2691
    %v2693 = vmul.f32 %v2237, %v2692
    %v2694 = vmul.f32 %v2238, %v2692
    %2697 = vrot.lane.b32.xlu0 %v2693, 126
    %v2698 = vpop.permute.xlu0 %2697
    %2699 = vrot.lane.b32.xlu0 %v2694, 126
    %v2700 = vpop.permute.xlu0 %2699
    %v2703 = vadd.f32 %v2633, %v2698
    %v2704 = vadd.f32 %v2634, %v2700
    %s2705 = sld [smem:[#allocation8 + $0x115]]
    %v2706 = vstv %s2705
    %v2707 = vmul.f32 %v2237, %v2706
    %v2708 = vmul.f32 %v2238, %v2706
    %2711 = vrot.lane.b32.xlu0 %v2707, 126
    %v2712 = vpop.permute.xlu0 %2711
    %2713 = vrot.lane.b32.xlu0 %v2708, 126
    %v2714 = vpop.permute.xlu0 %2713
    %v2717 = vadd.f32 %v2647, %v2712
    %v2718 = vadd.f32 %v2648, %v2714
    %s2719 = sld [smem:[#allocation8 + $0x2a]]
    %v2720 = vstv %s2719
    %v2721 = vmul.f32 %v2219, %v2720
    %v2722 = vmul.f32 %v2220, %v2720
    %v2725 = vrot.slane %v2721, 1
    %v2726 = vrot.slane %v2722, 1
    %2727 = vrot.lane.b32.xlu0 %v2725, 126
    %v2728 = vpop.permute.xlu0 %2727
    %2729 = vrot.lane.b32.xlu0 %v2726, 126
    %v2730 = vpop.permute.xlu0 %2729
    %v2733 = vadd.f32 %v2661, %v2728
    %v2734 = vadd.f32 %v2662, %v2730
    %s2735 = sld [smem:[#allocation8 + $0x66]]
    %v2736 = vstv %s2735
    %v2737 = vmul.f32 %v2219, %v2736
    %v2738 = vmul.f32 %v2220, %v2736
    %v2741 = vrot.slane %v2737, 1
    %v2742 = vrot.slane %v2738, 1
    %2743 = vrot.lane.b32.xlu0 %v2741, 126
    %v2744 = vpop.permute.xlu0 %2743
    %2745 = vrot.lane.b32.xlu0 %v2742, 126
    %v2746 = vpop.permute.xlu0 %2745
    %v2749 = vadd.f32 %v2675, %v2744
    %v2750 = vadd.f32 %v2676, %v2746
    %s2751 = sld [smem:[#allocation8 + $0xa2]]
    %v2752 = vstv %s2751
    %v2753 = vmul.f32 %v2219, %v2752
    %v2754 = vmul.f32 %v2220, %v2752
    %v2757 = vrot.slane %v2753, 1
    %v2758 = vrot.slane %v2754, 1
    %2759 = vrot.lane.b32.xlu0 %v2757, 126
    %v2760 = vpop.permute.xlu0 %2759
    %2761 = vrot.lane.b32.xlu0 %v2758, 126
    %v2762 = vpop.permute.xlu0 %2761
    %v2765 = vadd.f32 %v2689, %v2760
    %v2766 = vadd.f32 %v2690, %v2762
    %s2767 = sld [smem:[#allocation8 + $0xde]]
    %v2768 = vstv %s2767
    %v2769 = vmul.f32 %v2219, %v2768
    %v2770 = vmul.f32 %v2220, %v2768
    %v2773 = vrot.slane %v2769, 1
    %v2774 = vrot.slane %v2770, 1
    %2775 = vrot.lane.b32.xlu0 %v2773, 126
    %v2776 = vpop.permute.xlu0 %2775
    %2777 = vrot.lane.b32.xlu0 %v2774, 126
    %v2778 = vpop.permute.xlu0 %2777
    %v2781 = vadd.f32 %v2703, %v2776
    %v2782 = vadd.f32 %v2704, %v2778
    %s2783 = sld [smem:[#allocation8 + $0x11a]]
    %v2784 = vstv %s2783
    %v2785 = vmul.f32 %v2219, %v2784
    %v2786 = vmul.f32 %v2220, %v2784
    %v2789 = vrot.slane %v2785, 1
    %v2790 = vrot.slane %v2786, 1
    %2791 = vrot.lane.b32.xlu0 %v2789, 126
    %v2792 = vpop.permute.xlu0 %2791
    %2793 = vrot.lane.b32.xlu0 %v2790, 126
    %v2794 = vpop.permute.xlu0 %2793
    %v2797 = vadd.f32 %v2717, %v2792
    %v2798 = vadd.f32 %v2718, %v2794
    %s2799 = sld [smem:[#allocation8 + $0x21]]
    %v2800 = vstv %s2799
    %v2801 = vmul.f32 %v2219, %v2800
    %v2802 = vmul.f32 %v2220, %v2800
    %2805 = vrot.lane.b32.xlu0 %v2801, 125
    %v2806 = vpop.permute.xlu0 %2805
    %2807 = vrot.lane.b32.xlu0 %v2802, 125
    %v2808 = vpop.permute.xlu0 %2807
    %v2811 = vadd.f32 %v2733, %v2806
    %v2812 = vadd.f32 %v2734, %v2808
    %s2813 = sld [smem:[#allocation8 + $0x5d]]
    %v2814 = vstv %s2813
    %v2815 = vmul.f32 %v2219, %v2814
    %v2816 = vmul.f32 %v2220, %v2814
    %2819 = vrot.lane.b32.xlu0 %v2815, 125
    %v2820 = vpop.permute.xlu0 %2819
    %2821 = vrot.lane.b32.xlu0 %v2816, 125
    %v2822 = vpop.permute.xlu0 %2821
    %v2825 = vadd.f32 %v2749, %v2820
    %v2826 = vadd.f32 %v2750, %v2822
    %s2827 = sld [smem:[#allocation8 + $0x99]]
    %v2828 = vstv %s2827
    %v2829 = vmul.f32 %v2219, %v2828
    %v2830 = vmul.f32 %v2220, %v2828
    %2833 = vrot.lane.b32.xlu0 %v2829, 125
    %v2834 = vpop.permute.xlu0 %2833
    %2835 = vrot.lane.b32.xlu0 %v2830, 125
    %v2836 = vpop.permute.xlu0 %2835
    %v2839 = vadd.f32 %v2765, %v2834
    %v2840 = vadd.f32 %v2766, %v2836
    %s2841 = sld [smem:[#allocation8 + $0xd5]]
    %v2842 = vstv %s2841
    %v2843 = vmul.f32 %v2219, %v2842
    %v2844 = vmul.f32 %v2220, %v2842
    %2847 = vrot.lane.b32.xlu0 %v2843, 125
    %v2848 = vpop.permute.xlu0 %2847
    %2849 = vrot.lane.b32.xlu0 %v2844, 125
    %v2850 = vpop.permute.xlu0 %2849
    %v2853 = vadd.f32 %v2781, %v2848
    %v2854 = vadd.f32 %v2782, %v2850
    %s2855 = sld [smem:[#allocation8 + $0x111]]
    %v2856 = vstv %s2855
    %v2857 = vmul.f32 %v2219, %v2856
    %v2858 = vmul.f32 %v2220, %v2856
    %2861 = vrot.lane.b32.xlu0 %v2857, 125
    %v2862 = vpop.permute.xlu0 %2861
    %2863 = vrot.lane.b32.xlu0 %v2858, 125
    %v2864 = vpop.permute.xlu0 %2863
    %v2867 = vadd.f32 %v2797, %v2862
    %v2868 = vadd.f32 %v2798, %v2864
    %s2869 = sld [smem:[#allocation8 + $0x26]]
    %v2870 = vstv %s2869
    %v2871 = vmul.f32 %v2237, %v2870
    %v2872 = vmul.f32 %v2238, %v2870
    %2875 = vrot.lane.b32.xlu0 %v2871, 125
    %v2876 = vpop.permute.xlu0 %2875
    %2877 = vrot.lane.b32.xlu0 %v2872, 125
    %v2878 = vpop.permute.xlu0 %2877
    %v2881 = vadd.f32 %v2811, %v2876
    %v2882 = vadd.f32 %v2812, %v2878
    %s2883 = sld [smem:[#allocation8 + $0x62]]
    %v2884 = vstv %s2883
    %v2885 = vmul.f32 %v2237, %v2884
    %v2886 = vmul.f32 %v2238, %v2884
    %2889 = vrot.lane.b32.xlu0 %v2885, 125
    %v2890 = vpop.permute.xlu0 %2889
    %2891 = vrot.lane.b32.xlu0 %v2886, 125
    %v2892 = vpop.permute.xlu0 %2891
    %v2895 = vadd.f32 %v2825, %v2890
    %v2896 = vadd.f32 %v2826, %v2892
    %s2897 = sld [smem:[#allocation8 + $0x9e]]
    %v2898 = vstv %s2897
    %v2899 = vmul.f32 %v2237, %v2898
    %v2900 = vmul.f32 %v2238, %v2898
    %2903 = vrot.lane.b32.xlu0 %v2899, 125
    %v2904 = vpop.permute.xlu0 %2903
    %2905 = vrot.lane.b32.xlu0 %v2900, 125
    %v2906 = vpop.permute.xlu0 %2905
    %v2909 = vadd.f32 %v2839, %v2904
    %v2910 = vadd.f32 %v2840, %v2906
    %s2911 = sld [smem:[#allocation8 + $0xda]]
    %v2912 = vstv %s2911
    %v2913 = vmul.f32 %v2237, %v2912
    %v2914 = vmul.f32 %v2238, %v2912
    %2917 = vrot.lane.b32.xlu0 %v2913, 125
    %v2918 = vpop.permute.xlu0 %2917
    %2919 = vrot.lane.b32.xlu0 %v2914, 125
    %v2920 = vpop.permute.xlu0 %2919
    %v2923 = vadd.f32 %v2853, %v2918
    %v2924 = vadd.f32 %v2854, %v2920
    %s2925 = sld [smem:[#allocation8 + $0x116]]
    %v2926 = vstv %s2925
    %v2927 = vmul.f32 %v2237, %v2926
    %v2928 = vmul.f32 %v2238, %v2926
    %2931 = vrot.lane.b32.xlu0 %v2927, 125
    %v2932 = vpop.permute.xlu0 %2931
    %2933 = vrot.lane.b32.xlu0 %v2928, 125
    %v2934 = vpop.permute.xlu0 %2933
    %v2937 = vadd.f32 %v2867, %v2932
    %v2938 = vadd.f32 %v2868, %v2934
    %s2939 = sld [smem:[#allocation8 + $0x2b]]
    %v2940 = vstv %s2939
    %v2941 = vmul.f32 %v2219, %v2940
    %v2942 = vmul.f32 %v2220, %v2940
    %v2945 = vrot.slane %v2941, 1
    %v2946 = vrot.slane %v2942, 1
    %2947 = vrot.lane.b32.xlu0 %v2945, 125
    %v2948 = vpop.permute.xlu0 %2947
    %2949 = vrot.lane.b32.xlu0 %v2946, 125
    %v2950 = vpop.permute.xlu0 %2949
    %v2953 = vadd.f32 %v2881, %v2948
    %v2954 = vadd.f32 %v2882, %v2950
    %s2955 = sld [smem:[#allocation8 + $0x67]]
    %v2956 = vstv %s2955
    %v2957 = vmul.f32 %v2219, %v2956
    %v2958 = vmul.f32 %v2220, %v2956
    %v2961 = vrot.slane %v2957, 1
    %v2962 = vrot.slane %v2958, 1
    %2963 = vrot.lane.b32.xlu0 %v2961, 125
    %v2964 = vpop.permute.xlu0 %2963
    %2965 = vrot.lane.b32.xlu0 %v2962, 125
    %v2966 = vpop.permute.xlu0 %2965
    %v2969 = vadd.f32 %v2895, %v2964
    %v2970 = vadd.f32 %v2896, %v2966
    %s2971 = sld [smem:[#allocation8 + $0xa3]]
    %v2972 = vstv %s2971
    %v2973 = vmul.f32 %v2219, %v2972
    %v2974 = vmul.f32 %v2220, %v2972
    %v2977 = vrot.slane %v2973, 1
    %v2978 = vrot.slane %v2974, 1
    %2979 = vrot.lane.b32.xlu0 %v2977, 125
    %v2980 = vpop.permute.xlu0 %2979
    %2981 = vrot.lane.b32.xlu0 %v2978, 125
    %v2982 = vpop.permute.xlu0 %2981
    %v2985 = vadd.f32 %v2909, %v2980
    %v2986 = vadd.f32 %v2910, %v2982
    %s2987 = sld [smem:[#allocation8 + $0xdf]]
    %v2988 = vstv %s2987
    %v2989 = vmul.f32 %v2219, %v2988
    %v2990 = vmul.f32 %v2220, %v2988
    %v2993 = vrot.slane %v2989, 1
    %v2994 = vrot.slane %v2990, 1
    %2995 = vrot.lane.b32.xlu0 %v2993, 125
    %v2996 = vpop.permute.xlu0 %2995
    %2997 = vrot.lane.b32.xlu0 %v2994, 125
    %v2998 = vpop.permute.xlu0 %2997
    %v3001 = vadd.f32 %v2923, %v2996
    %v3002 = vadd.f32 %v2924, %v2998
    %s3003 = sld [smem:[#allocation8 + $0x11b]]
    %v3004 = vstv %s3003
    %v3005 = vmul.f32 %v2219, %v3004
    %v3006 = vmul.f32 %v2220, %v3004
    %v3009 = vrot.slane %v3005, 1
    %v3010 = vrot.slane %v3006, 1
    %3011 = vrot.lane.b32.xlu0 %v3009, 125
    %v3012 = vpop.permute.xlu0 %3011
    %3013 = vrot.lane.b32.xlu0 %v3010, 125
    %v3014 = vpop.permute.xlu0 %3013
    %v3017 = vadd.f32 %v2937, %v3012
    %v3018 = vadd.f32 %v2938, %v3014
    %s3019 = sld [smem:[#allocation8 + $0x22]]
    %v3020 = vstv %s3019
    %v3021 = vmul.f32 %v2219, %v3020
    %v3022 = vmul.f32 %v2220, %v3020
    %3025 = vrot.lane.b32.xlu0 %v3021, 124
    %v3026 = vpop.permute.xlu0 %3025
    %3027 = vrot.lane.b32.xlu0 %v3022, 124
    %v3028 = vpop.permute.xlu0 %3027
    %v3031 = vadd.f32 %v2953, %v3026
    %v3032 = vadd.f32 %v2954, %v3028
    %s3033 = sld [smem:[#allocation8 + $0x5e]]
    %v3034 = vstv %s3033
    %v3035 = vmul.f32 %v2219, %v3034
    %v3036 = vmul.f32 %v2220, %v3034
    %3039 = vrot.lane.b32.xlu0 %v3035, 124
    %v3040 = vpop.permute.xlu0 %3039
    %3041 = vrot.lane.b32.xlu0 %v3036, 124
    %v3042 = vpop.permute.xlu0 %3041
    %v3045 = vadd.f32 %v2969, %v3040
    %v3046 = vadd.f32 %v2970, %v3042
    %s3047 = sld [smem:[#allocation8 + $0x9a]]
    %v3048 = vstv %s3047
    %v3049 = vmul.f32 %v2219, %v3048
    %v3050 = vmul.f32 %v2220, %v3048
    %3053 = vrot.lane.b32.xlu0 %v3049, 124
    %v3054 = vpop.permute.xlu0 %3053
    %3055 = vrot.lane.b32.xlu0 %v3050, 124
    %v3056 = vpop.permute.xlu0 %3055
    %v3059 = vadd.f32 %v2985, %v3054
    %v3060 = vadd.f32 %v2986, %v3056
    %s3061 = sld [smem:[#allocation8 + $0xd6]]
    %v3062 = vstv %s3061
    %v3063 = vmul.f32 %v2219, %v3062
    %v3064 = vmul.f32 %v2220, %v3062
    %3067 = vrot.lane.b32.xlu0 %v3063, 124
    %v3068 = vpop.permute.xlu0 %3067
    %3069 = vrot.lane.b32.xlu0 %v3064, 124
    %v3070 = vpop.permute.xlu0 %3069
    %v3073 = vadd.f32 %v3001, %v3068
    %v3074 = vadd.f32 %v3002, %v3070
    %s3075 = sld [smem:[#allocation8 + $0x112]]
    %v3076 = vstv %s3075
    %v3077 = vmul.f32 %v2219, %v3076
    %v3078 = vmul.f32 %v2220, %v3076
    %3081 = vrot.lane.b32.xlu0 %v3077, 124
    %v3082 = vpop.permute.xlu0 %3081
    %3083 = vrot.lane.b32.xlu0 %v3078, 124
    %v3084 = vpop.permute.xlu0 %3083
    %v3087 = vadd.f32 %v3017, %v3082
    %v3088 = vadd.f32 %v3018, %v3084
    %s3089 = sld [smem:[#allocation8 + $0x27]]
    %v3090 = vstv %s3089
    %v3091 = vmul.f32 %v2237, %v3090
    %v3092 = vmul.f32 %v2238, %v3090
    %3095 = vrot.lane.b32.xlu0 %v3091, 124
    %v3096 = vpop.permute.xlu0 %3095
    %3097 = vrot.lane.b32.xlu0 %v3092, 124
    %v3098 = vpop.permute.xlu0 %3097
    %v3101 = vadd.f32 %v3031, %v3096
    %v3102 = vadd.f32 %v3032, %v3098
    %s3103 = sld [smem:[#allocation8 + $0x63]]
    %v3104 = vstv %s3103
    %v3105 = vmul.f32 %v2237, %v3104
    %v3106 = vmul.f32 %v2238, %v3104
    %3109 = vrot.lane.b32.xlu0 %v3105, 124
    %v3110 = vpop.permute.xlu0 %3109
    %3111 = vrot.lane.b32.xlu0 %v3106, 124
    %v3112 = vpop.permute.xlu0 %3111
    %v3115 = vadd.f32 %v3045, %v3110
    %v3116 = vadd.f32 %v3046, %v3112
    %s3117 = sld [smem:[#allocation8 + $0x9f]]
    %v3118 = vstv %s3117
    %v3119 = vmul.f32 %v2237, %v3118
    %v3120 = vmul.f32 %v2238, %v3118
    %3123 = vrot.lane.b32.xlu0 %v3119, 124
    %v3124 = vpop.permute.xlu0 %3123
    %3125 = vrot.lane.b32.xlu0 %v3120, 124
    %v3126 = vpop.permute.xlu0 %3125
    %v3129 = vadd.f32 %v3059, %v3124
    %v3130 = vadd.f32 %v3060, %v3126
    %s3131 = sld [smem:[#allocation8 + $0xdb]]
    %v3132 = vstv %s3131
    %v3133 = vmul.f32 %v2237, %v3132
    %v3134 = vmul.f32 %v2238, %v3132
    %3137 = vrot.lane.b32.xlu0 %v3133, 124
    %v3138 = vpop.permute.xlu0 %3137
    %3139 = vrot.lane.b32.xlu0 %v3134, 124
    %v3140 = vpop.permute.xlu0 %3139
    %v3143 = vadd.f32 %v3073, %v3138
    %v3144 = vadd.f32 %v3074, %v3140
    %s3145 = sld [smem:[#allocation8 + $0x117]]
    %v3146 = vstv %s3145
    %v3147 = vmul.f32 %v2237, %v3146
    %v3148 = vmul.f32 %v2238, %v3146
    %3151 = vrot.lane.b32.xlu0 %v3147, 124
    %v3152 = vpop.permute.xlu0 %3151
    %3153 = vrot.lane.b32.xlu0 %v3148, 124
    %v3154 = vpop.permute.xlu0 %3153
    %v3157 = vadd.f32 %v3087, %v3152
    %v3158 = vadd.f32 %v3088, %v3154
    %s3159 = sld [smem:[#allocation8 + $0x2c]]
    %v3160 = vstv %s3159
    %v3161 = vmul.f32 %v2219, %v3160
    %v3162 = vmul.f32 %v2220, %v3160
    %v3165 = vrot.slane %v3161, 1
    %v3166 = vrot.slane %v3162, 1
    %3167 = vrot.lane.b32.xlu0 %v3165, 124
    %v3168 = vpop.permute.xlu0 %3167
    %3169 = vrot.lane.b32.xlu0 %v3166, 124
    %v3170 = vpop.permute.xlu0 %3169
    %v3173 = vadd.f32 %v3101, %v3168
    %v3174 = vadd.f32 %v3102, %v3170
    %s3175 = sld [smem:[#allocation8 + $0x68]]
    %v3176 = vstv %s3175
    %v3177 = vmul.f32 %v2219, %v3176
    %v3178 = vmul.f32 %v2220, %v3176
    %v3181 = vrot.slane %v3177, 1
    %v3182 = vrot.slane %v3178, 1
    %3183 = vrot.lane.b32.xlu0 %v3181, 124
    %v3184 = vpop.permute.xlu0 %3183
    %3185 = vrot.lane.b32.xlu0 %v3182, 124
    %v3186 = vpop.permute.xlu0 %3185
    %v3189 = vadd.f32 %v3115, %v3184
    %v3190 = vadd.f32 %v3116, %v3186
    %s3191 = sld [smem:[#allocation8 + $0xa4]]
    %v3192 = vstv %s3191
    %v3193 = vmul.f32 %v2219, %v3192
    %v3194 = vmul.f32 %v2220, %v3192
    %v3197 = vrot.slane %v3193, 1
    %v3198 = vrot.slane %v3194, 1
    %3199 = vrot.lane.b32.xlu0 %v3197, 124
    %v3200 = vpop.permute.xlu0 %3199
    %3201 = vrot.lane.b32.xlu0 %v3198, 124
    %v3202 = vpop.permute.xlu0 %3201
    %v3205 = vadd.f32 %v3129, %v3200
    %v3206 = vadd.f32 %v3130, %v3202
    %s3207 = sld [smem:[#allocation8 + $0xe0]]
    %v3208 = vstv %s3207
    %v3209 = vmul.f32 %v2219, %v3208
    %v3210 = vmul.f32 %v2220, %v3208
    %v3213 = vrot.slane %v3209, 1
    %v3214 = vrot.slane %v3210, 1
    %3215 = vrot.lane.b32.xlu0 %v3213, 124
    %v3216 = vpop.permute.xlu0 %3215
    %3217 = vrot.lane.b32.xlu0 %v3214, 124
    %v3218 = vpop.permute.xlu0 %3217
    %v3221 = vadd.f32 %v3143, %v3216
    %v3222 = vadd.f32 %v3144, %v3218
    %s3223 = sld [smem:[#allocation8 + $0x11c]]
    %v3224 = vstv %s3223
    %v3225 = vmul.f32 %v2219, %v3224
    %v3226 = vmul.f32 %v2220, %v3224
    %v3229 = vrot.slane %v3225, 1
    %v3230 = vrot.slane %v3226, 1
    %3231 = vrot.lane.b32.xlu0 %v3229, 124
    %v3232 = vpop.permute.xlu0 %3231
    %3233 = vrot.lane.b32.xlu0 %v3230, 124
    %v3234 = vpop.permute.xlu0 %3233
    %v3237 = vadd.f32 %v3157, %v3232
    %v3238 = vadd.f32 %v3158, %v3234
    %s3239 = sld [smem:[#allocation6 + $0x3]]
    %v3240 = vstv %s3239
    %v3241 = vmul.f32 %v80, %v3240
    %v3242 = vmul.f32 %v88, %v3240
    %s3243 = sld [smem:[#allocation6 + $0x7]]
    %v3244 = vstv %s3243
    %v3245 = vmul.f32 %v82, %v3244
    %v3246 = vmul.f32 %v90, %v3244
    %v3247 = vadd.f32 %v3241, %v3245
    %v3248 = vadd.f32 %v3242, %v3246
    %s3249 = sld [smem:[#allocation6 + $0xb]]
    %v3250 = vstv %s3249
    %v3251 = vmul.f32 %v84, %v3250
    %v3252 = vmul.f32 %v92, %v3250
    %v3253 = vadd.f32 %v3247, %v3251
    %v3254 = vadd.f32 %v3248, %v3252
    %s3255 = sld [smem:[#allocation6 + $0xf]]
    %v3256 = vstv %s3255
    %v3257 = vmul.f32 %v86, %v3256
    %v3258 = vmul.f32 %v94, %v3256
    %v3259 = vadd.f32 %v3253, %v3257
    %v3260 = vadd.f32 %v3254, %v3258
    %s3261 = sld [smem:[#allocation7 + $0x3]]
    %v3262 = vstv %s3261
    %v3263 = vadd.f32 %v3259, %v3262
    %v3264 = vadd.f32 %v3260, %v3262
    %v3265 = vtanh.pop %v3263
    %v3266 = vtanh.pop %v3264
    %v3267 = vmul.f32 %v96, %v3240
    %v3268 = vmul.f32 %v104, %v3240
    %v3269 = vmul.f32 %v98, %v3244
    %v3270 = vmul.f32 %v106, %v3244
    %v3271 = vadd.f32 %v3267, %v3269
    %v3272 = vadd.f32 %v3268, %v3270
    %v3273 = vmul.f32 %v100, %v3250
    %v3274 = vmul.f32 %v108, %v3250
    %v3275 = vadd.f32 %v3271, %v3273
    %v3276 = vadd.f32 %v3272, %v3274
    %v3277 = vmul.f32 %v102, %v3256
    %v3278 = vmul.f32 %v110, %v3256
    %v3279 = vadd.f32 %v3275, %v3277
    %v3280 = vadd.f32 %v3276, %v3278
    %v3281 = vadd.f32 %v3279, %v3262
    %v3282 = vadd.f32 %v3280, %v3262
    %v3283 = vtanh.pop %v3281
    %v3284 = vtanh.pop %v3282
    %s3285 = sld [smem:[#allocation8 + $0x2d]]
    %v3286 = vstv %s3285
    %v3287 = vmul.f32 %v3265, %v3286
    %v3288 = vmul.f32 %v3266, %v3286
    %v3289 = vadd.f32 %v3173, %v3287
    %v3290 = vadd.f32 %v3174, %v3288
    %s3291 = sld [smem:[#allocation8 + $0x69]]
    %v3292 = vstv %s3291
    %v3293 = vmul.f32 %v3265, %v3292
    %v3294 = vmul.f32 %v3266, %v3292
    %v3295 = vadd.f32 %v3189, %v3293
    %v3296 = vadd.f32 %v3190, %v3294
    %s3297 = sld [smem:[#allocation8 + $0xa5]]
    %v3298 = vstv %s3297
    %v3299 = vmul.f32 %v3265, %v3298
    %v3300 = vmul.f32 %v3266, %v3298
    %v3301 = vadd.f32 %v3205, %v3299
    %v3302 = vadd.f32 %v3206, %v3300
    %s3303 = sld [smem:[#allocation8 + $0xe1]]
    %v3304 = vstv %s3303
    %v3305 = vmul.f32 %v3265, %v3304
    %v3306 = vmul.f32 %v3266, %v3304
    %v3307 = vadd.f32 %v3221, %v3305
    %v3308 = vadd.f32 %v3222, %v3306
    %s3309 = sld [smem:[#allocation8 + $0x11d]]
    %v3310 = vstv %s3309
    %v3311 = vmul.f32 %v3265, %v3310
    %v3312 = vmul.f32 %v3266, %v3310
    %v3313 = vadd.f32 %v3237, %v3311
    %v3314 = vadd.f32 %v3238, %v3312
    %s3315 = sld [smem:[#allocation8 + $0x32]]
    %v3316 = vstv %s3315
    %v3317 = vmul.f32 %v3283, %v3316
    %v3318 = vmul.f32 %v3284, %v3316
    %v3319 = vadd.f32 %v3289, %v3317
    %v3320 = vadd.f32 %v3290, %v3318
    %s3321 = sld [smem:[#allocation8 + $0x6e]]
    %v3322 = vstv %s3321
    %v3323 = vmul.f32 %v3283, %v3322
    %v3324 = vmul.f32 %v3284, %v3322
    %v3325 = vadd.f32 %v3295, %v3323
    %v3326 = vadd.f32 %v3296, %v3324
    %s3327 = sld [smem:[#allocation8 + $0xaa]]
    %v3328 = vstv %s3327
    %v3329 = vmul.f32 %v3283, %v3328
    %v3330 = vmul.f32 %v3284, %v3328
    %v3331 = vadd.f32 %v3301, %v3329
    %v3332 = vadd.f32 %v3302, %v3330
    %s3333 = sld [smem:[#allocation8 + $0xe6]]
    %v3334 = vstv %s3333
    %v3335 = vmul.f32 %v3283, %v3334
    %v3336 = vmul.f32 %v3284, %v3334
    %v3337 = vadd.f32 %v3307, %v3335
    %v3338 = vadd.f32 %v3308, %v3336
    %s3339 = sld [smem:[#allocation8 + $0x122]]
    %v3340 = vstv %s3339
    %v3341 = vmul.f32 %v3283, %v3340
    %v3342 = vmul.f32 %v3284, %v3340
    %v3343 = vadd.f32 %v3313, %v3341
    %v3344 = vadd.f32 %v3314, %v3342
    %s3345 = sld [smem:[#allocation8 + $0x37]]
    %v3346 = vstv %s3345
    %v3347 = vmul.f32 %v3265, %v3346
    %v3348 = vmul.f32 %v3266, %v3346
    %v3351 = vrot.slane %v3347, 1
    %v3352 = vrot.slane %v3348, 1
    %v3355 = vadd.f32 %v3319, %v3351
    %v3356 = vadd.f32 %v3320, %v3352
    %s3357 = sld [smem:[#allocation8 + $0x73]]
    %v3358 = vstv %s3357
    %v3359 = vmul.f32 %v3265, %v3358
    %v3360 = vmul.f32 %v3266, %v3358
    %v3363 = vrot.slane %v3359, 1
    %v3364 = vrot.slane %v3360, 1
    %v3367 = vadd.f32 %v3325, %v3363
    %v3368 = vadd.f32 %v3326, %v3364
    %s3369 = sld [smem:[#allocation8 + $0xaf]]
    %v3370 = vstv %s3369
    %v3371 = vmul.f32 %v3265, %v3370
    %v3372 = vmul.f32 %v3266, %v3370
    %v3375 = vrot.slane %v3371, 1
    %v3376 = vrot.slane %v3372, 1
    %v3379 = vadd.f32 %v3331, %v3375
    %v3380 = vadd.f32 %v3332, %v3376
    %s3381 = sld [smem:[#allocation8 + $0xeb]]
    %v3382 = vstv %s3381
    %v3383 = vmul.f32 %v3265, %v3382
    %v3384 = vmul.f32 %v3266, %v3382
    %v3387 = vrot.slane %v3383, 1
    %v3388 = vrot.slane %v3384, 1
    %v3391 = vadd.f32 %v3337, %v3387
    %v3392 = vadd.f32 %v3338, %v3388
    %s3393 = sld [smem:[#allocation8 + $0x127]]
    %v3394 = vstv %s3393
    %v3395 = vmul.f32 %v3265, %v3394
    %v3396 = vmul.f32 %v3266, %v3394
    %v3399 = vrot.slane %v3395, 1
    %v3400 = vrot.slane %v3396, 1
    %v3403 = vadd.f32 %v3343, %v3399
    %v3404 = vadd.f32 %v3344, %v3400
    %s3405 = sld [smem:[#allocation8 + $0x2e]]
    %v3406 = vstv %s3405
    %v3407 = vmul.f32 %v3265, %v3406
    %v3408 = vmul.f32 %v3266, %v3406
    %3411 = vrot.lane.b32.xlu0 %v3407, 127
    %v3412 = vpop.permute.xlu0 %3411
    %3413 = vrot.lane.b32.xlu0 %v3408, 127
    %v3414 = vpop.permute.xlu0 %3413
    %v3417 = vadd.f32 %v3355, %v3412
    %v3418 = vadd.f32 %v3356, %v3414
    %s3419 = sld [smem:[#allocation8 + $0x6a]]
    %v3420 = vstv %s3419
    %v3421 = vmul.f32 %v3265, %v3420
    %v3422 = vmul.f32 %v3266, %v3420
    %3425 = vrot.lane.b32.xlu0 %v3421, 127
    %v3426 = vpop.permute.xlu0 %3425
    %3427 = vrot.lane.b32.xlu0 %v3422, 127
    %v3428 = vpop.permute.xlu0 %3427
    %v3431 = vadd.f32 %v3367, %v3426
    %v3432 = vadd.f32 %v3368, %v3428
    %s3433 = sld [smem:[#allocation8 + $0xa6]]
    %v3434 = vstv %s3433
    %v3435 = vmul.f32 %v3265, %v3434
    %v3436 = vmul.f32 %v3266, %v3434
    %3439 = vrot.lane.b32.xlu0 %v3435, 127
    %v3440 = vpop.permute.xlu0 %3439
    %3441 = vrot.lane.b32.xlu0 %v3436, 127
    %v3442 = vpop.permute.xlu0 %3441
    %v3445 = vadd.f32 %v3379, %v3440
    %v3446 = vadd.f32 %v3380, %v3442
    %s3447 = sld [smem:[#allocation8 + $0xe2]]
    %v3448 = vstv %s3447
    %v3449 = vmul.f32 %v3265, %v3448
    %v3450 = vmul.f32 %v3266, %v3448
    %3453 = vrot.lane.b32.xlu0 %v3449, 127
    %v3454 = vpop.permute.xlu0 %3453
    %3455 = vrot.lane.b32.xlu0 %v3450, 127
    %v3456 = vpop.permute.xlu0 %3455
    %v3459 = vadd.f32 %v3391, %v3454
    %v3460 = vadd.f32 %v3392, %v3456
    %s3461 = sld [smem:[#allocation8 + $0x11e]]
    %v3462 = vstv %s3461
    %v3463 = vmul.f32 %v3265, %v3462
    %v3464 = vmul.f32 %v3266, %v3462
    %3467 = vrot.lane.b32.xlu0 %v3463, 127
    %v3468 = vpop.permute.xlu0 %3467
    %3469 = vrot.lane.b32.xlu0 %v3464, 127
    %v3470 = vpop.permute.xlu0 %3469
    %v3473 = vadd.f32 %v3403, %v3468
    %v3474 = vadd.f32 %v3404, %v3470
    %s3475 = sld [smem:[#allocation8 + $0x33]]
    %v3476 = vstv %s3475
    %v3477 = vmul.f32 %v3283, %v3476
    %v3478 = vmul.f32 %v3284, %v3476
    %3481 = vrot.lane.b32.xlu0 %v3477, 127
    %v3482 = vpop.permute.xlu0 %3481
    %3483 = vrot.lane.b32.xlu0 %v3478, 127
    %v3484 = vpop.permute.xlu0 %3483
    %v3487 = vadd.f32 %v3417, %v3482
    %v3488 = vadd.f32 %v3418, %v3484
    %s3489 = sld [smem:[#allocation8 + $0x6f]]
    %v3490 = vstv %s3489
    %v3491 = vmul.f32 %v3283, %v3490
    %v3492 = vmul.f32 %v3284, %v3490
    %3495 = vrot.lane.b32.xlu0 %v3491, 127
    %v3496 = vpop.permute.xlu0 %3495
    %3497 = vrot.lane.b32.xlu0 %v3492, 127
    %v3498 = vpop.permute.xlu0 %3497
    %v3501 = vadd.f32 %v3431, %v3496
    %v3502 = vadd.f32 %v3432, %v3498
    %s3503 = sld [smem:[#allocation8 + $0xab]]
    %v3504 = vstv %s3503
    %v3505 = vmul.f32 %v3283, %v3504
    %v3506 = vmul.f32 %v3284, %v3504
    %3509 = vrot.lane.b32.xlu0 %v3505, 127
    %v3510 = vpop.permute.xlu0 %3509
    %3511 = vrot.lane.b32.xlu0 %v3506, 127
    %v3512 = vpop.permute.xlu0 %3511
    %v3515 = vadd.f32 %v3445, %v3510
    %v3516 = vadd.f32 %v3446, %v3512
    %s3517 = sld [smem:[#allocation8 + $0xe7]]
    %v3518 = vstv %s3517
    %v3519 = vmul.f32 %v3283, %v3518
    %v3520 = vmul.f32 %v3284, %v3518
    %3523 = vrot.lane.b32.xlu0 %v3519, 127
    %v3524 = vpop.permute.xlu0 %3523
    %3525 = vrot.lane.b32.xlu0 %v3520, 127
    %v3526 = vpop.permute.xlu0 %3525
    %v3529 = vadd.f32 %v3459, %v3524
    %v3530 = vadd.f32 %v3460, %v3526
    %s3531 = sld [smem:[#allocation8 + $0x123]]
    %v3532 = vstv %s3531
    %v3533 = vmul.f32 %v3283, %v3532
    %v3534 = vmul.f32 %v3284, %v3532
    %3537 = vrot.lane.b32.xlu0 %v3533, 127
    %v3538 = vpop.permute.xlu0 %3537
    %3539 = vrot.lane.b32.xlu0 %v3534, 127
    %v3540 = vpop.permute.xlu0 %3539
    %v3543 = vadd.f32 %v3473, %v3538
    %v3544 = vadd.f32 %v3474, %v3540
    %s3545 = sld [smem:[#allocation8 + $0x38]]
    %v3546 = vstv %s3545
    %v3547 = vmul.f32 %v3265, %v3546
    %v3548 = vmul.f32 %v3266, %v3546
    %v3551 = vrot.slane %v3547, 1
    %v3552 = vrot.slane %v3548, 1
    %3553 = vrot.lane.b32.xlu0 %v3551, 127
    %v3554 = vpop.permute.xlu0 %3553
    %3555 = vrot.lane.b32.xlu0 %v3552, 127
    %v3556 = vpop.permute.xlu0 %3555
    %v3559 = vadd.f32 %v3487, %v3554
    %v3560 = vadd.f32 %v3488, %v3556
    %s3561 = sld [smem:[#allocation8 + $0x74]]
    %v3562 = vstv %s3561
    %v3563 = vmul.f32 %v3265, %v3562
    %v3564 = vmul.f32 %v3266, %v3562
    %v3567 = vrot.slane %v3563, 1
    %v3568 = vrot.slane %v3564, 1
    %3569 = vrot.lane.b32.xlu0 %v3567, 127
    %v3570 = vpop.permute.xlu0 %3569
    %3571 = vrot.lane.b32.xlu0 %v3568, 127
    %v3572 = vpop.permute.xlu0 %3571
    %v3575 = vadd.f32 %v3501, %v3570
    %v3576 = vadd.f32 %v3502, %v3572
    %s3577 = sld [smem:[#allocation8 + $0xb0]]
    %v3578 = vstv %s3577
    %v3579 = vmul.f32 %v3265, %v3578
    %v3580 = vmul.f32 %v3266, %v3578
    %v3583 = vrot.slane %v3579, 1
    %v3584 = vrot.slane %v3580, 1
    %3585 = vrot.lane.b32.xlu0 %v3583, 127
    %v3586 = vpop.permute.xlu0 %3585
    %3587 = vrot.lane.b32.xlu0 %v3584, 127
    %v3588 = vpop.permute.xlu0 %3587
    %v3591 = vadd.f32 %v3515, %v3586
    %v3592 = vadd.f32 %v3516, %v3588
    %s3593 = sld [smem:[#allocation8 + $0xec]]
    %v3594 = vstv %s3593
    %v3595 = vmul.f32 %v3265, %v3594
    %v3596 = vmul.f32 %v3266, %v3594
    %v3599 = vrot.slane %v3595, 1
    %v3600 = vrot.slane %v3596, 1
    %3601 = vrot.lane.b32.xlu0 %v3599, 127
    %v3602 = vpop.permute.xlu0 %3601
    %3603 = vrot.lane.b32.xlu0 %v3600, 127
    %v3604 = vpop.permute.xlu0 %3603
    %v3607 = vadd.f32 %v3529, %v3602
    %v3608 = vadd.f32 %v3530, %v3604
    %s3609 = sld [smem:[#allocation8 + $0x128]]
    %v3610 = vstv %s3609
    %v3611 = vmul.f32 %v3265, %v3610
    %v3612 = vmul.f32 %v3266, %v3610
    %v3615 = vrot.slane %v3611, 1
    %v3616 = vrot.slane %v3612, 1
    %3617 = vrot.lane.b32.xlu0 %v3615, 127
    %v3618 = vpop.permute.xlu0 %3617
    %3619 = vrot.lane.b32.xlu0 %v3616, 127
    %v3620 = vpop.permute.xlu0 %3619
    %v3623 = vadd.f32 %v3543, %v3618
    %v3624 = vadd.f32 %v3544, %v3620
    %s3625 = sld [smem:[#allocation8 + $0x2f]]
    %v3626 = vstv %s3625
    %v3627 = vmul.f32 %v3265, %v3626
    %v3628 = vmul.f32 %v3266, %v3626
    %3631 = vrot.lane.b32.xlu0 %v3627, 126
    %v3632 = vpop.permute.xlu0 %3631
    %3633 = vrot.lane.b32.xlu0 %v3628, 126
    %v3634 = vpop.permute.xlu0 %3633
    %v3637 = vadd.f32 %v3559, %v3632
    %v3638 = vadd.f32 %v3560, %v3634
    %s3639 = sld [smem:[#allocation8 + $0x6b]]
    %v3640 = vstv %s3639
    %v3641 = vmul.f32 %v3265, %v3640
    %v3642 = vmul.f32 %v3266, %v3640
    %3645 = vrot.lane.b32.xlu0 %v3641, 126
    %v3646 = vpop.permute.xlu0 %3645
    %3647 = vrot.lane.b32.xlu0 %v3642, 126
    %v3648 = vpop.permute.xlu0 %3647
    %v3651 = vadd.f32 %v3575, %v3646
    %v3652 = vadd.f32 %v3576, %v3648
    %s3653 = sld [smem:[#allocation8 + $0xa7]]
    %v3654 = vstv %s3653
    %v3655 = vmul.f32 %v3265, %v3654
    %v3656 = vmul.f32 %v3266, %v3654
    %3659 = vrot.lane.b32.xlu0 %v3655, 126
    %v3660 = vpop.permute.xlu0 %3659
    %3661 = vrot.lane.b32.xlu0 %v3656, 126
    %v3662 = vpop.permute.xlu0 %3661
    %v3665 = vadd.f32 %v3591, %v3660
    %v3666 = vadd.f32 %v3592, %v3662
    %s3667 = sld [smem:[#allocation8 + $0xe3]]
    %v3668 = vstv %s3667
    %v3669 = vmul.f32 %v3265, %v3668
    %v3670 = vmul.f32 %v3266, %v3668
    %3673 = vrot.lane.b32.xlu0 %v3669, 126
    %v3674 = vpop.permute.xlu0 %3673
    %3675 = vrot.lane.b32.xlu0 %v3670, 126
    %v3676 = vpop.permute.xlu0 %3675
    %v3679 = vadd.f32 %v3607, %v3674
    %v3680 = vadd.f32 %v3608, %v3676
    %s3681 = sld [smem:[#allocation8 + $0x11f]]
    %v3682 = vstv %s3681
    %v3683 = vmul.f32 %v3265, %v3682
    %v3684 = vmul.f32 %v3266, %v3682
    %3687 = vrot.lane.b32.xlu0 %v3683, 126
    %v3688 = vpop.permute.xlu0 %3687
    %3689 = vrot.lane.b32.xlu0 %v3684, 126
    %v3690 = vpop.permute.xlu0 %3689
    %v3693 = vadd.f32 %v3623, %v3688
    %v3694 = vadd.f32 %v3624, %v3690
    %s3695 = sld [smem:[#allocation8 + $0x34]]
    %v3696 = vstv %s3695
    %v3697 = vmul.f32 %v3283, %v3696
    %v3698 = vmul.f32 %v3284, %v3696
    %3701 = vrot.lane.b32.xlu0 %v3697, 126
    %v3702 = vpop.permute.xlu0 %3701
    %3703 = vrot.lane.b32.xlu0 %v3698, 126
    %v3704 = vpop.permute.xlu0 %3703
    %v3707 = vadd.f32 %v3637, %v3702
    %v3708 = vadd.f32 %v3638, %v3704
    %s3709 = sld [smem:[#allocation8 + $0x70]]
    %v3710 = vstv %s3709
    %v3711 = vmul.f32 %v3283, %v3710
    %v3712 = vmul.f32 %v3284, %v3710
    %3715 = vrot.lane.b32.xlu0 %v3711, 126
    %v3716 = vpop.permute.xlu0 %3715
    %3717 = vrot.lane.b32.xlu0 %v3712, 126
    %v3718 = vpop.permute.xlu0 %3717
    %v3721 = vadd.f32 %v3651, %v3716
    %v3722 = vadd.f32 %v3652, %v3718
    %s3723 = sld [smem:[#allocation8 + $0xac]]
    %v3724 = vstv %s3723
    %v3725 = vmul.f32 %v3283, %v3724
    %v3726 = vmul.f32 %v3284, %v3724
    %3729 = vrot.lane.b32.xlu0 %v3725, 126
    %v3730 = vpop.permute.xlu0 %3729
    %3731 = vrot.lane.b32.xlu0 %v3726, 126
    %v3732 = vpop.permute.xlu0 %3731
    %v3735 = vadd.f32 %v3665, %v3730
    %v3736 = vadd.f32 %v3666, %v3732
    %s3737 = sld [smem:[#allocation8 + $0xe8]]
    %v3738 = vstv %s3737
    %v3739 = vmul.f32 %v3283, %v3738
    %v3740 = vmul.f32 %v3284, %v3738
    %3743 = vrot.lane.b32.xlu0 %v3739, 126
    %v3744 = vpop.permute.xlu0 %3743
    %3745 = vrot.lane.b32.xlu0 %v3740, 126
    %v3746 = vpop.permute.xlu0 %3745
    %v3749 = vadd.f32 %v3679, %v3744
    %v3750 = vadd.f32 %v3680, %v3746
    %s3751 = sld [smem:[#allocation8 + $0x124]]
    %v3752 = vstv %s3751
    %v3753 = vmul.f32 %v3283, %v3752
    %v3754 = vmul.f32 %v3284, %v3752
    %3757 = vrot.lane.b32.xlu0 %v3753, 126
    %v3758 = vpop.permute.xlu0 %3757
    %3759 = vrot.lane.b32.xlu0 %v3754, 126
    %v3760 = vpop.permute.xlu0 %3759
    %v3763 = vadd.f32 %v3693, %v3758
    %v3764 = vadd.f32 %v3694, %v3760
    %s3765 = sld [smem:[#allocation8 + $0x39]]
    %v3766 = vstv %s3765
    %v3767 = vmul.f32 %v3265, %v3766
    %v3768 = vmul.f32 %v3266, %v3766
    %v3771 = vrot.slane %v3767, 1
    %v3772 = vrot.slane %v3768, 1
    %3773 = vrot.lane.b32.xlu0 %v3771, 126
    %v3774 = vpop.permute.xlu0 %3773
    %3775 = vrot.lane.b32.xlu0 %v3772, 126
    %v3776 = vpop.permute.xlu0 %3775
    %v3779 = vadd.f32 %v3707, %v3774
    %v3780 = vadd.f32 %v3708, %v3776
    %s3781 = sld [smem:[#allocation8 + $0x75]]
    %v3782 = vstv %s3781
    %v3783 = vmul.f32 %v3265, %v3782
    %v3784 = vmul.f32 %v3266, %v3782
    %v3787 = vrot.slane %v3783, 1
    %v3788 = vrot.slane %v3784, 1
    %3789 = vrot.lane.b32.xlu0 %v3787, 126
    %v3790 = vpop.permute.xlu0 %3789
    %3791 = vrot.lane.b32.xlu0 %v3788, 126
    %v3792 = vpop.permute.xlu0 %3791
    %v3795 = vadd.f32 %v3721, %v3790
    %v3796 = vadd.f32 %v3722, %v3792
    %s3797 = sld [smem:[#allocation8 + $0xb1]]
    %v3798 = vstv %s3797
    %v3799 = vmul.f32 %v3265, %v3798
    %v3800 = vmul.f32 %v3266, %v3798
    %v3803 = vrot.slane %v3799, 1
    %v3804 = vrot.slane %v3800, 1
    %3805 = vrot.lane.b32.xlu0 %v3803, 126
    %v3806 = vpop.permute.xlu0 %3805
    %3807 = vrot.lane.b32.xlu0 %v3804, 126
    %v3808 = vpop.permute.xlu0 %3807
    %v3811 = vadd.f32 %v3735, %v3806
    %v3812 = vadd.f32 %v3736, %v3808
    %s3813 = sld [smem:[#allocation8 + $0xed]]
    %v3814 = vstv %s3813
    %v3815 = vmul.f32 %v3265, %v3814
    %v3816 = vmul.f32 %v3266, %v3814
    %v3819 = vrot.slane %v3815, 1
    %v3820 = vrot.slane %v3816, 1
    %3821 = vrot.lane.b32.xlu0 %v3819, 126
    %v3822 = vpop.permute.xlu0 %3821
    %3823 = vrot.lane.b32.xlu0 %v3820, 126
    %v3824 = vpop.permute.xlu0 %3823
    %v3827 = vadd.f32 %v3749, %v3822
    %v3828 = vadd.f32 %v3750, %v3824
    %s3829 = sld [smem:[#allocation8 + $0x129]]
    %v3830 = vstv %s3829
    %v3831 = vmul.f32 %v3265, %v3830
    %v3832 = vmul.f32 %v3266, %v3830
    %v3835 = vrot.slane %v3831, 1
    %v3836 = vrot.slane %v3832, 1
    %3837 = vrot.lane.b32.xlu0 %v3835, 126
    %v3838 = vpop.permute.xlu0 %3837
    %3839 = vrot.lane.b32.xlu0 %v3836, 126
    %v3840 = vpop.permute.xlu0 %3839
    %v3843 = vadd.f32 %v3763, %v3838
    %v3844 = vadd.f32 %v3764, %v3840
    %s3845 = sld [smem:[#allocation8 + $0x30]]
    %v3846 = vstv %s3845
    %v3847 = vmul.f32 %v3265, %v3846
    %v3848 = vmul.f32 %v3266, %v3846
    %3851 = vrot.lane.b32.xlu0 %v3847, 125
    %v3852 = vpop.permute.xlu0 %3851
    %3853 = vrot.lane.b32.xlu0 %v3848, 125
    %v3854 = vpop.permute.xlu0 %3853
    %v3857 = vadd.f32 %v3779, %v3852
    %v3858 = vadd.f32 %v3780, %v3854
    %s3859 = sld [smem:[#allocation8 + $0x6c]]
    %v3860 = vstv %s3859
    %v3861 = vmul.f32 %v3265, %v3860
    %v3862 = vmul.f32 %v3266, %v3860
    %3865 = vrot.lane.b32.xlu0 %v3861, 125
    %v3866 = vpop.permute.xlu0 %3865
    %3867 = vrot.lane.b32.xlu0 %v3862, 125
    %v3868 = vpop.permute.xlu0 %3867
    %v3871 = vadd.f32 %v3795, %v3866
    %v3872 = vadd.f32 %v3796, %v3868
    %s3873 = sld [smem:[#allocation8 + $0xa8]]
    %v3874 = vstv %s3873
    %v3875 = vmul.f32 %v3265, %v3874
    %v3876 = vmul.f32 %v3266, %v3874
    %3879 = vrot.lane.b32.xlu0 %v3875, 125
    %v3880 = vpop.permute.xlu0 %3879
    %3881 = vrot.lane.b32.xlu0 %v3876, 125
    %v3882 = vpop.permute.xlu0 %3881
    %v3885 = vadd.f32 %v3811, %v3880
    %v3886 = vadd.f32 %v3812, %v3882
    %s3887 = sld [smem:[#allocation8 + $0xe4]]
    %v3888 = vstv %s3887
    %v3889 = vmul.f32 %v3265, %v3888
    %v3890 = vmul.f32 %v3266, %v3888
    %3893 = vrot.lane.b32.xlu0 %v3889, 125
    %v3894 = vpop.permute.xlu0 %3893
    %3895 = vrot.lane.b32.xlu0 %v3890, 125
    %v3896 = vpop.permute.xlu0 %3895
    %v3899 = vadd.f32 %v3827, %v3894
    %v3900 = vadd.f32 %v3828, %v3896
    %s3901 = sld [smem:[#allocation8 + $0x120]]
    %v3902 = vstv %s3901
    %v3903 = vmul.f32 %v3265, %v3902
    %v3904 = vmul.f32 %v3266, %v3902
    %3907 = vrot.lane.b32.xlu0 %v3903, 125
    %v3908 = vpop.permute.xlu0 %3907
    %3909 = vrot.lane.b32.xlu0 %v3904, 125
    %v3910 = vpop.permute.xlu0 %3909
    %v3913 = vadd.f32 %v3843, %v3908
    %v3914 = vadd.f32 %v3844, %v3910
    %s3915 = sld [smem:[#allocation8 + $0x35]]
    %v3916 = vstv %s3915
    %v3917 = vmul.f32 %v3283, %v3916
    %v3918 = vmul.f32 %v3284, %v3916
    %3921 = vrot.lane.b32.xlu0 %v3917, 125
    %v3922 = vpop.permute.xlu0 %3921
    %3923 = vrot.lane.b32.xlu0 %v3918, 125
    %v3924 = vpop.permute.xlu0 %3923
    %v3927 = vadd.f32 %v3857, %v3922
    %v3928 = vadd.f32 %v3858, %v3924
    %s3929 = sld [smem:[#allocation8 + $0x71]]
    %v3930 = vstv %s3929
    %v3931 = vmul.f32 %v3283, %v3930
    %v3932 = vmul.f32 %v3284, %v3930
    %3935 = vrot.lane.b32.xlu0 %v3931, 125
    %v3936 = vpop.permute.xlu0 %3935
    %3937 = vrot.lane.b32.xlu0 %v3932, 125
    %v3938 = vpop.permute.xlu0 %3937
    %v3941 = vadd.f32 %v3871, %v3936
    %v3942 = vadd.f32 %v3872, %v3938
    %s3943 = sld [smem:[#allocation8 + $0xad]]
    %v3944 = vstv %s3943
    %v3945 = vmul.f32 %v3283, %v3944
    %v3946 = vmul.f32 %v3284, %v3944
    %3949 = vrot.lane.b32.xlu0 %v3945, 125
    %v3950 = vpop.permute.xlu0 %3949
    %3951 = vrot.lane.b32.xlu0 %v3946, 125
    %v3952 = vpop.permute.xlu0 %3951
    %v3955 = vadd.f32 %v3885, %v3950
    %v3956 = vadd.f32 %v3886, %v3952
    %s3957 = sld [smem:[#allocation8 + $0xe9]]
    %v3958 = vstv %s3957
    %v3959 = vmul.f32 %v3283, %v3958
    %v3960 = vmul.f32 %v3284, %v3958
    %3963 = vrot.lane.b32.xlu0 %v3959, 125
    %v3964 = vpop.permute.xlu0 %3963
    %3965 = vrot.lane.b32.xlu0 %v3960, 125
    %v3966 = vpop.permute.xlu0 %3965
    %v3969 = vadd.f32 %v3899, %v3964
    %v3970 = vadd.f32 %v3900, %v3966
    %s3971 = sld [smem:[#allocation8 + $0x125]]
    %v3972 = vstv %s3971
    %v3973 = vmul.f32 %v3283, %v3972
    %v3974 = vmul.f32 %v3284, %v3972
    %3977 = vrot.lane.b32.xlu0 %v3973, 125
    %v3978 = vpop.permute.xlu0 %3977
    %3979 = vrot.lane.b32.xlu0 %v3974, 125
    %v3980 = vpop.permute.xlu0 %3979
    %v3983 = vadd.f32 %v3913, %v3978
    %v3984 = vadd.f32 %v3914, %v3980
    %s3985 = sld [smem:[#allocation8 + $0x3a]]
    %v3986 = vstv %s3985
    %v3987 = vmul.f32 %v3265, %v3986
    %v3988 = vmul.f32 %v3266, %v3986
    %v3991 = vrot.slane %v3987, 1
    %v3992 = vrot.slane %v3988, 1
    %3993 = vrot.lane.b32.xlu0 %v3991, 125
    %v3994 = vpop.permute.xlu0 %3993
    %3995 = vrot.lane.b32.xlu0 %v3992, 125
    %v3996 = vpop.permute.xlu0 %3995
    %v3999 = vadd.f32 %v3927, %v3994
    %v4000 = vadd.f32 %v3928, %v3996
    %s4001 = sld [smem:[#allocation8 + $0x76]]
    %v4002 = vstv %s4001
    %v4003 = vmul.f32 %v3265, %v4002
    %v4004 = vmul.f32 %v3266, %v4002
    %v4007 = vrot.slane %v4003, 1
    %v4008 = vrot.slane %v4004, 1
    %4009 = vrot.lane.b32.xlu0 %v4007, 125
    %v4010 = vpop.permute.xlu0 %4009
    %4011 = vrot.lane.b32.xlu0 %v4008, 125
    %v4012 = vpop.permute.xlu0 %4011
    %v4015 = vadd.f32 %v3941, %v4010
    %v4016 = vadd.f32 %v3942, %v4012
    %s4017 = sld [smem:[#allocation8 + $0xb2]]
    %v4018 = vstv %s4017
    %v4019 = vmul.f32 %v3265, %v4018
    %v4020 = vmul.f32 %v3266, %v4018
    %v4023 = vrot.slane %v4019, 1
    %v4024 = vrot.slane %v4020, 1
    %4025 = vrot.lane.b32.xlu0 %v4023, 125
    %v4026 = vpop.permute.xlu0 %4025
    %4027 = vrot.lane.b32.xlu0 %v4024, 125
    %v4028 = vpop.permute.xlu0 %4027
    %v4031 = vadd.f32 %v3955, %v4026
    %v4032 = vadd.f32 %v3956, %v4028
    %s4033 = sld [smem:[#allocation8 + $0xee]]
    %v4034 = vstv %s4033
    %v4035 = vmul.f32 %v3265, %v4034
    %v4036 = vmul.f32 %v3266, %v4034
    %v4039 = vrot.slane %v4035, 1
    %v4040 = vrot.slane %v4036, 1
    %4041 = vrot.lane.b32.xlu0 %v4039, 125
    %v4042 = vpop.permute.xlu0 %4041
    %4043 = vrot.lane.b32.xlu0 %v4040, 125
    %v4044 = vpop.permute.xlu0 %4043
    %v4047 = vadd.f32 %v3969, %v4042
    %v4048 = vadd.f32 %v3970, %v4044
    %s4049 = sld [smem:[#allocation8 + $0x12a]]
    %v4050 = vstv %s4049
    %v4051 = vmul.f32 %v3265, %v4050
    %v4052 = vmul.f32 %v3266, %v4050
    %v4055 = vrot.slane %v4051, 1
    %v4056 = vrot.slane %v4052, 1
    %4057 = vrot.lane.b32.xlu0 %v4055, 125
    %v4058 = vpop.permute.xlu0 %4057
    %4059 = vrot.lane.b32.xlu0 %v4056, 125
    %v4060 = vpop.permute.xlu0 %4059
    %v4063 = vadd.f32 %v3983, %v4058
    %v4064 = vadd.f32 %v3984, %v4060
    %s4065 = sld [smem:[#allocation8 + $0x31]]
    %v4066 = vstv %s4065
    %v4067 = vmul.f32 %v3265, %v4066
    %v4068 = vmul.f32 %v3266, %v4066
    %4071 = vrot.lane.b32.xlu0 %v4067, 124
    %v4072 = vpop.permute.xlu0 %4071
    %4073 = vrot.lane.b32.xlu0 %v4068, 124
    %v4074 = vpop.permute.xlu0 %4073
    %v4077 = vadd.f32 %v3999, %v4072
    %v4078 = vadd.f32 %v4000, %v4074
    %s4079 = sld [smem:[#allocation8 + $0x6d]]
    %v4080 = vstv %s4079
    %v4081 = vmul.f32 %v3265, %v4080
    %v4082 = vmul.f32 %v3266, %v4080
    %4085 = vrot.lane.b32.xlu0 %v4081, 124
    %v4086 = vpop.permute.xlu0 %4085
    %4087 = vrot.lane.b32.xlu0 %v4082, 124
    %v4088 = vpop.permute.xlu0 %4087
    %v4091 = vadd.f32 %v4015, %v4086
    %v4092 = vadd.f32 %v4016, %v4088
    %s4093 = sld [smem:[#allocation8 + $0xa9]]
    %v4094 = vstv %s4093
    %v4095 = vmul.f32 %v3265, %v4094
    %v4096 = vmul.f32 %v3266, %v4094
    %4099 = vrot.lane.b32.xlu0 %v4095, 124
    %v4100 = vpop.permute.xlu0 %4099
    %4101 = vrot.lane.b32.xlu0 %v4096, 124
    %v4102 = vpop.permute.xlu0 %4101
    %v4105 = vadd.f32 %v4031, %v4100
    %v4106 = vadd.f32 %v4032, %v4102
    %s4107 = sld [smem:[#allocation8 + $0xe5]]
    %v4108 = vstv %s4107
    %v4109 = vmul.f32 %v3265, %v4108
    %v4110 = vmul.f32 %v3266, %v4108
    %4113 = vrot.lane.b32.xlu0 %v4109, 124
    %v4114 = vpop.permute.xlu0 %4113
    %4115 = vrot.lane.b32.xlu0 %v4110, 124
    %v4116 = vpop.permute.xlu0 %4115
    %v4119 = vadd.f32 %v4047, %v4114
    %v4120 = vadd.f32 %v4048, %v4116
    %s4121 = sld [smem:[#allocation8 + $0x121]]
    %v4122 = vstv %s4121
    %v4123 = vmul.f32 %v3265, %v4122
    %v4124 = vmul.f32 %v3266, %v4122
    %4127 = vrot.lane.b32.xlu0 %v4123, 124
    %v4128 = vpop.permute.xlu0 %4127
    %4129 = vrot.lane.b32.xlu0 %v4124, 124
    %v4130 = vpop.permute.xlu0 %4129
    %v4133 = vadd.f32 %v4063, %v4128
    %v4134 = vadd.f32 %v4064, %v4130
    %s4135 = sld [smem:[#allocation8 + $0x36]]
    %v4136 = vstv %s4135
    %v4137 = vmul.f32 %v3283, %v4136
    %v4138 = vmul.f32 %v3284, %v4136
    %4141 = vrot.lane.b32.xlu0 %v4137, 124
    %v4142 = vpop.permute.xlu0 %4141
    %4143 = vrot.lane.b32.xlu0 %v4138, 124
    %v4144 = vpop.permute.xlu0 %4143
    %v4147 = vadd.f32 %v4077, %v4142
    %v4148 = vadd.f32 %v4078, %v4144
    %s4149 = sld [smem:[#allocation8 + $0x72]]
    %v4150 = vstv %s4149
    %v4151 = vmul.f32 %v3283, %v4150
    %v4152 = vmul.f32 %v3284, %v4150
    %4155 = vrot.lane.b32.xlu0 %v4151, 124
    %v4156 = vpop.permute.xlu0 %4155
    %4157 = vrot.lane.b32.xlu0 %v4152, 124
    %v4158 = vpop.permute.xlu0 %4157
    %v4161 = vadd.f32 %v4091, %v4156
    %v4162 = vadd.f32 %v4092, %v4158
    %s4163 = sld [smem:[#allocation8 + $0xae]]
    %v4164 = vstv %s4163
    %v4165 = vmul.f32 %v3283, %v4164
    %v4166 = vmul.f32 %v3284, %v4164
    %4169 = vrot.lane.b32.xlu0 %v4165, 124
    %v4170 = vpop.permute.xlu0 %4169
    %4171 = vrot.lane.b32.xlu0 %v4166, 124
    %v4172 = vpop.permute.xlu0 %4171
    %v4175 = vadd.f32 %v4105, %v4170
    %v4176 = vadd.f32 %v4106, %v4172
    %s4177 = sld [smem:[#allocation8 + $0xea]]
    %v4178 = vstv %s4177
    %v4179 = vmul.f32 %v3283, %v4178
    %v4180 = vmul.f32 %v3284, %v4178
    %4183 = vrot.lane.b32.xlu0 %v4179, 124
    %v4184 = vpop.permute.xlu0 %4183
    %4185 = vrot.lane.b32.xlu0 %v4180, 124
    %v4186 = vpop.permute.xlu0 %4185
    %v4189 = vadd.f32 %v4119, %v4184
    %v4190 = vadd.f32 %v4120, %v4186
    %s4191 = sld [smem:[#allocation8 + $0x126]]
    %v4192 = vstv %s4191
    %v4193 = vmul.f32 %v3283, %v4192
    %v4194 = vmul.f32 %v3284, %v4192
    %4197 = vrot.lane.b32.xlu0 %v4193, 124
    %v4198 = vpop.permute.xlu0 %4197
    %4199 = vrot.lane.b32.xlu0 %v4194, 124
    %v4200 = vpop.permute.xlu0 %4199
    %v4203 = vadd.f32 %v4133, %v4198
    %v4204 = vadd.f32 %v4134, %v4200
    %s4205 = sld [smem:[#allocation8 + $0x3b]]
    %v4206 = vstv %s4205
    %v4207 = vmul.f32 %v3265, %v4206
    %v4208 = vmul.f32 %v3266, %v4206
    %v4211 = vrot.slane %v4207, 1
    %v4212 = vrot.slane %v4208, 1
    %4213 = vrot.lane.b32.xlu0 %v4211, 124
    %v4214 = vpop.permute.xlu0 %4213
    %4215 = vrot.lane.b32.xlu0 %v4212, 124
    %v4216 = vpop.permute.xlu0 %4215
    %v4219 = vadd.f32 %v4147, %v4214
    %v4220 = vadd.f32 %v4148, %v4216
    %s4221 = sld [smem:[#allocation8 + $0x77]]
    %v4222 = vstv %s4221
    %v4223 = vmul.f32 %v3265, %v4222
    %v4224 = vmul.f32 %v3266, %v4222
    %v4227 = vrot.slane %v4223, 1
    %v4228 = vrot.slane %v4224, 1
    %4229 = vrot.lane.b32.xlu0 %v4227, 124
    %v4230 = vpop.permute.xlu0 %4229
    %4231 = vrot.lane.b32.xlu0 %v4228, 124
    %v4232 = vpop.permute.xlu0 %4231
    %v4235 = vadd.f32 %v4161, %v4230
    %v4236 = vadd.f32 %v4162, %v4232
    %s4237 = sld [smem:[#allocation8 + $0xb3]]
    %v4238 = vstv %s4237
    %v4239 = vmul.f32 %v3265, %v4238
    %v4240 = vmul.f32 %v3266, %v4238
    %v4243 = vrot.slane %v4239, 1
    %v4244 = vrot.slane %v4240, 1
    %4245 = vrot.lane.b32.xlu0 %v4243, 124
    %v4246 = vpop.permute.xlu0 %4245
    %4247 = vrot.lane.b32.xlu0 %v4244, 124
    %v4248 = vpop.permute.xlu0 %4247
    %v4251 = vadd.f32 %v4175, %v4246
    %v4252 = vadd.f32 %v4176, %v4248
    %s4253 = sld [smem:[#allocation8 + $0xef]]
    %v4254 = vstv %s4253
    %v4255 = vmul.f32 %v3265, %v4254
    %v4256 = vmul.f32 %v3266, %v4254
    %v4259 = vrot.slane %v4255, 1
    %v4260 = vrot.slane %v4256, 1
    %4261 = vrot.lane.b32.xlu0 %v4259, 124
    %v4262 = vpop.permute.xlu0 %4261
    %4263 = vrot.lane.b32.xlu0 %v4260, 124
    %v4264 = vpop.permute.xlu0 %4263
    %v4267 = vadd.f32 %v4189, %v4262
    %v4268 = vadd.f32 %v4190, %v4264
    %s4269 = sld [smem:[#allocation8 + $0x12b]]
    %v4270 = vstv %s4269
    %v4271 = vmul.f32 %v3265, %v4270
    %v4272 = vmul.f32 %v3266, %v4270
    %v4275 = vrot.slane %v4271, 1
    %v4276 = vrot.slane %v4272, 1
    %4277 = vrot.lane.b32.xlu0 %v4275, 124
    %v4278 = vpop.permute.xlu0 %4277
    %4279 = vrot.lane.b32.xlu0 %v4276, 124
    %v4280 = vpop.permute.xlu0 %4279
    %v4283 = vadd.f32 %v4203, %v4278
    %v4284 = vadd.f32 %v4204, %v4280
    %s4285 = sld [smem:[#allocation10]]
    %v4286 = vstv %s4285
    %v4287 = vadd.f32 %v4219, %v4286
    %v4288 = vadd.f32 %v4220, %v4286
    %v4289 = vtanh.pop %v4287
    %v4290 = vtanh.pop %v4288
    %s4291 = sld [smem:[#allocation10 + $0x1]]
    %v4292 = vstv %s4291
    %v4293 = vadd.f32 %v4235, %v4292
    %v4294 = vadd.f32 %v4236, %v4292
    %v4295 = vtanh.pop %v4293
    %v4296 = vtanh.pop %v4294
    %s4297 = sld [smem:[#allocation10 + $0x2]]
    %v4298 = vstv %s4297
    %v4299 = vadd.f32 %v4251, %v4298
    %v4300 = vadd.f32 %v4252, %v4298
    %v4301 = vtanh.pop %v4299
    %v4302 = vtanh.pop %v4300
    %s4303 = sld [smem:[#allocation10 + $0x3]]
    %v4304 = vstv %s4303
    %v4305 = vadd.f32 %v4267, %v4304
    %v4306 = vadd.f32 %v4268, %v4304
    %v4307 = vtanh.pop %v4305
    %v4308 = vtanh.pop %v4306
    %s4309 = sld [smem:[#allocation10 + $0x4]]
    %v4310 = vstv %s4309
    %v4311 = vadd.f32 %v4283, %v4310
    %v4312 = vadd.f32 %v4284, %v4310
    %v4313 = vtanh.pop %v4311
    %v4314 = vtanh.pop %v4312
    %4325 = vrot.lane.b32.xlu0 %v4289, 127
    %v4326 = vpop.permute.xlu0 %4325
    %4327 = vrot.lane.b32.xlu0 %v4295, 127
    %v4328 = vpop.permute.xlu0 %4327
    %4329 = vrot.lane.b32.xlu0 %v4301, 127
    %v4330 = vpop.permute.xlu0 %4329
    %4331 = vrot.lane.b32.xlu0 %v4307, 127
    %v4332 = vpop.permute.xlu0 %4331
    %4333 = vrot.lane.b32.xlu0 %v4313, 127
    %v4334 = vpop.permute.xlu0 %4333
    %4335 = vrot.lane.b32.xlu0 %v4290, 127
    %v4336 = vpop.permute.xlu0 %4335
    %4337 = vrot.lane.b32.xlu0 %v4296, 127
    %v4338 = vpop.permute.xlu0 %4337
    %4339 = vrot.lane.b32.xlu0 %v4302, 127
    %v4340 = vpop.permute.xlu0 %4339
    %4341 = vrot.lane.b32.xlu0 %v4308, 127
    %v4342 = vpop.permute.xlu0 %4341
    %4343 = vrot.lane.b32.xlu0 %v4314, 127
    %v4344 = vpop.permute.xlu0 %4343
    %4355 = vrot.lane.b32.xlu0 %v4289, 126
    %v4356 = vpop.permute.xlu0 %4355
    %4357 = vrot.lane.b32.xlu0 %v4295, 126
    %v4358 = vpop.permute.xlu0 %4357
    %4359 = vrot.lane.b32.xlu0 %v4301, 126
    %v4360 = vpop.permute.xlu0 %4359
    %4361 = vrot.lane.b32.xlu0 %v4307, 126
    %v4362 = vpop.permute.xlu0 %4361
    %4363 = vrot.lane.b32.xlu0 %v4313, 126
    %v4364 = vpop.permute.xlu0 %4363
    %4365 = vrot.lane.b32.xlu0 %v4290, 126
    %v4366 = vpop.permute.xlu0 %4365
    %4367 = vrot.lane.b32.xlu0 %v4296, 126
    %v4368 = vpop.permute.xlu0 %4367
    %4369 = vrot.lane.b32.xlu0 %v4302, 126
    %v4370 = vpop.permute.xlu0 %4369
    %4371 = vrot.lane.b32.xlu0 %v4308, 126
    %v4372 = vpop.permute.xlu0 %4371
    %4373 = vrot.lane.b32.xlu0 %v4314, 126
    %v4374 = vpop.permute.xlu0 %4373
    %4385 = vrot.lane.b32.xlu0 %v4289, 125
    %v4386 = vpop.permute.xlu0 %4385
    %4387 = vrot.lane.b32.xlu0 %v4295, 125
    %v4388 = vpop.permute.xlu0 %4387
    %4389 = vrot.lane.b32.xlu0 %v4301, 125
    %v4390 = vpop.permute.xlu0 %4389
    %4391 = vrot.lane.b32.xlu0 %v4307, 125
    %v4392 = vpop.permute.xlu0 %4391
    %4393 = vrot.lane.b32.xlu0 %v4313, 125
    %v4394 = vpop.permute.xlu0 %4393
    %4395 = vrot.lane.b32.xlu0 %v4290, 125
    %v4396 = vpop.permute.xlu0 %4395
    %4397 = vrot.lane.b32.xlu0 %v4296, 125
    %v4398 = vpop.permute.xlu0 %4397
    %4399 = vrot.lane.b32.xlu0 %v4302, 125
    %v4400 = vpop.permute.xlu0 %4399
    %4401 = vrot.lane.b32.xlu0 %v4308, 125
    %v4402 = vpop.permute.xlu0 %4401
    %4403 = vrot.lane.b32.xlu0 %v4314, 125
    %v4404 = vpop.permute.xlu0 %4403
    %4415 = vrot.lane.b32.xlu0 %v4289, 124
    %v4416 = vpop.permute.xlu0 %4415
    %4417 = vrot.lane.b32.xlu0 %v4295, 124
    %v4418 = vpop.permute.xlu0 %4417
    %4419 = vrot.lane.b32.xlu0 %v4301, 124
    %v4420 = vpop.permute.xlu0 %4419
    %4421 = vrot.lane.b32.xlu0 %v4307, 124
    %v4422 = vpop.permute.xlu0 %4421
    %4423 = vrot.lane.b32.xlu0 %v4313, 124
    %v4424 = vpop.permute.xlu0 %4423
    %4425 = vrot.lane.b32.xlu0 %v4290, 124
    %v4426 = vpop.permute.xlu0 %4425
    %4427 = vrot.lane.b32.xlu0 %v4296, 124
    %v4428 = vpop.permute.xlu0 %4427
    %4429 = vrot.lane.b32.xlu0 %v4302, 124
    %v4430 = vpop.permute.xlu0 %4429
    %4431 = vrot.lane.b32.xlu0 %v4308, 124
    %v4432 = vpop.permute.xlu0 %4431
    %4433 = vrot.lane.b32.xlu0 %v4314, 124
    %v4434 = vpop.permute.xlu0 %4433
    %4445 = vrot.lane.b32.xlu0 %v4289, 123
    %v4446 = vpop.permute.xlu0 %4445
    %4447 = vrot.lane.b32.xlu0 %v4295, 123
    %v4448 = vpop.permute.xlu0 %4447
    %4449 = vrot.lane.b32.xlu0 %v4301, 123
    %v4450 = vpop.permute.xlu0 %4449
    %4451 = vrot.lane.b32.xlu0 %v4307, 123
    %v4452 = vpop.permute.xlu0 %4451
    %4453 = vrot.lane.b32.xlu0 %v4313, 123
    %v4454 = vpop.permute.xlu0 %4453
    %4455 = vrot.lane.b32.xlu0 %v4290, 123
    %v4456 = vpop.permute.xlu0 %4455
    %4457 = vrot.lane.b32.xlu0 %v4296, 123
    %v4458 = vpop.permute.xlu0 %4457
    %4459 = vrot.lane.b32.xlu0 %v4302, 123
    %v4460 = vpop.permute.xlu0 %4459
    %4461 = vrot.lane.b32.xlu0 %v4308, 123
    %v4462 = vpop.permute.xlu0 %4461
    %4463 = vrot.lane.b32.xlu0 %v4314, 123
    %v4464 = vpop.permute.xlu0 %4463
    %vm4475 = vcmask 7168
    %v4476 = vsel %vm4475, %v4289, %v4326
    %v4477 = vsel %vm4475, %v4295, %v4328
    %v4478 = vsel %vm4475, %v4301, %v4330
    %v4479 = vsel %vm4475, %v4307, %v4332
    %v4480 = vsel %vm4475, %v4313, %v4334
    %v4481 = vsel %vm4475, %v4290, %v4336
    %v4482 = vsel %vm4475, %v4296, %v4338
    %v4483 = vsel %vm4475, %v4302, %v4340
    %v4484 = vsel %vm4475, %v4308, %v4342
    %v4485 = vsel %vm4475, %v4314, %v4344
    %vm4486 = vcmask 15360
    %v4487 = vsel %vm4486, %v4476, %v4356
    %v4488 = vsel %vm4486, %v4477, %v4358
    %v4489 = vsel %vm4486, %v4478, %v4360
    %v4490 = vsel %vm4486, %v4479, %v4362
    %v4491 = vsel %vm4486, %v4480, %v4364
    %v4492 = vsel %vm4486, %v4481, %v4366
    %v4493 = vsel %vm4486, %v4482, %v4368
    %v4494 = vsel %vm4486, %v4483, %v4370
    %v4495 = vsel %vm4486, %v4484, %v4372
    %v4496 = vsel %vm4486, %v4485, %v4374
    %vm4497 = vcmask 23552
    %v4498 = vsel %vm4497, %v4487, %v4386
    %v4499 = vsel %vm4497, %v4488, %v4388
    %v4500 = vsel %vm4497, %v4489, %v4390
    %v4501 = vsel %vm4497, %v4490, %v4392
    %v4502 = vsel %vm4497, %v4491, %v4394
    %v4503 = vsel %vm4497, %v4492, %v4396
    %v4504 = vsel %vm4497, %v4493, %v4398
    %v4505 = vsel %vm4497, %v4494, %v4400
    %v4506 = vsel %vm4497, %v4495, %v4402
    %v4507 = vsel %vm4497, %v4496, %v4404
    %vm4508 = vcmask 31744
    %v4509 = vsel %vm4508, %v4498, %v4416
    %v4510 = vsel %vm4508, %v4499, %v4418
    %v4511 = vsel %vm4508, %v4500, %v4420
    %v4512 = vsel %vm4508, %v4501, %v4422
    %v4513 = vsel %vm4508, %v4502, %v4424
    %v4514 = vsel %vm4508, %v4503, %v4426
    %v4515 = vsel %vm4508, %v4504, %v4428
    %v4516 = vsel %vm4508, %v4505, %v4430
    %v4517 = vsel %vm4508, %v4506, %v4432
    %v4518 = vsel %vm4508, %v4507, %v4434
    %vm4519 = vcmask 39936
    %v4520 = vsel %vm4519, %v4509, %v4446
    %v4521 = vsel %vm4519, %v4510, %v4448
    %v4522 = vsel %vm4519, %v4511, %v4450
    %v4523 = vsel %vm4519, %v4512, %v4452
    %v4524 = vsel %vm4519, %v4513, %v4454
    %v4525 = vsel %vm4519, %v4514, %v4456
    %v4526 = vsel %vm4519, %v4515, %v4458
    %v4527 = vsel %vm4519, %v4516, %v4460
    %v4528 = vsel %vm4519, %v4517, %v4462
    %v4529 = vsel %vm4519, %v4518, %v4464
    %vm4530 = vcmask 47104
    %4531 = vst.msk [vmem:[%s5] sm:$0x7f] %vm4530, %v4520
    %4532 = vst.msk [vmem:[%s5 + $0x8] sm:$0x7f] %vm4530, %v4521
    %4533 = vst.msk [vmem:[%s5 + $0x10] sm:$0x7f] %vm4530, %v4522
    %4534 = vst.msk [vmem:[%s5 + $0x18] sm:$0x7f] %vm4530, %v4523
    %4535 = vst.msk [vmem:[%s5 + $0x20] sm:$0x7f] %vm4530, %v4524
    %4536 = vst.msk [vmem:[%s5 + $0x28] sm:$0x7f] %vm4530, %v4525
    %4537 = vst.msk [vmem:[%s5 + $0x30] sm:$0x7f] %vm4530, %v4526
    %4538 = vst.msk [vmem:[%s5 + $0x38] sm:$0x7f] %vm4530, %v4527
    %4539 = vst.msk [vmem:[%s5 + $0x40] sm:$0x7f] %vm4530, %v4528
    %4540 = vst.msk [vmem:[%s5 + $0x48] sm:$0x7f] %vm4530, %v4529
    // Predicated region
    $region42: #{model_forward.1} parent=1 // pred_check
      _
    $region43: #{model_forward.1} parent=1 // pred_check_branch
      %4542 = sbr.rel (0) target = $region45
    $region44: #{model_forward.1} parent=1 // pred_region
      _
    $region45: #{model_forward.1} parent=1 // pred_fallthru
      _
    // Predicated region
    $region46: #{model_forward.1} parent=1 // pred_check
      _
    $region47: #{model_forward.1} parent=1 // pred_check_branch
      %4544 = sbr.rel (0) target = $region49
    $region48: #{model_forward.1} parent=1 // pred_region
      _
    $region49: #{model_forward.1} parent=1 // pred_fallthru
      _
    %4545 = vsyncpa [#allocation3], 1
    %4546 = vsyncpa [#allocation4], 1
    %4547 = vsyncpa [#allocation5], 1
    %4548 = vsyncpa [#allocation9], 1

</llo_original>
